<compile_context>
chip_gen: v7x
topology: tpu7x:2x2x1
jax: 0.10.0
libtpu: 0.0.40
codegen_flags: <defaults>
</compile_context>

<pallas_src>
import jax
import jax.numpy as jnp
from jax.experimental import pallas as pl
from jax.experimental.pallas import tpu as pltpu

D_IN = 64 * 64 * 3   # 12288
H = 128
D_OUT = 10


def mlp_kernel(x1_ref, x2_ref, w0_ref, s0_ref, b0_ref, w1_ref, b1_ref,
               w2_ref, b2_ref, out_ref):
    # ---- Linear(12288 -> 128), int8 weights dequantized in-kernel ----------
    x2 = x2_ref[...].astype(jnp.bfloat16)          # f32 -> bf16 (MXU operand)
    w0 = w0_ref[...].astype(jnp.bfloat16)          # int8 -> bf16 (exact)
    acc = jnp.dot(x2, w0, preferred_element_type=jnp.float32)   # (B, 128) f32
    # Per-output-channel dequant scale folded into the bias epilogue.
    v1 = acc * s0_ref[...] + b0_ref[...]
    # v2 = v1 + x1
    v2 = v1 + x1_ref[...]
    # ReLU + residual
    v1 = jnp.maximum(v2, 0.0)
    v2 = v1 + v2
    # Linear(128 -> 128) + residual
    v1 = jnp.dot(v2, w1_ref[...], preferred_element_type=jnp.float32) + b1_ref[...]
    v2 = v1 + v2
    # ReLU + residual
    v1 = jnp.maximum(v2, 0.0)
    v2 = v1 + v2
    # Linear(128 -> 10), weights zero-padded to 128 output lanes (lane-dense store)
    v1 = jnp.dot(v2, w2_ref[...], preferred_element_type=jnp.float32) + b2_ref[...]
    out_ref[...] = v1


def _model_forward(x1, x2, params):
    """x1: (B, 128) residual input (f32), x2: (B, 12288) main input (f32)."""
    w0q, s0, b0, w1, b1, w2p, b2p = params   # w0q int8; w2p/b2p pre-padded to 128 lanes
    B = x1.shape[0]

    cost = pl.CostEstimate(
        flops=2 * B * D_IN * H + 4 * B * H * H,
        transcendentals=0,
        bytes_accessed=(D_IN * H * 1                 # int8 W0 stream (dominant)
                        + B * D_IN * 4               # x2 (f32)
                        + 2 * H * H * 4              # W1, padded W2
                        + 2 * B * H * 4              # x1, out
                        + 4 * H * 4))                # s0, b0, b1, b2

    out_padded = pl.pallas_call(
        mlp_kernel,
        out_shape=jax.ShapeDtypeStruct((B, H), jnp.float32),
        grid_spec=pltpu.PrefetchScalarGridSpec(
            num_scalar_prefetch=0,
            grid=(1,),                                   # single step: no K split
            in_specs=[
                pl.BlockSpec((B, H), lambda k: (0, 0)),      # x1 (residual, f32)
                pl.BlockSpec((B, D_IN), lambda k: (0, 0)),   # x2 (f32, cast in-kernel)
                pl.BlockSpec((D_IN, H), lambda k: (0, 0)),   # W0 (int8)
                pl.BlockSpec((1, H), lambda k: (0, 0)),      # s0 (dequant scale)
                pl.BlockSpec((1, H), lambda k: (0, 0)),      # b0
                pl.BlockSpec((H, H), lambda k: (0, 0)),      # W1
                pl.BlockSpec((1, H), lambda k: (0, 0)),      # b1
                pl.BlockSpec((H, H), lambda k: (0, 0)),      # W2 (padded)
                pl.BlockSpec((1, H), lambda k: (0, 0)),      # b2 (padded)
            ],
            out_specs=pl.BlockSpec((B, H), lambda k: (0, 0)),
        ),
        compiler_params=pltpu.CompilerParams(
            dimension_semantics=("arbitrary",)),
        cost_estimate=cost,
    )(x1, x2, w0q, s0, b0, w1, b1, w2p, b2p)
    return out_padded[:, :D_OUT]


model_forward = jax.jit(_model_forward)


def init_params(key):
    """Deterministic PyTorch-style init; weights stored as (in, out)."""
    ks = jax.random.split(key, 6)

    def lin(kw, kb, fan_in, fan_out):
        bound = 1.0 / jnp.sqrt(fan_in)
        w = jax.random.uniform(kw, (fan_in, fan_out), jnp.float32, -bound, bound)
        b = jax.random.uniform(kb, (1, fan_out), jnp.float32, -bound, bound)
        return w, b

    w0, b0 = lin(ks[0], ks[1], D_IN, H)
    w1, b1 = lin(ks[2], ks[3], H, H)
    w2, b2 = lin(ks[4], ks[5], H, D_OUT)

    # int8 symmetric per-output-channel quantization of the mem-bound W0 stream
    # (halves HBM traffic vs bf16); scale applied in the kernel epilogue.
    s0 = jnp.maximum(jnp.max(jnp.abs(w0), axis=0, keepdims=True), 1e-12) / 127.0
    w0q = jnp.clip(jnp.round(w0 / s0), -127.0, 127.0).astype(jnp.int8)

    # One-time zero-padding of the last layer to 128 output lanes (not per call).
    w2p = jnp.zeros((H, H), jnp.float32).at[:, :D_OUT].set(w2)
    b2p = jnp.zeros((1, H), jnp.float32).at[:, :D_OUT].set(b2)
    return (w0q, s0, b0, w1, b1, w2p, b2p)


def reference_forward(x1, x2, params):
    w0q, s0, b0, w1, b1, w2p, b2p = params
    w0 = w0q.astype(jnp.float32) * s0            # dequantized stored weights
    v1 = x2 @ w0 + b0
    v2 = v1 + x1
    v1 = jnp.maximum(v2, 0.0); v2 = v1 + v2
    v1 = v2 @ w1 + b1;          v2 = v1 + v2
    v1 = jnp.maximum(v2, 0.0); v2 = v1 + v2
    v1 = v2 @ w2p[:, :D_OUT] + b2p[:, :D_OUT]
    return v1


if __name__ == "__main__":
    key = jax.random.PRNGKey(0)
    kp, k1, k2 = jax.random.split(key, 3)
    params = init_params(kp)

    B = 2
    x1 = jax.random.normal(k1, (B, H), jnp.float32)       # 128-dim residual input
    x2 = jax.random.normal(k2, (B, D_IN), jnp.float32)    # 12288-dim main input

    out = model_forward(x1, x2, params)
    out = jax.block_until_ready(out)

    ref = reference_forward(x1, x2, params)
    assert out.shape == (B, D_OUT), out.shape
    assert jnp.allclose(out, ref, rtol=5e-2, atol=5e-2), "mismatch vs reference"

    print("KERNEL_OK")
</pallas_src>

<mosaic_0001>
module attributes {stable_mosaic.version = 11 : i64} {
  func.func @mlp_kernel(%arg0: i32, %arg1: memref<2x128xf32, #tpu.memory_space<vmem>>, %arg2: memref<2x12288xf32, #tpu.memory_space<vmem>>, %arg3: memref<12288x128xi8, #tpu.memory_space<vmem>>, %arg4: memref<1x128xf32, #tpu.memory_space<vmem>>, %arg5: memref<1x128xf32, #tpu.memory_space<vmem>>, %arg6: memref<128x128xf32, #tpu.memory_space<vmem>>, %arg7: memref<1x128xf32, #tpu.memory_space<vmem>>, %arg8: memref<128x128xf32, #tpu.memory_space<vmem>>, %arg9: memref<1x128xf32, #tpu.memory_space<vmem>>, %arg10: memref<2x128xf32, #tpu.memory_space<vmem>>) attributes {dimension_semantics = [#tpu.dimension_semantics<arbitrary>], iteration_bounds = array<i64: 1>, scalar_prefetch = 0 : i64, scratch_operands = 0 : i64, tpu.core_type = #tpu.core_type<tc>, window_params = [{pipeline_mode = #tpu.pipeline_mode<synchronous>, transform_indices = @transform_0, window_bounds = array<i64: 2, 128>}, {pipeline_mode = #tpu.pipeline_mode<synchronous>, transform_indices = @transform_1, window_bounds = array<i64: 2, 12288>}, {pipeline_mode = #tpu.pipeline_mode<synchronous>, transform_indices = @transform_2, window_bounds = array<i64: 12288, 128>}, {pipeline_mode = #tpu.pipeline_mode<synchronous>, transform_indices = @transform_3, window_bounds = array<i64: 1, 128>}, {pipeline_mode = #tpu.pipeline_mode<synchronous>, transform_indices = @transform_4, window_bounds = array<i64: 1, 128>}, {pipeline_mode = #tpu.pipeline_mode<synchronous>, transform_indices = @transform_5, window_bounds = array<i64: 128, 128>}, {pipeline_mode = #tpu.pipeline_mode<synchronous>, transform_indices = @transform_6, window_bounds = array<i64: 1, 128>}, {pipeline_mode = #tpu.pipeline_mode<synchronous>, transform_indices = @transform_7, window_bounds = array<i64: 128, 128>}, {pipeline_mode = #tpu.pipeline_mode<synchronous>, transform_indices = @transform_8, window_bounds = array<i64: 1, 128>}, {pipeline_mode = #tpu.pipeline_mode<synchronous>, transform_indices = @transform_9, window_bounds = array<i64: 2, 128>}]} {
    %c0 = arith.constant 0 : index
    %c0_0 = arith.constant 0 : index
    %0 = vector.load %arg2[%c0, %c0_0] : memref<2x12288xf32, #tpu.memory_space<vmem>>, vector<2x12288xf32>
    %1 = arith.truncf %0 : vector<2x12288xf32> to vector<2x12288xbf16>
    %c0_1 = arith.constant 0 : index
    %c0_2 = arith.constant 0 : index
    %2 = vector.load %arg3[%c0_1, %c0_2] : memref<12288x128xi8, #tpu.memory_space<vmem>>, vector<12288x128xi8>
    %3 = arith.sitofp %2 : vector<12288x128xi8> to vector<12288x128xbf16>
    %cst = arith.constant dense<0.000000e+00> : vector<2x128xf32>
    %4 = tpu.matmul %1, %3, %cst {dimension_numbers = #tpu.dot_dimension_numbers<[1], [0], [0], [1], [0, 0, 1, 1], [], []>} : vector<2x12288xbf16>, vector<12288x128xbf16>, vector<2x128xf32> -> vector<2x128xf32>
    %c0_3 = arith.constant 0 : index
    %c0_4 = arith.constant 0 : index
    %5 = vector.load %arg4[%c0_3, %c0_4] : memref<1x128xf32, #tpu.memory_space<vmem>>, vector<1x128xf32>
    %6 = vector.broadcast %5 : vector<1x128xf32> to vector<2x128xf32>
    %7 = arith.mulf %4, %6 : vector<2x128xf32>
    %c0_5 = arith.constant 0 : index
    %c0_6 = arith.constant 0 : index
    %8 = vector.load %arg5[%c0_5, %c0_6] : memref<1x128xf32, #tpu.memory_space<vmem>>, vector<1x128xf32>
    %9 = vector.broadcast %8 : vector<1x128xf32> to vector<2x128xf32>
    %10 = arith.addf %7, %9 : vector<2x128xf32>
    %c0_7 = arith.constant 0 : index
    %c0_8 = arith.constant 0 : index
    %11 = vector.load %arg1[%c0_7, %c0_8] : memref<2x128xf32, #tpu.memory_space<vmem>>, vector<2x128xf32>
    %12 = arith.addf %10, %11 : vector<2x128xf32>
    %cst_9 = arith.constant 0.000000e+00 : f32
    %13 = vector.broadcast %cst_9 : f32 to vector<2x128xf32>
    %14 = arith.maximumf %12, %13 : vector<2x128xf32>
    %15 = arith.addf %14, %12 : vector<2x128xf32>
    %c0_10 = arith.constant 0 : index
    %c0_11 = arith.constant 0 : index
    %16 = vector.load %arg6[%c0_10, %c0_11] : memref<128x128xf32, #tpu.memory_space<vmem>>, vector<128x128xf32>
    %cst_12 = arith.constant dense<0.000000e+00> : vector<2x128xf32>
    %17 = tpu.matmul %15, %16, %cst_12 {dimension_numbers = #tpu.dot_dimension_numbers<[1], [0], [0], [1], [0, 0, 1, 1], [], []>} : vector<2x128xf32>, vector<128x128xf32>, vector<2x128xf32> -> vector<2x128xf32>
    %c0_13 = arith.constant 0 : index
    %c0_14 = arith.constant 0 : index
    %18 = vector.load %arg7[%c0_13, %c0_14] : memref<1x128xf32, #tpu.memory_space<vmem>>, vector<1x128xf32>
    %19 = vector.broadcast %18 : vector<1x128xf32> to vector<2x128xf32>
    %20 = arith.addf %17, %19 : vector<2x128xf32>
    %21 = arith.addf %20, %15 : vector<2x128xf32>
    %cst_15 = arith.constant 0.000000e+00 : f32
    %22 = vector.broadcast %cst_15 : f32 to vector<2x128xf32>
    %23 = arith.maximumf %21, %22 : vector<2x128xf32>
    %24 = arith.addf %23, %21 : vector<2x128xf32>
    %c0_16 = arith.constant 0 : index
    %c0_17 = arith.constant 0 : index
    %25 = vector.load %arg8[%c0_16, %c0_17] : memref<128x128xf32, #tpu.memory_space<vmem>>, vector<128x128xf32>
    %cst_18 = arith.constant dense<0.000000e+00> : vector<2x128xf32>
    %26 = tpu.matmul %24, %25, %cst_18 {dimension_numbers = #tpu.dot_dimension_numbers<[1], [0], [0], [1], [0, 0, 1, 1], [], []>} : vector<2x128xf32>, vector<128x128xf32>, vector<2x128xf32> -> vector<2x128xf32>
    %c0_19 = arith.constant 0 : index
    %c0_20 = arith.constant 0 : index
    %27 = vector.load %arg9[%c0_19, %c0_20] : memref<1x128xf32, #tpu.memory_space<vmem>>, vector<1x128xf32>
    %28 = vector.broadcast %27 : vector<1x128xf32> to vector<2x128xf32>
    %29 = arith.addf %26, %28 : vector<2x128xf32>
    %c0_21 = arith.constant 0 : index
    %c0_22 = arith.constant 0 : index
    %30 = vector.load %arg10[%c0_21, %c0_22] : memref<2x128xf32, #tpu.memory_space<vmem>>, vector<2x128xf32>
    tpu.vector_store %arg10[%c0_21, %c0_22], %29 {strides = array<i32>} : memref<2x128xf32, #tpu.memory_space<vmem>>, vector<2x128xf32>,
    return
  }
  func.func @transform_0(%arg0: i32) -> (i32, i32) {
    %c0_i32 = arith.constant 0 : i32
    %c0_i32_0 = arith.constant 0 : i32
    %c0_i32_1 = arith.constant 0 : i32
    return %c0_i32, %c0_i32_0 : i32, i32
  }
  func.func @transform_1(%arg0: i32) -> (i32, i32) {
    %c0_i32 = arith.constant 0 : i32
    %c0_i32_0 = arith.constant 0 : i32
    %c0_i32_1 = arith.constant 0 : i32
    return %c0_i32, %c0_i32_0 : i32, i32
  }
  func.func @transform_2(%arg0: i32) -> (i32, i32) {
    %c0_i32 = arith.constant 0 : i32
    %c0_i32_0 = arith.constant 0 : i32
    %c0_i32_1 = arith.constant 0 : i32
    return %c0_i32, %c0_i32_0 : i32, i32
  }
  func.func @transform_3(%arg0: i32) -> (i32, i32) {
    %c0_i32 = arith.constant 0 : i32
    %c0_i32_0 = arith.constant 0 : i32
    %c0_i32_1 = arith.constant 0 : i32
    return %c0_i32, %c0_i32_0 : i32, i32
  }
  func.func @transform_4(%arg0: i32) -> (i32, i32) {
    %c0_i32 = arith.constant 0 : i32
    %c0_i32_0 = arith.constant 0 : i32
    %c0_i32_1 = arith.constant 0 : i32
    return %c0_i32, %c0_i32_0 : i32, i32
  }
  func.func @transform_5(%arg0: i32) -> (i32, i32) {
    %c0_i32 = arith.constant 0 : i32
    %c0_i32_0 = arith.constant 0 : i32
    %c0_i32_1 = arith.constant 0 : i32
    return %c0_i32, %c0_i32_0 : i32, i32
  }
  func.func @transform_6(%arg0: i32) -> (i32, i32) {
    %c0_i32 = arith.constant 0 : i32
    %c0_i32_0 = arith.constant 0 : i32
    %c0_i32_1 = arith.constant 0 : i32
    return %c0_i32, %c0_i32_0 : i32, i32
  }
  func.func @transform_7(%arg0: i32) -> (i32, i32) {
    %c0_i32 = arith.constant 0 : i32
    %c0_i32_0 = arith.constant 0 : i32
    %c0_i32_1 = arith.constant 0 : i32
    return %c0_i32, %c0_i32_0 : i32, i32
  }
  func.func @transform_8(%arg0: i32) -> (i32, i32) {
    %c0_i32 = arith.constant 0 : i32
    %c0_i32_0 = arith.constant 0 : i32
    %c0_i32_1 = arith.constant 0 : i32
    return %c0_i32, %c0_i32_0 : i32, i32
  }
  func.func @transform_9(%arg0: i32) -> (i32, i32) {
    %c0_i32 = arith.constant 0 : i32
    %c0_i32_0 = arith.constant 0 : i32
    %c0_i32_1 = arith.constant 0 : i32
    return %c0_i32, %c0_i32_0 : i32, i32
  }
}

</mosaic_0001>

<llo_original>
// kernel: _model_forward.1
$region0: #{_model_forward.1}
  #allocation0 [shape = 'u32[]', space=smem, size = 0x4, offset = 0x4, fixed_abs, tag = 'smem constant byte address 0x4 - core index']
  #allocation1 [shape = 'u32[144,128]{1,0:T(1,128)}', space=vmem, size = 0x12000, scoped, tag = 'internal scratch']
  %s0 = inlined_call_operand.hbm [shape: f32[2,128], index: 0, kind: input, shape index: {}]
  %s1 = inlined_call_operand.hbm [shape: f32[2,12288], index: 1, kind: input, shape index: {}]
  %s2 = inlined_call_operand.hbm [shape: s8[12288,128], index: 2, kind: input, shape index: {}]
  %s3 = inlined_call_operand.hbm [shape: f32[1,128], index: 3, kind: input, shape index: {}]
  %s4 = inlined_call_operand.hbm [shape: f32[1,128], index: 4, kind: input, shape index: {}]
  %s5 = inlined_call_operand.hbm [shape: f32[128,128], index: 5, kind: input, shape index: {}]
  %s6 = inlined_call_operand.hbm [shape: f32[1,128], index: 6, kind: input, shape index: {}]
  %s7 = inlined_call_operand.hbm [shape: f32[128,128], index: 7, kind: input, shape index: {}]
  %s8 = inlined_call_operand.hbm [shape: f32[1,128], index: 8, kind: input, shape index: {}]
  %s9 = inlined_call_operand.hbm [shape: f32[2,128], index: 9, kind: output, shape index: {}]
  %s10 = sld [smem:[#allocation0]]
  $region82: #{_model_forward.1} parent=0
    _
  %s12 = ssub.s32 1, %s10
  %s13 = scalar_select 0, %s12, %s10
  $region1: #{_model_forward.1} parent=0
    #allocation2 [shape = 'u8[1024]{0}', space=vmem, size = 0x400, scoped, tag = 'input window, operand 0, single buffered']
    #allocation3 [shape = 's32[1]{0}', space=sflag, size = 0x4, scoped, tag = 'scoped memory for _model_forward.1']
    #allocation4 [shape = 's32[1]{0}', space=sflag, size = 0x4, scoped, tag = 'scoped memory for _model_forward.1']
    #allocation5 [shape = 'u8[98304]{0}', space=vmem, size = 0x18000, scoped, tag = 'input window, operand 1, single buffered']
    #allocation6 [shape = 's32[1]{0}', space=sflag, size = 0x4, scoped, tag = 'scoped memory for _model_forward.1']
    #allocation7 [shape = 'u8[1572864]{0}', space=vmem, size = 0x180000, scoped, tag = 'input window, operand 2, single buffered']
    #allocation8 [shape = 'u8[512]{0}', space=vmem, size = 0x400, scoped, tag = 'input window, operand 3, single buffered']
    #allocation9 [shape = 's32[1]{0}', space=sflag, size = 0x4, scoped, tag = 'scoped memory for _model_forward.1']
    #allocation10 [shape = 'u8[512]{0}', space=vmem, size = 0x400, scoped, tag = 'input window, operand 4, single buffered']
    #allocation11 [shape = 'u8[65536]{0}', space=vmem, size = 0x10000, scoped, tag = 'input window, operand 5, single buffered']
    #allocation12 [shape = 's32[1]{0}', space=sflag, size = 0x4, scoped, tag = 'scoped memory for _model_forward.1']
    #allocation13 [shape = 'u8[512]{0}', space=vmem, size = 0x400, scoped, tag = 'input window, operand 6, single buffered']
    #allocation14 [shape = 'u8[65536]{0}', space=vmem, size = 0x10000, scoped, tag = 'input window, operand 7, single buffered']
    #allocation15 [shape = 's32[1]{0}', space=sflag, size = 0x4, scoped, tag = 'scoped memory for _model_forward.1']
    #allocation16 [shape = 'u8[512]{0}', space=vmem, size = 0x400, scoped, tag = 'input window, operand 8, single buffered']
    #allocation17 [shape = 'u8[1024]{0}', space=vmem, size = 0x400, scoped, tag = 'output window, operand 0, single buffered']
    %14 = vsyncpa [#allocation3], 0
    %15 = vsyncpa [#allocation6], 0
    %16 = vsyncpa [#allocation9], 0
    %17 = vsyncpa [#allocation12], 0
    %18 = vsyncpa [#allocation15], 0
    %19 = vsyncpa [#allocation4], 0
    // Predicated region
    $region2: #{_model_forward.1} parent=1 // pred_check
      _
    $region3: #{_model_forward.1} parent=1 // pred_check_branch
      %21 = sbr.rel (0) target = $region5
    $region4: #{_model_forward.1} parent=1 // pred_region
      %s23 = ssub.s32 32, 32
      %24 = vsyncadd [#allocation3], %s23
      %s26 = sshll.u32 [#allocation2], 4
      %s27 = int_to_ptr.vmem [resolvable:$true] %s26
      %29 = dma.hbm_to_vmem [thread:$0]  %s0, 32, %s27, [#allocation3]
    $region5: #{_model_forward.1} parent=1 // pred_fallthru
      _
    // Predicated region
    $region6: #{_model_forward.1} parent=1 // pred_check
      _
    $region7: #{_model_forward.1} parent=1 // pred_check_branch
      %31 = sbr.rel (0) target = $region9
    $region8: #{_model_forward.1} parent=1 // pred_region
      %s33 = ssub.s32 3072, 3072
      %34 = vsyncadd [#allocation6], %s33
      %s36 = sshll.u32 [#allocation5], 4
      %s37 = int_to_ptr.vmem [resolvable:$true] %s36
      %39 = dma.hbm_to_vmem [thread:$0]  %s1, 3072, %s37, [#allocation6]
    $region9: #{_model_forward.1} parent=1 // pred_fallthru
      _
    // Predicated region
    $region10: #{_model_forward.1} parent=1 // pred_check
      _
    $region11: #{_model_forward.1} parent=1 // pred_check_branch
      %41 = sbr.rel (0) target = $region13
    $region12: #{_model_forward.1} parent=1 // pred_region
      %s43 = ssub.s32 49152, 49152
      %44 = vsyncadd [#allocation6], %s43
      %s45 = sshll.u32 [#allocation7], 4
      %s46 = int_to_ptr.vmem [resolvable:$true] %s45
      %51 = dma.hbm_to_vmem [thread:$0]  %s2, 49152, %s46, [#allocation6], 128, 128, 8
    $region13: #{_model_forward.1} parent=1 // pred_fallthru
      _
    // Predicated region
    $region14: #{_model_forward.1} parent=1 // pred_check
      _
    $region15: #{_model_forward.1} parent=1 // pred_check_branch
      %53 = sbr.rel (0) target = $region17
    $region16: #{_model_forward.1} parent=1 // pred_region
      %s55 = ssub.s32 16, 16
      %56 = vsyncadd [#allocation9], %s55
      %s58 = sshll.u32 [#allocation8], 4
      %s59 = int_to_ptr.vmem [resolvable:$true] %s58
      %61 = dma.hbm_to_vmem [thread:$0]  %s3, 16, %s59, [#allocation9]
    $region17: #{_model_forward.1} parent=1 // pred_fallthru
      _
    // Predicated region
    $region18: #{_model_forward.1} parent=1 // pred_check
      _
    $region19: #{_model_forward.1} parent=1 // pred_check_branch
      %63 = sbr.rel (0) target = $region21
    $region20: #{_model_forward.1} parent=1 // pred_region
      %s65 = ssub.s32 16, 16
      %66 = vsyncadd [#allocation9], %s65
      %s68 = sshll.u32 [#allocation10], 4
      %s69 = int_to_ptr.vmem [resolvable:$true] %s68
      %71 = dma.hbm_to_vmem [thread:$0]  %s4, 16, %s69, [#allocation9]
    $region21: #{_model_forward.1} parent=1 // pred_fallthru
      _
    // Predicated region
    $region22: #{_model_forward.1} parent=1 // pred_check
      _
    $region23: #{_model_forward.1} parent=1 // pred_check_branch
      %73 = sbr.rel (0) target = $region25
    $region24: #{_model_forward.1} parent=1 // pred_region
      %s75 = ssub.s32 2048, 2048
      %76 = vsyncadd [#allocation12], %s75
      %s77 = sshll.u32 [#allocation11], 4
      %s78 = int_to_ptr.vmem [resolvable:$true] %s77
      %83 = dma.hbm_to_vmem [thread:$0]  %s5, 2048, %s78, [#allocation12], 128, 128, 8
    $region25: #{_model_forward.1} parent=1 // pred_fallthru
      _
    // Predicated region
    $region26: #{_model_forward.1} parent=1 // pred_check
      _
    $region27: #{_model_forward.1} parent=1 // pred_check_branch
      %85 = sbr.rel (0) target = $region29
    $region28: #{_model_forward.1} parent=1 // pred_region
      %s87 = ssub.s32 16, 16
      %88 = vsyncadd [#allocation12], %s87
      %s90 = sshll.u32 [#allocation13], 4
      %s91 = int_to_ptr.vmem [resolvable:$true] %s90
      %93 = dma.hbm_to_vmem [thread:$0]  %s6, 16, %s91, [#allocation12]
    $region29: #{_model_forward.1} parent=1 // pred_fallthru
      _
    // Predicated region
    $region30: #{_model_forward.1} parent=1 // pred_check
      _
    $region31: #{_model_forward.1} parent=1 // pred_check_branch
      %95 = sbr.rel (0) target = $region33
    $region32: #{_model_forward.1} parent=1 // pred_region
      %s97 = ssub.s32 2048, 2048
      %98 = vsyncadd [#allocation15], %s97
      %s99 = sshll.u32 [#allocation14], 4
      %s100 = int_to_ptr.vmem [resolvable:$true] %s99
      %105 = dma.hbm_to_vmem [thread:$0]  %s7, 2048, %s100, [#allocation15], 128, 128, 8
    $region33: #{_model_forward.1} parent=1 // pred_fallthru
      _
    // Predicated region
    $region34: #{_model_forward.1} parent=1 // pred_check
      _
    $region35: #{_model_forward.1} parent=1 // pred_check_branch
      %107 = sbr.rel (0) target = $region37
    $region36: #{_model_forward.1} parent=1 // pred_region
      %s109 = ssub.s32 16, 16
      %110 = vsyncadd [#allocation15], %s109
      %s112 = sshll.u32 [#allocation16], 4
      %s113 = int_to_ptr.vmem [resolvable:$true] %s112
      %115 = dma.hbm_to_vmem [thread:$0]  %s8, 16, %s113, [#allocation15]
    $region37: #{_model_forward.1} parent=1 // pred_fallthru
      _
    // Predicated region
    $region38: #{_model_forward.1} parent=1 // pred_check
      _
    $region39: #{_model_forward.1} parent=1 // pred_check_branch
      %117 = sbr.rel (0) target = $region41
    $region40: #{_model_forward.1} parent=1 // pred_region
      %118 = dma.done [#allocation3], 32
    $region41: #{_model_forward.1} parent=1 // pred_fallthru
      _
    // Predicated region
    $region42: #{_model_forward.1} parent=1 // pred_check
      _
    $region43: #{_model_forward.1} parent=1 // pred_check_branch
      %120 = sbr.rel (0) target = $region45
    $region44: #{_model_forward.1} parent=1 // pred_region
      %121 = dma.done [#allocation6], 3072
    $region45: #{_model_forward.1} parent=1 // pred_fallthru
      _
    // Predicated region
    $region46: #{_model_forward.1} parent=1 // pred_check
      _
    $region47: #{_model_forward.1} parent=1 // pred_check_branch
      %123 = sbr.rel (0) target = $region49
    $region48: #{_model_forward.1} parent=1 // pred_region
      %124 = dma.done [#allocation6], 49152
    $region49: #{_model_forward.1} parent=1 // pred_fallthru
      _
    // Predicated region
    $region50: #{_model_forward.1} parent=1 // pred_check
      _
    $region51: #{_model_forward.1} parent=1 // pred_check_branch
      %126 = sbr.rel (0) target = $region53
    $region52: #{_model_forward.1} parent=1 // pred_region
      %127 = dma.done [#allocation9], 16
    $region53: #{_model_forward.1} parent=1 // pred_fallthru
      _
    // Predicated region
    $region54: #{_model_forward.1} parent=1 // pred_check
      _
    $region55: #{_model_forward.1} parent=1 // pred_check_branch
      %129 = sbr.rel (0) target = $region57
    $region56: #{_model_forward.1} parent=1 // pred_region
      %130 = dma.done [#allocation9], 16
    $region57: #{_model_forward.1} parent=1 // pred_fallthru
      _
    // Predicated region
    $region58: #{_model_forward.1} parent=1 // pred_check
      _
    $region59: #{_model_forward.1} parent=1 // pred_check_branch
      %132 = sbr.rel (0) target = $region61
    $region60: #{_model_forward.1} parent=1 // pred_region
      %133 = dma.done [#allocation12], 2048
    $region61: #{_model_forward.1} parent=1 // pred_fallthru
      _
    // Predicated region
    $region62: #{_model_forward.1} parent=1 // pred_check
      _
    $region63: #{_model_forward.1} parent=1 // pred_check_branch
      %135 = sbr.rel (0) target = $region65
    $region64: #{_model_forward.1} parent=1 // pred_region
      %136 = dma.done [#allocation12], 16
    $region65: #{_model_forward.1} parent=1 // pred_fallthru
      _
    // Predicated region
    $region66: #{_model_forward.1} parent=1 // pred_check
      _
    $region67: #{_model_forward.1} parent=1 // pred_check_branch
      %138 = sbr.rel (0) target = $region69
    $region68: #{_model_forward.1} parent=1 // pred_region
      %139 = dma.done [#allocation15], 2048
    $region69: #{_model_forward.1} parent=1 // pred_fallthru
      _
    // Predicated region
    $region70: #{_model_forward.1} parent=1 // pred_check
      _
    $region71: #{_model_forward.1} parent=1 // pred_check_branch
      %141 = sbr.rel (0) target = $region73
    $region72: #{_model_forward.1} parent=1 // pred_region
      %142 = dma.done [#allocation15], 16
    $region73: #{_model_forward.1} parent=1 // pred_fallthru
      _
    %v144 = vld [vmem:[#allocation5] sm:$0xff]
    %v145 = vld [vmem:[#allocation5 + $0x8] sm:$0xff]
    %v146 = vld [vmem:[#allocation5 + $0x10] sm:$0xff]
    %v147 = vld [vmem:[#allocation5 + $0x18] sm:$0xff]
    %v148 = vld [vmem:[#allocation5 + $0x20] sm:$0xff]
    %v149 = vld [vmem:[#allocation5 + $0x28] sm:$0xff]
    %v150 = vld [vmem:[#allocation5 + $0x30] sm:$0xff]
    %v151 = vld [vmem:[#allocation5 + $0x38] sm:$0xff]
    %v152 = vld [vmem:[#allocation5 + $0x40] sm:$0xff]
    %v153 = vld [vmem:[#allocation5 + $0x48] sm:$0xff]
    %v154 = vld [vmem:[#allocation5 + $0x50] sm:$0xff]
    %v155 = vld [vmem:[#allocation5 + $0x58] sm:$0xff]
    %v156 = vld [vmem:[#allocation5 + $0x60] sm:$0xff]
    %v157 = vld [vmem:[#allocation5 + $0x68] sm:$0xff]
    %v158 = vld [vmem:[#allocation5 + $0x70] sm:$0xff]
    %v159 = vld [vmem:[#allocation5 + $0x78] sm:$0xff]
    %v160 = vld [vmem:[#allocation5 + $0x80] sm:$0xff]
    %v161 = vld [vmem:[#allocation5 + $0x88] sm:$0xff]
    %v162 = vld [vmem:[#allocation5 + $0x90] sm:$0xff]
    %v163 = vld [vmem:[#allocation5 + $0x98] sm:$0xff]
    %v164 = vld [vmem:[#allocation5 + $0xa0] sm:$0xff]
    %v165 = vld [vmem:[#allocation5 + $0xa8] sm:$0xff]
    %v166 = vld [vmem:[#allocation5 + $0xb0] sm:$0xff]
    %v167 = vld [vmem:[#allocation5 + $0xb8] sm:$0xff]
    %v192 = vcombine.high %v144, %v144
    %v194 = vunpack.c.l.s4 1983009808
    %v195 = vunpack.c.0.s8 %v194
    %v196 = vlaneseq
    %v197 = vshrl.u32 %v196, 7
    %v198 = vsub.s32 %v195, %v197
    %v199 = vrot.slane %v144, %v198
    %v201 = vunpack.c.l.s4 1983009808
    %v202 = vunpack.c.0.s8 %v201
    %v203 = vlaneseq
    %v204 = vshrl.u32 %v203, 7
    %v205 = vsub.s32 %v202, %v204
    %v206 = vrot.slane %v192, %v205
    %v207 = vcombine.high %v199, %v199
    %v208 = vcombine.high %v206, %v206
    %v209 = vcombine.high %v145, %v145
    %v211 = vunpack.c.l.s4 1983009808
    %v212 = vunpack.c.0.s8 %v211
    %v213 = vlaneseq
    %v214 = vshrl.u32 %v213, 7
    %v215 = vsub.s32 %v212, %v214
    %v216 = vrot.slane %v145, %v215
    %v218 = vunpack.c.l.s4 1983009808
    %v219 = vunpack.c.0.s8 %v218
    %v220 = vlaneseq
    %v221 = vshrl.u32 %v220, 7
    %v222 = vsub.s32 %v219, %v221
    %v223 = vrot.slane %v209, %v222
    %v224 = vcombine.high %v216, %v216
    %v225 = vcombine.high %v223, %v223
    %v226 = vcombine.high %v146, %v146
    %v228 = vunpack.c.l.s4 1983009808
    %v229 = vunpack.c.0.s8 %v228
    %v230 = vlaneseq
    %v231 = vshrl.u32 %v230, 7
    %v232 = vsub.s32 %v229, %v231
    %v233 = vrot.slane %v146, %v232
    %v235 = vunpack.c.l.s4 1983009808
    %v236 = vunpack.c.0.s8 %v235
    %v237 = vlaneseq
    %v238 = vshrl.u32 %v237, 7
    %v239 = vsub.s32 %v236, %v238
    %v240 = vrot.slane %v226, %v239
    %v241 = vcombine.high %v233, %v233
    %v242 = vcombine.high %v240, %v240
    %v243 = vcombine.high %v147, %v147
    %v245 = vunpack.c.l.s4 1983009808
    %v246 = vunpack.c.0.s8 %v245
    %v247 = vlaneseq
    %v248 = vshrl.u32 %v247, 7
    %v249 = vsub.s32 %v246, %v248
    %v250 = vrot.slane %v147, %v249
    %v252 = vunpack.c.l.s4 1983009808
    %v253 = vunpack.c.0.s8 %v252
    %v254 = vlaneseq
    %v255 = vshrl.u32 %v254, 7
    %v256 = vsub.s32 %v253, %v255
    %v257 = vrot.slane %v243, %v256
    %v258 = vcombine.high %v250, %v250
    %v259 = vcombine.high %v257, %v257
    %v260 = vcombine.high %v148, %v148
    %v262 = vunpack.c.l.s4 1983009808
    %v263 = vunpack.c.0.s8 %v262
    %v264 = vlaneseq
    %v265 = vshrl.u32 %v264, 7
    %v266 = vsub.s32 %v263, %v265
    %v267 = vrot.slane %v148, %v266
    %v269 = vunpack.c.l.s4 1983009808
    %v270 = vunpack.c.0.s8 %v269
    %v271 = vlaneseq
    %v272 = vshrl.u32 %v271, 7
    %v273 = vsub.s32 %v270, %v272
    %v274 = vrot.slane %v260, %v273
    %v275 = vcombine.high %v267, %v267
    %v276 = vcombine.high %v274, %v274
    %v277 = vcombine.high %v149, %v149
    %v279 = vunpack.c.l.s4 1983009808
    %v280 = vunpack.c.0.s8 %v279
    %v281 = vlaneseq
    %v282 = vshrl.u32 %v281, 7
    %v283 = vsub.s32 %v280, %v282
    %v284 = vrot.slane %v149, %v283
    %v286 = vunpack.c.l.s4 1983009808
    %v287 = vunpack.c.0.s8 %v286
    %v288 = vlaneseq
    %v289 = vshrl.u32 %v288, 7
    %v290 = vsub.s32 %v287, %v289
    %v291 = vrot.slane %v277, %v290
    %v292 = vcombine.high %v284, %v284
    %v293 = vcombine.high %v291, %v291
    %v294 = vcombine.high %v150, %v150
    %v296 = vunpack.c.l.s4 1983009808
    %v297 = vunpack.c.0.s8 %v296
    %v298 = vlaneseq
    %v299 = vshrl.u32 %v298, 7
    %v300 = vsub.s32 %v297, %v299
    %v301 = vrot.slane %v150, %v300
    %v303 = vunpack.c.l.s4 1983009808
    %v304 = vunpack.c.0.s8 %v303
    %v305 = vlaneseq
    %v306 = vshrl.u32 %v305, 7
    %v307 = vsub.s32 %v304, %v306
    %v308 = vrot.slane %v294, %v307
    %v309 = vcombine.high %v301, %v301
    %v310 = vcombine.high %v308, %v308
    %v311 = vcombine.high %v151, %v151
    %v313 = vunpack.c.l.s4 1983009808
    %v314 = vunpack.c.0.s8 %v313
    %v315 = vlaneseq
    %v316 = vshrl.u32 %v315, 7
    %v317 = vsub.s32 %v314, %v316
    %v318 = vrot.slane %v151, %v317
    %v320 = vunpack.c.l.s4 1983009808
    %v321 = vunpack.c.0.s8 %v320
    %v322 = vlaneseq
    %v323 = vshrl.u32 %v322, 7
    %v324 = vsub.s32 %v321, %v323
    %v325 = vrot.slane %v311, %v324
    %v326 = vcombine.high %v318, %v318
    %v327 = vcombine.high %v325, %v325
    %v328 = vcombine.high %v152, %v152
    %v330 = vunpack.c.l.s4 1983009808
    %v331 = vunpack.c.0.s8 %v330
    %v332 = vlaneseq
    %v333 = vshrl.u32 %v332, 7
    %v334 = vsub.s32 %v331, %v333
    %v335 = vrot.slane %v152, %v334
    %v337 = vunpack.c.l.s4 1983009808
    %v338 = vunpack.c.0.s8 %v337
    %v339 = vlaneseq
    %v340 = vshrl.u32 %v339, 7
    %v341 = vsub.s32 %v338, %v340
    %v342 = vrot.slane %v328, %v341
    %v343 = vcombine.high %v335, %v335
    %v344 = vcombine.high %v342, %v342
    %v345 = vcombine.high %v153, %v153
    %v347 = vunpack.c.l.s4 1983009808
    %v348 = vunpack.c.0.s8 %v347
    %v349 = vlaneseq
    %v350 = vshrl.u32 %v349, 7
    %v351 = vsub.s32 %v348, %v350
    %v352 = vrot.slane %v153, %v351
    %v354 = vunpack.c.l.s4 1983009808
    %v355 = vunpack.c.0.s8 %v354
    %v356 = vlaneseq
    %v357 = vshrl.u32 %v356, 7
    %v358 = vsub.s32 %v355, %v357
    %v359 = vrot.slane %v345, %v358
    %v360 = vcombine.high %v352, %v352
    %v361 = vcombine.high %v359, %v359
    %v362 = vcombine.high %v154, %v154
    %v364 = vunpack.c.l.s4 1983009808
    %v365 = vunpack.c.0.s8 %v364
    %v366 = vlaneseq
    %v367 = vshrl.u32 %v366, 7
    %v368 = vsub.s32 %v365, %v367
    %v369 = vrot.slane %v154, %v368
    %v371 = vunpack.c.l.s4 1983009808
    %v372 = vunpack.c.0.s8 %v371
    %v373 = vlaneseq
    %v374 = vshrl.u32 %v373, 7
    %v375 = vsub.s32 %v372, %v374
    %v376 = vrot.slane %v362, %v375
    %v377 = vcombine.high %v369, %v369
    %v378 = vcombine.high %v376, %v376
    %v379 = vcombine.high %v155, %v155
    %v381 = vunpack.c.l.s4 1983009808
    %v382 = vunpack.c.0.s8 %v381
    %v383 = vlaneseq
    %v384 = vshrl.u32 %v383, 7
    %v385 = vsub.s32 %v382, %v384
    %v386 = vrot.slane %v155, %v385
    %v388 = vunpack.c.l.s4 1983009808
    %v389 = vunpack.c.0.s8 %v388
    %v390 = vlaneseq
    %v391 = vshrl.u32 %v390, 7
    %v392 = vsub.s32 %v389, %v391
    %v393 = vrot.slane %v379, %v392
    %v394 = vcombine.high %v386, %v386
    %v395 = vcombine.high %v393, %v393
    %v396 = vcombine.high %v156, %v156
    %v398 = vunpack.c.l.s4 1983009808
    %v399 = vunpack.c.0.s8 %v398
    %v400 = vlaneseq
    %v401 = vshrl.u32 %v400, 7
    %v402 = vsub.s32 %v399, %v401
    %v403 = vrot.slane %v156, %v402
    %v405 = vunpack.c.l.s4 1983009808
    %v406 = vunpack.c.0.s8 %v405
    %v407 = vlaneseq
    %v408 = vshrl.u32 %v407, 7
    %v409 = vsub.s32 %v406, %v408
    %v410 = vrot.slane %v396, %v409
    %v411 = vcombine.high %v403, %v403
    %v412 = vcombine.high %v410, %v410
    %v413 = vcombine.high %v157, %v157
    %v415 = vunpack.c.l.s4 1983009808
    %v416 = vunpack.c.0.s8 %v415
    %v417 = vlaneseq
    %v418 = vshrl.u32 %v417, 7
    %v419 = vsub.s32 %v416, %v418
    %v420 = vrot.slane %v157, %v419
    %v422 = vunpack.c.l.s4 1983009808
    %v423 = vunpack.c.0.s8 %v422
    %v424 = vlaneseq
    %v425 = vshrl.u32 %v424, 7
    %v426 = vsub.s32 %v423, %v425
    %v427 = vrot.slane %v413, %v426
    %v428 = vcombine.high %v420, %v420
    %v429 = vcombine.high %v427, %v427
    %v430 = vcombine.high %v158, %v158
    %v432 = vunpack.c.l.s4 1983009808
    %v433 = vunpack.c.0.s8 %v432
    %v434 = vlaneseq
    %v435 = vshrl.u32 %v434, 7
    %v436 = vsub.s32 %v433, %v435
    %v437 = vrot.slane %v158, %v436
    %v439 = vunpack.c.l.s4 1983009808
    %v440 = vunpack.c.0.s8 %v439
    %v441 = vlaneseq
    %v442 = vshrl.u32 %v441, 7
    %v443 = vsub.s32 %v440, %v442
    %v444 = vrot.slane %v430, %v443
    %v445 = vcombine.high %v437, %v437
    %v446 = vcombine.high %v444, %v444
    %v447 = vcombine.high %v159, %v159
    %v449 = vunpack.c.l.s4 1983009808
    %v450 = vunpack.c.0.s8 %v449
    %v451 = vlaneseq
    %v452 = vshrl.u32 %v451, 7
    %v453 = vsub.s32 %v450, %v452
    %v454 = vrot.slane %v159, %v453
    %v456 = vunpack.c.l.s4 1983009808
    %v457 = vunpack.c.0.s8 %v456
    %v458 = vlaneseq
    %v459 = vshrl.u32 %v458, 7
    %v460 = vsub.s32 %v457, %v459
    %v461 = vrot.slane %v447, %v460
    %v462 = vcombine.high %v454, %v454
    %v463 = vcombine.high %v461, %v461
    %v464 = vcombine.high %v160, %v160
    %v466 = vunpack.c.l.s4 1983009808
    %v467 = vunpack.c.0.s8 %v466
    %v468 = vlaneseq
    %v469 = vshrl.u32 %v468, 7
    %v470 = vsub.s32 %v467, %v469
    %v471 = vrot.slane %v160, %v470
    %v473 = vunpack.c.l.s4 1983009808
    %v474 = vunpack.c.0.s8 %v473
    %v475 = vlaneseq
    %v476 = vshrl.u32 %v475, 7
    %v477 = vsub.s32 %v474, %v476
    %v478 = vrot.slane %v464, %v477
    %v479 = vcombine.high %v471, %v471
    %v480 = vcombine.high %v478, %v478
    %v481 = vcombine.high %v161, %v161
    %v483 = vunpack.c.l.s4 1983009808
    %v484 = vunpack.c.0.s8 %v483
    %v485 = vlaneseq
    %v486 = vshrl.u32 %v485, 7
    %v487 = vsub.s32 %v484, %v486
    %v488 = vrot.slane %v161, %v487
    %v490 = vunpack.c.l.s4 1983009808
    %v491 = vunpack.c.0.s8 %v490
    %v492 = vlaneseq
    %v493 = vshrl.u32 %v492, 7
    %v494 = vsub.s32 %v491, %v493
    %v495 = vrot.slane %v481, %v494
    %v496 = vcombine.high %v488, %v488
    %v497 = vcombine.high %v495, %v495
    %v498 = vcombine.high %v162, %v162
    %v500 = vunpack.c.l.s4 1983009808
    %v501 = vunpack.c.0.s8 %v500
    %v502 = vlaneseq
    %v503 = vshrl.u32 %v502, 7
    %v504 = vsub.s32 %v501, %v503
    %v505 = vrot.slane %v162, %v504
    %v507 = vunpack.c.l.s4 1983009808
    %v508 = vunpack.c.0.s8 %v507
    %v509 = vlaneseq
    %v510 = vshrl.u32 %v509, 7
    %v511 = vsub.s32 %v508, %v510
    %v512 = vrot.slane %v498, %v511
    %v513 = vcombine.high %v505, %v505
    %v514 = vcombine.high %v512, %v512
    %v515 = vcombine.high %v163, %v163
    %v517 = vunpack.c.l.s4 1983009808
    %v518 = vunpack.c.0.s8 %v517
    %v519 = vlaneseq
    %v520 = vshrl.u32 %v519, 7
    %v521 = vsub.s32 %v518, %v520
    %v522 = vrot.slane %v163, %v521
    %v524 = vunpack.c.l.s4 1983009808
    %v525 = vunpack.c.0.s8 %v524
    %v526 = vlaneseq
    %v527 = vshrl.u32 %v526, 7
    %v528 = vsub.s32 %v525, %v527
    %v529 = vrot.slane %v515, %v528
    %v530 = vcombine.high %v522, %v522
    %v531 = vcombine.high %v529, %v529
    %v532 = vcombine.high %v164, %v164
    %v534 = vunpack.c.l.s4 1983009808
    %v535 = vunpack.c.0.s8 %v534
    %v536 = vlaneseq
    %v537 = vshrl.u32 %v536, 7
    %v538 = vsub.s32 %v535, %v537
    %v539 = vrot.slane %v164, %v538
    %v541 = vunpack.c.l.s4 1983009808
    %v542 = vunpack.c.0.s8 %v541
    %v543 = vlaneseq
    %v544 = vshrl.u32 %v543, 7
    %v545 = vsub.s32 %v542, %v544
    %v546 = vrot.slane %v532, %v545
    %v547 = vcombine.high %v539, %v539
    %v548 = vcombine.high %v546, %v546
    %v549 = vcombine.high %v165, %v165
    %v551 = vunpack.c.l.s4 1983009808
    %v552 = vunpack.c.0.s8 %v551
    %v553 = vlaneseq
    %v554 = vshrl.u32 %v553, 7
    %v555 = vsub.s32 %v552, %v554
    %v556 = vrot.slane %v165, %v555
    %v558 = vunpack.c.l.s4 1983009808
    %v559 = vunpack.c.0.s8 %v558
    %v560 = vlaneseq
    %v561 = vshrl.u32 %v560, 7
    %v562 = vsub.s32 %v559, %v561
    %v563 = vrot.slane %v549, %v562
    %v564 = vcombine.high %v556, %v556
    %v565 = vcombine.high %v563, %v563
    %v566 = vcombine.high %v166, %v166
    %v568 = vunpack.c.l.s4 1983009808
    %v569 = vunpack.c.0.s8 %v568
    %v570 = vlaneseq
    %v571 = vshrl.u32 %v570, 7
    %v572 = vsub.s32 %v569, %v571
    %v573 = vrot.slane %v166, %v572
    %v575 = vunpack.c.l.s4 1983009808
    %v576 = vunpack.c.0.s8 %v575
    %v577 = vlaneseq
    %v578 = vshrl.u32 %v577, 7
    %v579 = vsub.s32 %v576, %v578
    %v580 = vrot.slane %v566, %v579
    %v581 = vcombine.high %v573, %v573
    %v582 = vcombine.high %v580, %v580
    %v583 = vcombine.high %v167, %v167
    %v585 = vunpack.c.l.s4 1983009808
    %v586 = vunpack.c.0.s8 %v585
    %v587 = vlaneseq
    %v588 = vshrl.u32 %v587, 7
    %v589 = vsub.s32 %v586, %v588
    %v590 = vrot.slane %v167, %v589
    %v592 = vunpack.c.l.s4 1983009808
    %v593 = vunpack.c.0.s8 %v592
    %v594 = vlaneseq
    %v595 = vshrl.u32 %v594, 7
    %v596 = vsub.s32 %v593, %v595
    %v597 = vrot.slane %v583, %v596
    %v598 = vcombine.high %v590, %v590
    %v599 = vcombine.high %v597, %v597
    %v696 = vpack.c.bf16 %v199, %v199
    %v697 = vpack.c.bf16 %v207, %v207
    %v698 = vpack.c.bf16 %v206, %v206
    %v699 = vpack.c.bf16 %v208, %v208
    %v700 = vpack.c.bf16 %v216, %v216
    %v701 = vpack.c.bf16 %v224, %v224
    %v702 = vpack.c.bf16 %v223, %v223
    %v703 = vpack.c.bf16 %v225, %v225
    %v704 = vpack.c.bf16 %v233, %v233
    %v705 = vpack.c.bf16 %v241, %v241
    %v706 = vpack.c.bf16 %v240, %v240
    %v707 = vpack.c.bf16 %v242, %v242
    %v708 = vpack.c.bf16 %v250, %v250
    %v709 = vpack.c.bf16 %v258, %v258
    %v710 = vpack.c.bf16 %v257, %v257
    %v711 = vpack.c.bf16 %v259, %v259
    %v712 = vpack.c.bf16 %v267, %v267
    %v713 = vpack.c.bf16 %v275, %v275
    %v714 = vpack.c.bf16 %v274, %v274
    %v715 = vpack.c.bf16 %v276, %v276
    %v716 = vpack.c.bf16 %v284, %v284
    %v717 = vpack.c.bf16 %v292, %v292
    %v718 = vpack.c.bf16 %v291, %v291
    %v719 = vpack.c.bf16 %v293, %v293
    %v720 = vpack.c.bf16 %v301, %v301
    %v721 = vpack.c.bf16 %v309, %v309
    %v722 = vpack.c.bf16 %v308, %v308
    %v723 = vpack.c.bf16 %v310, %v310
    %v724 = vpack.c.bf16 %v318, %v318
    %v725 = vpack.c.bf16 %v326, %v326
    %v726 = vpack.c.bf16 %v325, %v325
    %v727 = vpack.c.bf16 %v327, %v327
    %v728 = vpack.c.bf16 %v335, %v335
    %v729 = vpack.c.bf16 %v343, %v343
    %v730 = vpack.c.bf16 %v342, %v342
    %v731 = vpack.c.bf16 %v344, %v344
    %v732 = vpack.c.bf16 %v352, %v352
    %v733 = vpack.c.bf16 %v360, %v360
    %v734 = vpack.c.bf16 %v359, %v359
    %v735 = vpack.c.bf16 %v361, %v361
    %v736 = vpack.c.bf16 %v369, %v369
    %v737 = vpack.c.bf16 %v377, %v377
    %v738 = vpack.c.bf16 %v376, %v376
    %v739 = vpack.c.bf16 %v378, %v378
    %v740 = vpack.c.bf16 %v386, %v386
    %v741 = vpack.c.bf16 %v394, %v394
    %v742 = vpack.c.bf16 %v393, %v393
    %v743 = vpack.c.bf16 %v395, %v395
    %v744 = vpack.c.bf16 %v403, %v403
    %v745 = vpack.c.bf16 %v411, %v411
    %v746 = vpack.c.bf16 %v410, %v410
    %v747 = vpack.c.bf16 %v412, %v412
    %v748 = vpack.c.bf16 %v420, %v420
    %v749 = vpack.c.bf16 %v428, %v428
    %v750 = vpack.c.bf16 %v427, %v427
    %v751 = vpack.c.bf16 %v429, %v429
    %v752 = vpack.c.bf16 %v437, %v437
    %v753 = vpack.c.bf16 %v445, %v445
    %v754 = vpack.c.bf16 %v444, %v444
    %v755 = vpack.c.bf16 %v446, %v446
    %v756 = vpack.c.bf16 %v454, %v454
    %v757 = vpack.c.bf16 %v462, %v462
    %v758 = vpack.c.bf16 %v461, %v461
    %v759 = vpack.c.bf16 %v463, %v463
    %v760 = vpack.c.bf16 %v471, %v471
    %v761 = vpack.c.bf16 %v479, %v479
    %v762 = vpack.c.bf16 %v478, %v478
    %v763 = vpack.c.bf16 %v480, %v480
    %v764 = vpack.c.bf16 %v488, %v488
    %v765 = vpack.c.bf16 %v496, %v496
    %v766 = vpack.c.bf16 %v495, %v495
    %v767 = vpack.c.bf16 %v497, %v497
    %v768 = vpack.c.bf16 %v505, %v505
    %v769 = vpack.c.bf16 %v513, %v513
    %v770 = vpack.c.bf16 %v512, %v512
    %v771 = vpack.c.bf16 %v514, %v514
    %v772 = vpack.c.bf16 %v522, %v522
    %v773 = vpack.c.bf16 %v530, %v530
    %v774 = vpack.c.bf16 %v529, %v529
    %v775 = vpack.c.bf16 %v531, %v531
    %v776 = vpack.c.bf16 %v539, %v539
    %v777 = vpack.c.bf16 %v547, %v547
    %v778 = vpack.c.bf16 %v546, %v546
    %v779 = vpack.c.bf16 %v548, %v548
    %v780 = vpack.c.bf16 %v556, %v556
    %v781 = vpack.c.bf16 %v564, %v564
    %v782 = vpack.c.bf16 %v563, %v563
    %v783 = vpack.c.bf16 %v565, %v565
    %v784 = vpack.c.bf16 %v573, %v573
    %v785 = vpack.c.bf16 %v581, %v581
    %v786 = vpack.c.bf16 %v580, %v580
    %v787 = vpack.c.bf16 %v582, %v582
    %v788 = vpack.c.bf16 %v590, %v590
    %v789 = vpack.c.bf16 %v598, %v598
    %v790 = vpack.c.bf16 %v597, %v597
    %v791 = vpack.c.bf16 %v599, %v599
    %v792 = vld [vmem:[#allocation7] sm:$0xff]
    %v793 = vld [vmem:[#allocation7 + $0x8] sm:$0xff]
    %v794 = vld [vmem:[#allocation7 + $0x10] sm:$0xff]
    %v795 = vld [vmem:[#allocation7 + $0x18] sm:$0xff]
    %v796 = vld [vmem:[#allocation7 + $0x20] sm:$0xff]
    %v797 = vld [vmem:[#allocation7 + $0x28] sm:$0xff]
    %v798 = vld [vmem:[#allocation7 + $0x30] sm:$0xff]
    %v799 = vld [vmem:[#allocation7 + $0x38] sm:$0xff]
    %v800 = vld [vmem:[#allocation7 + $0x40] sm:$0xff]
    %v801 = vld [vmem:[#allocation7 + $0x48] sm:$0xff]
    %v802 = vld [vmem:[#allocation7 + $0x50] sm:$0xff]
    %v803 = vld [vmem:[#allocation7 + $0x58] sm:$0xff]
    %v804 = vld [vmem:[#allocation7 + $0x60] sm:$0xff]
    %v805 = vld [vmem:[#allocation7 + $0x68] sm:$0xff]
    %v806 = vld [vmem:[#allocation7 + $0x70] sm:$0xff]
    %v807 = vld [vmem:[#allocation7 + $0x78] sm:$0xff]
    %v808 = vld [vmem:[#allocation7 + $0x80] sm:$0xff]
    %v809 = vld [vmem:[#allocation7 + $0x88] sm:$0xff]
    %v810 = vld [vmem:[#allocation7 + $0x90] sm:$0xff]
    %v811 = vld [vmem:[#allocation7 + $0x98] sm:$0xff]
    %v812 = vld [vmem:[#allocation7 + $0xa0] sm:$0xff]
    %v813 = vld [vmem:[#allocation7 + $0xa8] sm:$0xff]
    %v814 = vld [vmem:[#allocation7 + $0xb0] sm:$0xff]
    %v815 = vld [vmem:[#allocation7 + $0xb8] sm:$0xff]
    %v816 = vld [vmem:[#allocation7 + $0xc0] sm:$0xff]
    %v817 = vld [vmem:[#allocation7 + $0xc8] sm:$0xff]
    %v818 = vld [vmem:[#allocation7 + $0xd0] sm:$0xff]
    %v819 = vld [vmem:[#allocation7 + $0xd8] sm:$0xff]
    %v820 = vld [vmem:[#allocation7 + $0xe0] sm:$0xff]
    %v821 = vld [vmem:[#allocation7 + $0xe8] sm:$0xff]
    %v822 = vld [vmem:[#allocation7 + $0xf0] sm:$0xff]
    %v823 = vld [vmem:[#allocation7 + $0xf8] sm:$0xff]
    %v824 = vld [vmem:[#allocation7 + $0x100] sm:$0xff]
    %v825 = vld [vmem:[#allocation7 + $0x108] sm:$0xff]
    %v826 = vld [vmem:[#allocation7 + $0x110] sm:$0xff]
    %v827 = vld [vmem:[#allocation7 + $0x118] sm:$0xff]
    %v828 = vld [vmem:[#allocation7 + $0x120] sm:$0xff]
    %v829 = vld [vmem:[#allocation7 + $0x128] sm:$0xff]
    %v830 = vld [vmem:[#allocation7 + $0x130] sm:$0xff]
    %v831 = vld [vmem:[#allocation7 + $0x138] sm:$0xff]
    %v832 = vld [vmem:[#allocation7 + $0x140] sm:$0xff]
    %v833 = vld [vmem:[#allocation7 + $0x148] sm:$0xff]
    %v834 = vld [vmem:[#allocation7 + $0x150] sm:$0xff]
    %v835 = vld [vmem:[#allocation7 + $0x158] sm:$0xff]
    %v836 = vld [vmem:[#allocation7 + $0x160] sm:$0xff]
    %v837 = vld [vmem:[#allocation7 + $0x168] sm:$0xff]
    %v838 = vld [vmem:[#allocation7 + $0x170] sm:$0xff]
    %v839 = vld [vmem:[#allocation7 + $0x178] sm:$0xff]
    %v840 = vld [vmem:[#allocation7 + $0x180] sm:$0xff]
    %v841 = vld [vmem:[#allocation7 + $0x188] sm:$0xff]
    %v842 = vld [vmem:[#allocation7 + $0x190] sm:$0xff]
    %v843 = vld [vmem:[#allocation7 + $0x198] sm:$0xff]
    %v844 = vld [vmem:[#allocation7 + $0x1a0] sm:$0xff]
    %v845 = vld [vmem:[#allocation7 + $0x1a8] sm:$0xff]
    %v846 = vld [vmem:[#allocation7 + $0x1b0] sm:$0xff]
    %v847 = vld [vmem:[#allocation7 + $0x1b8] sm:$0xff]
    %v848 = vld [vmem:[#allocation7 + $0x1c0] sm:$0xff]
    %v849 = vld [vmem:[#allocation7 + $0x1c8] sm:$0xff]
    %v850 = vld [vmem:[#allocation7 + $0x1d0] sm:$0xff]
    %v851 = vld [vmem:[#allocation7 + $0x1d8] sm:$0xff]
    %v852 = vld [vmem:[#allocation7 + $0x1e0] sm:$0xff]
    %v853 = vld [vmem:[#allocation7 + $0x1e8] sm:$0xff]
    %v854 = vld [vmem:[#allocation7 + $0x1f0] sm:$0xff]
    %v855 = vld [vmem:[#allocation7 + $0x1f8] sm:$0xff]
    %v856 = vld [vmem:[#allocation7 + $0x200] sm:$0xff]
    %v857 = vld [vmem:[#allocation7 + $0x208] sm:$0xff]
    %v858 = vld [vmem:[#allocation7 + $0x210] sm:$0xff]
    %v859 = vld [vmem:[#allocation7 + $0x218] sm:$0xff]
    %v860 = vld [vmem:[#allocation7 + $0x220] sm:$0xff]
    %v861 = vld [vmem:[#allocation7 + $0x228] sm:$0xff]
    %v862 = vld [vmem:[#allocation7 + $0x230] sm:$0xff]
    %v863 = vld [vmem:[#allocation7 + $0x238] sm:$0xff]
    %v864 = vld [vmem:[#allocation7 + $0x240] sm:$0xff]
    %v865 = vld [vmem:[#allocation7 + $0x248] sm:$0xff]
    %v866 = vld [vmem:[#allocation7 + $0x250] sm:$0xff]
    %v867 = vld [vmem:[#allocation7 + $0x258] sm:$0xff]
    %v868 = vld [vmem:[#allocation7 + $0x260] sm:$0xff]
    %v869 = vld [vmem:[#allocation7 + $0x268] sm:$0xff]
    %v870 = vld [vmem:[#allocation7 + $0x270] sm:$0xff]
    %v871 = vld [vmem:[#allocation7 + $0x278] sm:$0xff]
    %v872 = vld [vmem:[#allocation7 + $0x280] sm:$0xff]
    %v873 = vld [vmem:[#allocation7 + $0x288] sm:$0xff]
    %v874 = vld [vmem:[#allocation7 + $0x290] sm:$0xff]
    %v875 = vld [vmem:[#allocation7 + $0x298] sm:$0xff]
    %v876 = vld [vmem:[#allocation7 + $0x2a0] sm:$0xff]
    %v877 = vld [vmem:[#allocation7 + $0x2a8] sm:$0xff]
    %v878 = vld [vmem:[#allocation7 + $0x2b0] sm:$0xff]
    %v879 = vld [vmem:[#allocation7 + $0x2b8] sm:$0xff]
    %v880 = vld [vmem:[#allocation7 + $0x2c0] sm:$0xff]
    %v881 = vld [vmem:[#allocation7 + $0x2c8] sm:$0xff]
    %v882 = vld [vmem:[#allocation7 + $0x2d0] sm:$0xff]
    %v883 = vld [vmem:[#allocation7 + $0x2d8] sm:$0xff]
    %v884 = vld [vmem:[#allocation7 + $0x2e0] sm:$0xff]
    %v885 = vld [vmem:[#allocation7 + $0x2e8] sm:$0xff]
    %v886 = vld [vmem:[#allocation7 + $0x2f0] sm:$0xff]
    %v887 = vld [vmem:[#allocation7 + $0x2f8] sm:$0xff]
    %v888 = vld [vmem:[#allocation7 + $0x300] sm:$0xff]
    %v889 = vld [vmem:[#allocation7 + $0x308] sm:$0xff]
    %v890 = vld [vmem:[#allocation7 + $0x310] sm:$0xff]
    %v891 = vld [vmem:[#allocation7 + $0x318] sm:$0xff]
    %v892 = vld [vmem:[#allocation7 + $0x320] sm:$0xff]
    %v893 = vld [vmem:[#allocation7 + $0x328] sm:$0xff]
    %v894 = vld [vmem:[#allocation7 + $0x330] sm:$0xff]
    %v895 = vld [vmem:[#allocation7 + $0x338] sm:$0xff]
    %v896 = vld [vmem:[#allocation7 + $0x340] sm:$0xff]
    %v897 = vld [vmem:[#allocation7 + $0x348] sm:$0xff]
    %v898 = vld [vmem:[#allocation7 + $0x350] sm:$0xff]
    %v899 = vld [vmem:[#allocation7 + $0x358] sm:$0xff]
    %v900 = vld [vmem:[#allocation7 + $0x360] sm:$0xff]
    %v901 = vld [vmem:[#allocation7 + $0x368] sm:$0xff]
    %v902 = vld [vmem:[#allocation7 + $0x370] sm:$0xff]
    %v903 = vld [vmem:[#allocation7 + $0x378] sm:$0xff]
    %v904 = vld [vmem:[#allocation7 + $0x380] sm:$0xff]
    %v905 = vld [vmem:[#allocation7 + $0x388] sm:$0xff]
    %v906 = vld [vmem:[#allocation7 + $0x390] sm:$0xff]
    %v907 = vld [vmem:[#allocation7 + $0x398] sm:$0xff]
    %v908 = vld [vmem:[#allocation7 + $0x3a0] sm:$0xff]
    %v909 = vld [vmem:[#allocation7 + $0x3a8] sm:$0xff]
    %v910 = vld [vmem:[#allocation7 + $0x3b0] sm:$0xff]
    %v911 = vld [vmem:[#allocation7 + $0x3b8] sm:$0xff]
    %v912 = vld [vmem:[#allocation7 + $0x3c0] sm:$0xff]
    %v913 = vld [vmem:[#allocation7 + $0x3c8] sm:$0xff]
    %v914 = vld [vmem:[#allocation7 + $0x3d0] sm:$0xff]
    %v915 = vld [vmem:[#allocation7 + $0x3d8] sm:$0xff]
    %v916 = vld [vmem:[#allocation7 + $0x3e0] sm:$0xff]
    %v917 = vld [vmem:[#allocation7 + $0x3e8] sm:$0xff]
    %v918 = vld [vmem:[#allocation7 + $0x3f0] sm:$0xff]
    %v919 = vld [vmem:[#allocation7 + $0x3f8] sm:$0xff]
    %v920 = vld [vmem:[#allocation7 + $0x400] sm:$0xff]
    %v921 = vld [vmem:[#allocation7 + $0x408] sm:$0xff]
    %v922 = vld [vmem:[#allocation7 + $0x410] sm:$0xff]
    %v923 = vld [vmem:[#allocation7 + $0x418] sm:$0xff]
    %v924 = vld [vmem:[#allocation7 + $0x420] sm:$0xff]
    %v925 = vld [vmem:[#allocation7 + $0x428] sm:$0xff]
    %v926 = vld [vmem:[#allocation7 + $0x430] sm:$0xff]
    %v927 = vld [vmem:[#allocation7 + $0x438] sm:$0xff]
    %v928 = vld [vmem:[#allocation7 + $0x440] sm:$0xff]
    %v929 = vld [vmem:[#allocation7 + $0x448] sm:$0xff]
    %v930 = vld [vmem:[#allocation7 + $0x450] sm:$0xff]
    %v931 = vld [vmem:[#allocation7 + $0x458] sm:$0xff]
    %v932 = vld [vmem:[#allocation7 + $0x460] sm:$0xff]
    %v933 = vld [vmem:[#allocation7 + $0x468] sm:$0xff]
    %v934 = vld [vmem:[#allocation7 + $0x470] sm:$0xff]
    %v935 = vld [vmem:[#allocation7 + $0x478] sm:$0xff]
    %v936 = vld [vmem:[#allocation7 + $0x480] sm:$0xff]
    %v937 = vld [vmem:[#allocation7 + $0x488] sm:$0xff]
    %v938 = vld [vmem:[#allocation7 + $0x490] sm:$0xff]
    %v939 = vld [vmem:[#allocation7 + $0x498] sm:$0xff]
    %v940 = vld [vmem:[#allocation7 + $0x4a0] sm:$0xff]
    %v941 = vld [vmem:[#allocation7 + $0x4a8] sm:$0xff]
    %v942 = vld [vmem:[#allocation7 + $0x4b0] sm:$0xff]
    %v943 = vld [vmem:[#allocation7 + $0x4b8] sm:$0xff]
    %v944 = vld [vmem:[#allocation7 + $0x4c0] sm:$0xff]
    %v945 = vld [vmem:[#allocation7 + $0x4c8] sm:$0xff]
    %v946 = vld [vmem:[#allocation7 + $0x4d0] sm:$0xff]
    %v947 = vld [vmem:[#allocation7 + $0x4d8] sm:$0xff]
    %v948 = vld [vmem:[#allocation7 + $0x4e0] sm:$0xff]
    %v949 = vld [vmem:[#allocation7 + $0x4e8] sm:$0xff]
    %v950 = vld [vmem:[#allocation7 + $0x4f0] sm:$0xff]
    %v951 = vld [vmem:[#allocation7 + $0x4f8] sm:$0xff]
    %v952 = vld [vmem:[#allocation7 + $0x500] sm:$0xff]
    %v953 = vld [vmem:[#allocation7 + $0x508] sm:$0xff]
    %v954 = vld [vmem:[#allocation7 + $0x510] sm:$0xff]
    %v955 = vld [vmem:[#allocation7 + $0x518] sm:$0xff]
    %v956 = vld [vmem:[#allocation7 + $0x520] sm:$0xff]
    %v957 = vld [vmem:[#allocation7 + $0x528] sm:$0xff]
    %v958 = vld [vmem:[#allocation7 + $0x530] sm:$0xff]
    %v959 = vld [vmem:[#allocation7 + $0x538] sm:$0xff]
    %v960 = vld [vmem:[#allocation7 + $0x540] sm:$0xff]
    %v961 = vld [vmem:[#allocation7 + $0x548] sm:$0xff]
    %v962 = vld [vmem:[#allocation7 + $0x550] sm:$0xff]
    %v963 = vld [vmem:[#allocation7 + $0x558] sm:$0xff]
    %v964 = vld [vmem:[#allocation7 + $0x560] sm:$0xff]
    %v965 = vld [vmem:[#allocation7 + $0x568] sm:$0xff]
    %v966 = vld [vmem:[#allocation7 + $0x570] sm:$0xff]
    %v967 = vld [vmem:[#allocation7 + $0x578] sm:$0xff]
    %v968 = vld [vmem:[#allocation7 + $0x580] sm:$0xff]
    %v969 = vld [vmem:[#allocation7 + $0x588] sm:$0xff]
    %v970 = vld [vmem:[#allocation7 + $0x590] sm:$0xff]
    %v971 = vld [vmem:[#allocation7 + $0x598] sm:$0xff]
    %v972 = vld [vmem:[#allocation7 + $0x5a0] sm:$0xff]
    %v973 = vld [vmem:[#allocation7 + $0x5a8] sm:$0xff]
    %v974 = vld [vmem:[#allocation7 + $0x5b0] sm:$0xff]
    %v975 = vld [vmem:[#allocation7 + $0x5b8] sm:$0xff]
    %v976 = vld [vmem:[#allocation7 + $0x5c0] sm:$0xff]
    %v977 = vld [vmem:[#allocation7 + $0x5c8] sm:$0xff]
    %v978 = vld [vmem:[#allocation7 + $0x5d0] sm:$0xff]
    %v979 = vld [vmem:[#allocation7 + $0x5d8] sm:$0xff]
    %v980 = vld [vmem:[#allocation7 + $0x5e0] sm:$0xff]
    %v981 = vld [vmem:[#allocation7 + $0x5e8] sm:$0xff]
    %v982 = vld [vmem:[#allocation7 + $0x5f0] sm:$0xff]
    %v983 = vld [vmem:[#allocation7 + $0x5f8] sm:$0xff]
    %v984 = vld [vmem:[#allocation7 + $0x600] sm:$0xff]
    %v985 = vld [vmem:[#allocation7 + $0x608] sm:$0xff]
    %v986 = vld [vmem:[#allocation7 + $0x610] sm:$0xff]
    %v987 = vld [vmem:[#allocation7 + $0x618] sm:$0xff]
    %v988 = vld [vmem:[#allocation7 + $0x620] sm:$0xff]
    %v989 = vld [vmem:[#allocation7 + $0x628] sm:$0xff]
    %v990 = vld [vmem:[#allocation7 + $0x630] sm:$0xff]
    %v991 = vld [vmem:[#allocation7 + $0x638] sm:$0xff]
    %v992 = vld [vmem:[#allocation7 + $0x640] sm:$0xff]
    %v993 = vld [vmem:[#allocation7 + $0x648] sm:$0xff]
    %v994 = vld [vmem:[#allocation7 + $0x650] sm:$0xff]
    %v995 = vld [vmem:[#allocation7 + $0x658] sm:$0xff]
    %v996 = vld [vmem:[#allocation7 + $0x660] sm:$0xff]
    %v997 = vld [vmem:[#allocation7 + $0x668] sm:$0xff]
    %v998 = vld [vmem:[#allocation7 + $0x670] sm:$0xff]
    %v999 = vld [vmem:[#allocation7 + $0x678] sm:$0xff]
    %v1000 = vld [vmem:[#allocation7 + $0x680] sm:$0xff]
    %v1001 = vld [vmem:[#allocation7 + $0x688] sm:$0xff]
    %v1002 = vld [vmem:[#allocation7 + $0x690] sm:$0xff]
    %v1003 = vld [vmem:[#allocation7 + $0x698] sm:$0xff]
    %v1004 = vld [vmem:[#allocation7 + $0x6a0] sm:$0xff]
    %v1005 = vld [vmem:[#allocation7 + $0x6a8] sm:$0xff]
    %v1006 = vld [vmem:[#allocation7 + $0x6b0] sm:$0xff]
    %v1007 = vld [vmem:[#allocation7 + $0x6b8] sm:$0xff]
    %v1008 = vld [vmem:[#allocation7 + $0x6c0] sm:$0xff]
    %v1009 = vld [vmem:[#allocation7 + $0x6c8] sm:$0xff]
    %v1010 = vld [vmem:[#allocation7 + $0x6d0] sm:$0xff]
    %v1011 = vld [vmem:[#allocation7 + $0x6d8] sm:$0xff]
    %v1012 = vld [vmem:[#allocation7 + $0x6e0] sm:$0xff]
    %v1013 = vld [vmem:[#allocation7 + $0x6e8] sm:$0xff]
    %v1014 = vld [vmem:[#allocation7 + $0x6f0] sm:$0xff]
    %v1015 = vld [vmem:[#allocation7 + $0x6f8] sm:$0xff]
    %v1016 = vld [vmem:[#allocation7 + $0x700] sm:$0xff]
    %v1017 = vld [vmem:[#allocation7 + $0x708] sm:$0xff]
    %v1018 = vld [vmem:[#allocation7 + $0x710] sm:$0xff]
    %v1019 = vld [vmem:[#allocation7 + $0x718] sm:$0xff]
    %v1020 = vld [vmem:[#allocation7 + $0x720] sm:$0xff]
    %v1021 = vld [vmem:[#allocation7 + $0x728] sm:$0xff]
    %v1022 = vld [vmem:[#allocation7 + $0x730] sm:$0xff]
    %v1023 = vld [vmem:[#allocation7 + $0x738] sm:$0xff]
    %v1024 = vld [vmem:[#allocation7 + $0x740] sm:$0xff]
    %v1025 = vld [vmem:[#allocation7 + $0x748] sm:$0xff]
    %v1026 = vld [vmem:[#allocation7 + $0x750] sm:$0xff]
    %v1027 = vld [vmem:[#allocation7 + $0x758] sm:$0xff]
    %v1028 = vld [vmem:[#allocation7 + $0x760] sm:$0xff]
    %v1029 = vld [vmem:[#allocation7 + $0x768] sm:$0xff]
    %v1030 = vld [vmem:[#allocation7 + $0x770] sm:$0xff]
    %v1031 = vld [vmem:[#allocation7 + $0x778] sm:$0xff]
    %v1032 = vld [vmem:[#allocation7 + $0x780] sm:$0xff]
    %v1033 = vld [vmem:[#allocation7 + $0x788] sm:$0xff]
    %v1034 = vld [vmem:[#allocation7 + $0x790] sm:$0xff]
    %v1035 = vld [vmem:[#allocation7 + $0x798] sm:$0xff]
    %v1036 = vld [vmem:[#allocation7 + $0x7a0] sm:$0xff]
    %v1037 = vld [vmem:[#allocation7 + $0x7a8] sm:$0xff]
    %v1038 = vld [vmem:[#allocation7 + $0x7b0] sm:$0xff]
    %v1039 = vld [vmem:[#allocation7 + $0x7b8] sm:$0xff]
    %v1040 = vld [vmem:[#allocation7 + $0x7c0] sm:$0xff]
    %v1041 = vld [vmem:[#allocation7 + $0x7c8] sm:$0xff]
    %v1042 = vld [vmem:[#allocation7 + $0x7d0] sm:$0xff]
    %v1043 = vld [vmem:[#allocation7 + $0x7d8] sm:$0xff]
    %v1044 = vld [vmem:[#allocation7 + $0x7e0] sm:$0xff]
    %v1045 = vld [vmem:[#allocation7 + $0x7e8] sm:$0xff]
    %v1046 = vld [vmem:[#allocation7 + $0x7f0] sm:$0xff]
    %v1047 = vld [vmem:[#allocation7 + $0x7f8] sm:$0xff]
    %v1048 = vld [vmem:[#allocation7 + $0x800] sm:$0xff]
    %v1049 = vld [vmem:[#allocation7 + $0x808] sm:$0xff]
    %v1050 = vld [vmem:[#allocation7 + $0x810] sm:$0xff]
    %v1051 = vld [vmem:[#allocation7 + $0x818] sm:$0xff]
    %v1052 = vld [vmem:[#allocation7 + $0x820] sm:$0xff]
    %v1053 = vld [vmem:[#allocation7 + $0x828] sm:$0xff]
    %v1054 = vld [vmem:[#allocation7 + $0x830] sm:$0xff]
    %v1055 = vld [vmem:[#allocation7 + $0x838] sm:$0xff]
    %v1056 = vld [vmem:[#allocation7 + $0x840] sm:$0xff]
    %v1057 = vld [vmem:[#allocation7 + $0x848] sm:$0xff]
    %v1058 = vld [vmem:[#allocation7 + $0x850] sm:$0xff]
    %v1059 = vld [vmem:[#allocation7 + $0x858] sm:$0xff]
    %v1060 = vld [vmem:[#allocation7 + $0x860] sm:$0xff]
    %v1061 = vld [vmem:[#allocation7 + $0x868] sm:$0xff]
    %v1062 = vld [vmem:[#allocation7 + $0x870] sm:$0xff]
    %v1063 = vld [vmem:[#allocation7 + $0x878] sm:$0xff]
    %v1064 = vld [vmem:[#allocation7 + $0x880] sm:$0xff]
    %v1065 = vld [vmem:[#allocation7 + $0x888] sm:$0xff]
    %v1066 = vld [vmem:[#allocation7 + $0x890] sm:$0xff]
    %v1067 = vld [vmem:[#allocation7 + $0x898] sm:$0xff]
    %v1068 = vld [vmem:[#allocation7 + $0x8a0] sm:$0xff]
    %v1069 = vld [vmem:[#allocation7 + $0x8a8] sm:$0xff]
    %v1070 = vld [vmem:[#allocation7 + $0x8b0] sm:$0xff]
    %v1071 = vld [vmem:[#allocation7 + $0x8b8] sm:$0xff]
    %v1072 = vld [vmem:[#allocation7 + $0x8c0] sm:$0xff]
    %v1073 = vld [vmem:[#allocation7 + $0x8c8] sm:$0xff]
    %v1074 = vld [vmem:[#allocation7 + $0x8d0] sm:$0xff]
    %v1075 = vld [vmem:[#allocation7 + $0x8d8] sm:$0xff]
    %v1076 = vld [vmem:[#allocation7 + $0x8e0] sm:$0xff]
    %v1077 = vld [vmem:[#allocation7 + $0x8e8] sm:$0xff]
    %v1078 = vld [vmem:[#allocation7 + $0x8f0] sm:$0xff]
    %v1079 = vld [vmem:[#allocation7 + $0x8f8] sm:$0xff]
    %v1080 = vld [vmem:[#allocation7 + $0x900] sm:$0xff]
    %v1081 = vld [vmem:[#allocation7 + $0x908] sm:$0xff]
    %v1082 = vld [vmem:[#allocation7 + $0x910] sm:$0xff]
    %v1083 = vld [vmem:[#allocation7 + $0x918] sm:$0xff]
    %v1084 = vld [vmem:[#allocation7 + $0x920] sm:$0xff]
    %v1085 = vld [vmem:[#allocation7 + $0x928] sm:$0xff]
    %v1086 = vld [vmem:[#allocation7 + $0x930] sm:$0xff]
    %v1087 = vld [vmem:[#allocation7 + $0x938] sm:$0xff]
    %v1088 = vld [vmem:[#allocation7 + $0x940] sm:$0xff]
    %v1089 = vld [vmem:[#allocation7 + $0x948] sm:$0xff]
    %v1090 = vld [vmem:[#allocation7 + $0x950] sm:$0xff]
    %v1091 = vld [vmem:[#allocation7 + $0x958] sm:$0xff]
    %v1092 = vld [vmem:[#allocation7 + $0x960] sm:$0xff]
    %v1093 = vld [vmem:[#allocation7 + $0x968] sm:$0xff]
    %v1094 = vld [vmem:[#allocation7 + $0x970] sm:$0xff]
    %v1095 = vld [vmem:[#allocation7 + $0x978] sm:$0xff]
    %v1096 = vld [vmem:[#allocation7 + $0x980] sm:$0xff]
    %v1097 = vld [vmem:[#allocation7 + $0x988] sm:$0xff]
    %v1098 = vld [vmem:[#allocation7 + $0x990] sm:$0xff]
    %v1099 = vld [vmem:[#allocation7 + $0x998] sm:$0xff]
    %v1100 = vld [vmem:[#allocation7 + $0x9a0] sm:$0xff]
    %v1101 = vld [vmem:[#allocation7 + $0x9a8] sm:$0xff]
    %v1102 = vld [vmem:[#allocation7 + $0x9b0] sm:$0xff]
    %v1103 = vld [vmem:[#allocation7 + $0x9b8] sm:$0xff]
    %v1104 = vld [vmem:[#allocation7 + $0x9c0] sm:$0xff]
    %v1105 = vld [vmem:[#allocation7 + $0x9c8] sm:$0xff]
    %v1106 = vld [vmem:[#allocation7 + $0x9d0] sm:$0xff]
    %v1107 = vld [vmem:[#allocation7 + $0x9d8] sm:$0xff]
    %v1108 = vld [vmem:[#allocation7 + $0x9e0] sm:$0xff]
    %v1109 = vld [vmem:[#allocation7 + $0x9e8] sm:$0xff]
    %v1110 = vld [vmem:[#allocation7 + $0x9f0] sm:$0xff]
    %v1111 = vld [vmem:[#allocation7 + $0x9f8] sm:$0xff]
    %v1112 = vld [vmem:[#allocation7 + $0xa00] sm:$0xff]
    %v1113 = vld [vmem:[#allocation7 + $0xa08] sm:$0xff]
    %v1114 = vld [vmem:[#allocation7 + $0xa10] sm:$0xff]
    %v1115 = vld [vmem:[#allocation7 + $0xa18] sm:$0xff]
    %v1116 = vld [vmem:[#allocation7 + $0xa20] sm:$0xff]
    %v1117 = vld [vmem:[#allocation7 + $0xa28] sm:$0xff]
    %v1118 = vld [vmem:[#allocation7 + $0xa30] sm:$0xff]
    %v1119 = vld [vmem:[#allocation7 + $0xa38] sm:$0xff]
    %v1120 = vld [vmem:[#allocation7 + $0xa40] sm:$0xff]
    %v1121 = vld [vmem:[#allocation7 + $0xa48] sm:$0xff]
    %v1122 = vld [vmem:[#allocation7 + $0xa50] sm:$0xff]
    %v1123 = vld [vmem:[#allocation7 + $0xa58] sm:$0xff]
    %v1124 = vld [vmem:[#allocation7 + $0xa60] sm:$0xff]
    %v1125 = vld [vmem:[#allocation7 + $0xa68] sm:$0xff]
    %v1126 = vld [vmem:[#allocation7 + $0xa70] sm:$0xff]
    %v1127 = vld [vmem:[#allocation7 + $0xa78] sm:$0xff]
    %v1128 = vld [vmem:[#allocation7 + $0xa80] sm:$0xff]
    %v1129 = vld [vmem:[#allocation7 + $0xa88] sm:$0xff]
    %v1130 = vld [vmem:[#allocation7 + $0xa90] sm:$0xff]
    %v1131 = vld [vmem:[#allocation7 + $0xa98] sm:$0xff]
    %v1132 = vld [vmem:[#allocation7 + $0xaa0] sm:$0xff]
    %v1133 = vld [vmem:[#allocation7 + $0xaa8] sm:$0xff]
    %v1134 = vld [vmem:[#allocation7 + $0xab0] sm:$0xff]
    %v1135 = vld [vmem:[#allocation7 + $0xab8] sm:$0xff]
    %v1136 = vld [vmem:[#allocation7 + $0xac0] sm:$0xff]
    %v1137 = vld [vmem:[#allocation7 + $0xac8] sm:$0xff]
    %v1138 = vld [vmem:[#allocation7 + $0xad0] sm:$0xff]
    %v1139 = vld [vmem:[#allocation7 + $0xad8] sm:$0xff]
    %v1140 = vld [vmem:[#allocation7 + $0xae0] sm:$0xff]
    %v1141 = vld [vmem:[#allocation7 + $0xae8] sm:$0xff]
    %v1142 = vld [vmem:[#allocation7 + $0xaf0] sm:$0xff]
    %v1143 = vld [vmem:[#allocation7 + $0xaf8] sm:$0xff]
    %v1144 = vld [vmem:[#allocation7 + $0xb00] sm:$0xff]
    %v1145 = vld [vmem:[#allocation7 + $0xb08] sm:$0xff]
    %v1146 = vld [vmem:[#allocation7 + $0xb10] sm:$0xff]
    %v1147 = vld [vmem:[#allocation7 + $0xb18] sm:$0xff]
    %v1148 = vld [vmem:[#allocation7 + $0xb20] sm:$0xff]
    %v1149 = vld [vmem:[#allocation7 + $0xb28] sm:$0xff]
    %v1150 = vld [vmem:[#allocation7 + $0xb30] sm:$0xff]
    %v1151 = vld [vmem:[#allocation7 + $0xb38] sm:$0xff]
    %v1152 = vld [vmem:[#allocation7 + $0xb40] sm:$0xff]
    %v1153 = vld [vmem:[#allocation7 + $0xb48] sm:$0xff]
    %v1154 = vld [vmem:[#allocation7 + $0xb50] sm:$0xff]
    %v1155 = vld [vmem:[#allocation7 + $0xb58] sm:$0xff]
    %v1156 = vld [vmem:[#allocation7 + $0xb60] sm:$0xff]
    %v1157 = vld [vmem:[#allocation7 + $0xb68] sm:$0xff]
    %v1158 = vld [vmem:[#allocation7 + $0xb70] sm:$0xff]
    %v1159 = vld [vmem:[#allocation7 + $0xb78] sm:$0xff]
    %v1160 = vld [vmem:[#allocation7 + $0xb80] sm:$0xff]
    %v1161 = vld [vmem:[#allocation7 + $0xb88] sm:$0xff]
    %v1162 = vld [vmem:[#allocation7 + $0xb90] sm:$0xff]
    %v1163 = vld [vmem:[#allocation7 + $0xb98] sm:$0xff]
    %v1164 = vld [vmem:[#allocation7 + $0xba0] sm:$0xff]
    %v1165 = vld [vmem:[#allocation7 + $0xba8] sm:$0xff]
    %v1166 = vld [vmem:[#allocation7 + $0xbb0] sm:$0xff]
    %v1167 = vld [vmem:[#allocation7 + $0xbb8] sm:$0xff]
    %v1168 = vld [vmem:[#allocation7 + $0xbc0] sm:$0xff]
    %v1169 = vld [vmem:[#allocation7 + $0xbc8] sm:$0xff]
    %v1170 = vld [vmem:[#allocation7 + $0xbd0] sm:$0xff]
    %v1171 = vld [vmem:[#allocation7 + $0xbd8] sm:$0xff]
    %v1172 = vld [vmem:[#allocation7 + $0xbe0] sm:$0xff]
    %v1173 = vld [vmem:[#allocation7 + $0xbe8] sm:$0xff]
    %v1174 = vld [vmem:[#allocation7 + $0xbf0] sm:$0xff]
    %v1175 = vld [vmem:[#allocation7 + $0xbf8] sm:$0xff]
    %v1176 = vunpack.c.l.s8.bf16 %v792
    %v1177 = vunpack.c.h.s8.bf16 %v792
    %v1178 = vunpack.c.l.s8.bf16 %v793
    %v1179 = vunpack.c.h.s8.bf16 %v793
    %v1180 = vunpack.c.l.s8.bf16 %v794
    %v1181 = vunpack.c.h.s8.bf16 %v794
    %v1182 = vunpack.c.l.s8.bf16 %v795
    %v1183 = vunpack.c.h.s8.bf16 %v795
    %v1184 = vunpack.c.l.s8.bf16 %v796
    %v1185 = vunpack.c.h.s8.bf16 %v796
    %v1186 = vunpack.c.l.s8.bf16 %v797
    %v1187 = vunpack.c.h.s8.bf16 %v797
    %v1188 = vunpack.c.l.s8.bf16 %v798
    %v1189 = vunpack.c.h.s8.bf16 %v798
    %v1190 = vunpack.c.l.s8.bf16 %v799
    %v1191 = vunpack.c.h.s8.bf16 %v799
    %v1192 = vunpack.c.l.s8.bf16 %v800
    %v1193 = vunpack.c.h.s8.bf16 %v800
    %v1194 = vunpack.c.l.s8.bf16 %v801
    %v1195 = vunpack.c.h.s8.bf16 %v801
    %v1196 = vunpack.c.l.s8.bf16 %v802
    %v1197 = vunpack.c.h.s8.bf16 %v802
    %v1198 = vunpack.c.l.s8.bf16 %v803
    %v1199 = vunpack.c.h.s8.bf16 %v803
    %v1200 = vunpack.c.l.s8.bf16 %v804
    %v1201 = vunpack.c.h.s8.bf16 %v804
    %v1202 = vunpack.c.l.s8.bf16 %v805
    %v1203 = vunpack.c.h.s8.bf16 %v805
    %v1204 = vunpack.c.l.s8.bf16 %v806
    %v1205 = vunpack.c.h.s8.bf16 %v806
    %v1206 = vunpack.c.l.s8.bf16 %v807
    %v1207 = vunpack.c.h.s8.bf16 %v807
    %v1208 = vunpack.c.l.s8.bf16 %v808
    %v1209 = vunpack.c.h.s8.bf16 %v808
    %v1210 = vunpack.c.l.s8.bf16 %v809
    %v1211 = vunpack.c.h.s8.bf16 %v809
    %v1212 = vunpack.c.l.s8.bf16 %v810
    %v1213 = vunpack.c.h.s8.bf16 %v810
    %v1214 = vunpack.c.l.s8.bf16 %v811
    %v1215 = vunpack.c.h.s8.bf16 %v811
    %v1216 = vunpack.c.l.s8.bf16 %v812
    %v1217 = vunpack.c.h.s8.bf16 %v812
    %v1218 = vunpack.c.l.s8.bf16 %v813
    %v1219 = vunpack.c.h.s8.bf16 %v813
    %v1220 = vunpack.c.l.s8.bf16 %v814
    %v1221 = vunpack.c.h.s8.bf16 %v814
    %v1222 = vunpack.c.l.s8.bf16 %v815
    %v1223 = vunpack.c.h.s8.bf16 %v815
    %v1224 = vunpack.c.l.s8.bf16 %v816
    %v1225 = vunpack.c.h.s8.bf16 %v816
    %v1226 = vunpack.c.l.s8.bf16 %v817
    %v1227 = vunpack.c.h.s8.bf16 %v817
    %v1228 = vunpack.c.l.s8.bf16 %v818
    %v1229 = vunpack.c.h.s8.bf16 %v818
    %v1230 = vunpack.c.l.s8.bf16 %v819
    %v1231 = vunpack.c.h.s8.bf16 %v819
    %v1232 = vunpack.c.l.s8.bf16 %v820
    %v1233 = vunpack.c.h.s8.bf16 %v820
    %v1234 = vunpack.c.l.s8.bf16 %v821
    %v1235 = vunpack.c.h.s8.bf16 %v821
    %v1236 = vunpack.c.l.s8.bf16 %v822
    %v1237 = vunpack.c.h.s8.bf16 %v822
    %v1238 = vunpack.c.l.s8.bf16 %v823
    %v1239 = vunpack.c.h.s8.bf16 %v823
    %v1240 = vunpack.c.l.s8.bf16 %v824
    %v1241 = vunpack.c.h.s8.bf16 %v824
    %v1242 = vunpack.c.l.s8.bf16 %v825
    %v1243 = vunpack.c.h.s8.bf16 %v825
    %v1244 = vunpack.c.l.s8.bf16 %v826
    %v1245 = vunpack.c.h.s8.bf16 %v826
    %v1246 = vunpack.c.l.s8.bf16 %v827
    %v1247 = vunpack.c.h.s8.bf16 %v827
    %v1248 = vunpack.c.l.s8.bf16 %v828
    %v1249 = vunpack.c.h.s8.bf16 %v828
    %v1250 = vunpack.c.l.s8.bf16 %v829
    %v1251 = vunpack.c.h.s8.bf16 %v829
    %v1252 = vunpack.c.l.s8.bf16 %v830
    %v1253 = vunpack.c.h.s8.bf16 %v830
    %v1254 = vunpack.c.l.s8.bf16 %v831
    %v1255 = vunpack.c.h.s8.bf16 %v831
    %v1256 = vunpack.c.l.s8.bf16 %v832
    %v1257 = vunpack.c.h.s8.bf16 %v832
    %v1258 = vunpack.c.l.s8.bf16 %v833
    %v1259 = vunpack.c.h.s8.bf16 %v833
    %v1260 = vunpack.c.l.s8.bf16 %v834
    %v1261 = vunpack.c.h.s8.bf16 %v834
    %v1262 = vunpack.c.l.s8.bf16 %v835
    %v1263 = vunpack.c.h.s8.bf16 %v835
    %v1264 = vunpack.c.l.s8.bf16 %v836
    %v1265 = vunpack.c.h.s8.bf16 %v836
    %v1266 = vunpack.c.l.s8.bf16 %v837
    %v1267 = vunpack.c.h.s8.bf16 %v837
    %v1268 = vunpack.c.l.s8.bf16 %v838
    %v1269 = vunpack.c.h.s8.bf16 %v838
    %v1270 = vunpack.c.l.s8.bf16 %v839
    %v1271 = vunpack.c.h.s8.bf16 %v839
    %v1272 = vunpack.c.l.s8.bf16 %v840
    %v1273 = vunpack.c.h.s8.bf16 %v840
    %v1274 = vunpack.c.l.s8.bf16 %v841
    %v1275 = vunpack.c.h.s8.bf16 %v841
    %v1276 = vunpack.c.l.s8.bf16 %v842
    %v1277 = vunpack.c.h.s8.bf16 %v842
    %v1278 = vunpack.c.l.s8.bf16 %v843
    %v1279 = vunpack.c.h.s8.bf16 %v843
    %v1280 = vunpack.c.l.s8.bf16 %v844
    %v1281 = vunpack.c.h.s8.bf16 %v844
    %v1282 = vunpack.c.l.s8.bf16 %v845
    %v1283 = vunpack.c.h.s8.bf16 %v845
    %v1284 = vunpack.c.l.s8.bf16 %v846
    %v1285 = vunpack.c.h.s8.bf16 %v846
    %v1286 = vunpack.c.l.s8.bf16 %v847
    %v1287 = vunpack.c.h.s8.bf16 %v847
    %v1288 = vunpack.c.l.s8.bf16 %v848
    %v1289 = vunpack.c.h.s8.bf16 %v848
    %v1290 = vunpack.c.l.s8.bf16 %v849
    %v1291 = vunpack.c.h.s8.bf16 %v849
    %v1292 = vunpack.c.l.s8.bf16 %v850
    %v1293 = vunpack.c.h.s8.bf16 %v850
    %v1294 = vunpack.c.l.s8.bf16 %v851
    %v1295 = vunpack.c.h.s8.bf16 %v851
    %v1296 = vunpack.c.l.s8.bf16 %v852
    %v1297 = vunpack.c.h.s8.bf16 %v852
    %v1298 = vunpack.c.l.s8.bf16 %v853
    %v1299 = vunpack.c.h.s8.bf16 %v853
    %v1300 = vunpack.c.l.s8.bf16 %v854
    %v1301 = vunpack.c.h.s8.bf16 %v854
    %v1302 = vunpack.c.l.s8.bf16 %v855
    %v1303 = vunpack.c.h.s8.bf16 %v855
    %v1304 = vunpack.c.l.s8.bf16 %v856
    %v1305 = vunpack.c.h.s8.bf16 %v856
    %v1306 = vunpack.c.l.s8.bf16 %v857
    %v1307 = vunpack.c.h.s8.bf16 %v857
    %v1308 = vunpack.c.l.s8.bf16 %v858
    %v1309 = vunpack.c.h.s8.bf16 %v858
    %v1310 = vunpack.c.l.s8.bf16 %v859
    %v1311 = vunpack.c.h.s8.bf16 %v859
    %v1312 = vunpack.c.l.s8.bf16 %v860
    %v1313 = vunpack.c.h.s8.bf16 %v860
    %v1314 = vunpack.c.l.s8.bf16 %v861
    %v1315 = vunpack.c.h.s8.bf16 %v861
    %v1316 = vunpack.c.l.s8.bf16 %v862
    %v1317 = vunpack.c.h.s8.bf16 %v862
    %v1318 = vunpack.c.l.s8.bf16 %v863
    %v1319 = vunpack.c.h.s8.bf16 %v863
    %v1320 = vunpack.c.l.s8.bf16 %v864
    %v1321 = vunpack.c.h.s8.bf16 %v864
    %v1322 = vunpack.c.l.s8.bf16 %v865
    %v1323 = vunpack.c.h.s8.bf16 %v865
    %v1324 = vunpack.c.l.s8.bf16 %v866
    %v1325 = vunpack.c.h.s8.bf16 %v866
    %v1326 = vunpack.c.l.s8.bf16 %v867
    %v1327 = vunpack.c.h.s8.bf16 %v867
    %v1328 = vunpack.c.l.s8.bf16 %v868
    %v1329 = vunpack.c.h.s8.bf16 %v868
    %v1330 = vunpack.c.l.s8.bf16 %v869
    %v1331 = vunpack.c.h.s8.bf16 %v869
    %v1332 = vunpack.c.l.s8.bf16 %v870
    %v1333 = vunpack.c.h.s8.bf16 %v870
    %v1334 = vunpack.c.l.s8.bf16 %v871
    %v1335 = vunpack.c.h.s8.bf16 %v871
    %v1336 = vunpack.c.l.s8.bf16 %v872
    %v1337 = vunpack.c.h.s8.bf16 %v872
    %v1338 = vunpack.c.l.s8.bf16 %v873
    %v1339 = vunpack.c.h.s8.bf16 %v873
    %v1340 = vunpack.c.l.s8.bf16 %v874
    %v1341 = vunpack.c.h.s8.bf16 %v874
    %v1342 = vunpack.c.l.s8.bf16 %v875
    %v1343 = vunpack.c.h.s8.bf16 %v875
    %v1344 = vunpack.c.l.s8.bf16 %v876
    %v1345 = vunpack.c.h.s8.bf16 %v876
    %v1346 = vunpack.c.l.s8.bf16 %v877
    %v1347 = vunpack.c.h.s8.bf16 %v877
    %v1348 = vunpack.c.l.s8.bf16 %v878
    %v1349 = vunpack.c.h.s8.bf16 %v878
    %v1350 = vunpack.c.l.s8.bf16 %v879
    %v1351 = vunpack.c.h.s8.bf16 %v879
    %v1352 = vunpack.c.l.s8.bf16 %v880
    %v1353 = vunpack.c.h.s8.bf16 %v880
    %v1354 = vunpack.c.l.s8.bf16 %v881
    %v1355 = vunpack.c.h.s8.bf16 %v881
    %v1356 = vunpack.c.l.s8.bf16 %v882
    %v1357 = vunpack.c.h.s8.bf16 %v882
    %v1358 = vunpack.c.l.s8.bf16 %v883
    %v1359 = vunpack.c.h.s8.bf16 %v883
    %v1360 = vunpack.c.l.s8.bf16 %v884
    %v1361 = vunpack.c.h.s8.bf16 %v884
    %v1362 = vunpack.c.l.s8.bf16 %v885
    %v1363 = vunpack.c.h.s8.bf16 %v885
    %v1364 = vunpack.c.l.s8.bf16 %v886
    %v1365 = vunpack.c.h.s8.bf16 %v886
    %v1366 = vunpack.c.l.s8.bf16 %v887
    %v1367 = vunpack.c.h.s8.bf16 %v887
    %v1368 = vunpack.c.l.s8.bf16 %v888
    %v1369 = vunpack.c.h.s8.bf16 %v888
    %v1370 = vunpack.c.l.s8.bf16 %v889
    %v1371 = vunpack.c.h.s8.bf16 %v889
    %v1372 = vunpack.c.l.s8.bf16 %v890
    %v1373 = vunpack.c.h.s8.bf16 %v890
    %v1374 = vunpack.c.l.s8.bf16 %v891
    %v1375 = vunpack.c.h.s8.bf16 %v891
    %v1376 = vunpack.c.l.s8.bf16 %v892
    %v1377 = vunpack.c.h.s8.bf16 %v892
    %v1378 = vunpack.c.l.s8.bf16 %v893
    %v1379 = vunpack.c.h.s8.bf16 %v893
    %v1380 = vunpack.c.l.s8.bf16 %v894
    %v1381 = vunpack.c.h.s8.bf16 %v894
    %v1382 = vunpack.c.l.s8.bf16 %v895
    %v1383 = vunpack.c.h.s8.bf16 %v895
    %v1384 = vunpack.c.l.s8.bf16 %v896
    %v1385 = vunpack.c.h.s8.bf16 %v896
    %v1386 = vunpack.c.l.s8.bf16 %v897
    %v1387 = vunpack.c.h.s8.bf16 %v897
    %v1388 = vunpack.c.l.s8.bf16 %v898
    %v1389 = vunpack.c.h.s8.bf16 %v898
    %v1390 = vunpack.c.l.s8.bf16 %v899
    %v1391 = vunpack.c.h.s8.bf16 %v899
    %v1392 = vunpack.c.l.s8.bf16 %v900
    %v1393 = vunpack.c.h.s8.bf16 %v900
    %v1394 = vunpack.c.l.s8.bf16 %v901
    %v1395 = vunpack.c.h.s8.bf16 %v901
    %v1396 = vunpack.c.l.s8.bf16 %v902
    %v1397 = vunpack.c.h.s8.bf16 %v902
    %v1398 = vunpack.c.l.s8.bf16 %v903
    %v1399 = vunpack.c.h.s8.bf16 %v903
    %v1400 = vunpack.c.l.s8.bf16 %v904
    %v1401 = vunpack.c.h.s8.bf16 %v904
    %v1402 = vunpack.c.l.s8.bf16 %v905
    %v1403 = vunpack.c.h.s8.bf16 %v905
    %v1404 = vunpack.c.l.s8.bf16 %v906
    %v1405 = vunpack.c.h.s8.bf16 %v906
    %v1406 = vunpack.c.l.s8.bf16 %v907
    %v1407 = vunpack.c.h.s8.bf16 %v907
    %v1408 = vunpack.c.l.s8.bf16 %v908
    %v1409 = vunpack.c.h.s8.bf16 %v908
    %v1410 = vunpack.c.l.s8.bf16 %v909
    %v1411 = vunpack.c.h.s8.bf16 %v909
    %v1412 = vunpack.c.l.s8.bf16 %v910
    %v1413 = vunpack.c.h.s8.bf16 %v910
    %v1414 = vunpack.c.l.s8.bf16 %v911
    %v1415 = vunpack.c.h.s8.bf16 %v911
    %v1416 = vunpack.c.l.s8.bf16 %v912
    %v1417 = vunpack.c.h.s8.bf16 %v912
    %v1418 = vunpack.c.l.s8.bf16 %v913
    %v1419 = vunpack.c.h.s8.bf16 %v913
    %v1420 = vunpack.c.l.s8.bf16 %v914
    %v1421 = vunpack.c.h.s8.bf16 %v914
    %v1422 = vunpack.c.l.s8.bf16 %v915
    %v1423 = vunpack.c.h.s8.bf16 %v915
    %v1424 = vunpack.c.l.s8.bf16 %v916
    %v1425 = vunpack.c.h.s8.bf16 %v916
    %v1426 = vunpack.c.l.s8.bf16 %v917
    %v1427 = vunpack.c.h.s8.bf16 %v917
    %v1428 = vunpack.c.l.s8.bf16 %v918
    %v1429 = vunpack.c.h.s8.bf16 %v918
    %v1430 = vunpack.c.l.s8.bf16 %v919
    %v1431 = vunpack.c.h.s8.bf16 %v919
    %v1432 = vunpack.c.l.s8.bf16 %v920
    %v1433 = vunpack.c.h.s8.bf16 %v920
    %v1434 = vunpack.c.l.s8.bf16 %v921
    %v1435 = vunpack.c.h.s8.bf16 %v921
    %v1436 = vunpack.c.l.s8.bf16 %v922
    %v1437 = vunpack.c.h.s8.bf16 %v922
    %v1438 = vunpack.c.l.s8.bf16 %v923
    %v1439 = vunpack.c.h.s8.bf16 %v923
    %v1440 = vunpack.c.l.s8.bf16 %v924
    %v1441 = vunpack.c.h.s8.bf16 %v924
    %v1442 = vunpack.c.l.s8.bf16 %v925
    %v1443 = vunpack.c.h.s8.bf16 %v925
    %v1444 = vunpack.c.l.s8.bf16 %v926
    %v1445 = vunpack.c.h.s8.bf16 %v926
    %v1446 = vunpack.c.l.s8.bf16 %v927
    %v1447 = vunpack.c.h.s8.bf16 %v927
    %v1448 = vunpack.c.l.s8.bf16 %v928
    %v1449 = vunpack.c.h.s8.bf16 %v928
    %v1450 = vunpack.c.l.s8.bf16 %v929
    %v1451 = vunpack.c.h.s8.bf16 %v929
    %v1452 = vunpack.c.l.s8.bf16 %v930
    %v1453 = vunpack.c.h.s8.bf16 %v930
    %v1454 = vunpack.c.l.s8.bf16 %v931
    %v1455 = vunpack.c.h.s8.bf16 %v931
    %v1456 = vunpack.c.l.s8.bf16 %v932
    %v1457 = vunpack.c.h.s8.bf16 %v932
    %v1458 = vunpack.c.l.s8.bf16 %v933
    %v1459 = vunpack.c.h.s8.bf16 %v933
    %v1460 = vunpack.c.l.s8.bf16 %v934
    %v1461 = vunpack.c.h.s8.bf16 %v934
    %v1462 = vunpack.c.l.s8.bf16 %v935
    %v1463 = vunpack.c.h.s8.bf16 %v935
    %v1464 = vunpack.c.l.s8.bf16 %v936
    %v1465 = vunpack.c.h.s8.bf16 %v936
    %v1466 = vunpack.c.l.s8.bf16 %v937
    %v1467 = vunpack.c.h.s8.bf16 %v937
    %v1468 = vunpack.c.l.s8.bf16 %v938
    %v1469 = vunpack.c.h.s8.bf16 %v938
    %v1470 = vunpack.c.l.s8.bf16 %v939
    %v1471 = vunpack.c.h.s8.bf16 %v939
    %v1472 = vunpack.c.l.s8.bf16 %v940
    %v1473 = vunpack.c.h.s8.bf16 %v940
    %v1474 = vunpack.c.l.s8.bf16 %v941
    %v1475 = vunpack.c.h.s8.bf16 %v941
    %v1476 = vunpack.c.l.s8.bf16 %v942
    %v1477 = vunpack.c.h.s8.bf16 %v942
    %v1478 = vunpack.c.l.s8.bf16 %v943
    %v1479 = vunpack.c.h.s8.bf16 %v943
    %v1480 = vunpack.c.l.s8.bf16 %v944
    %v1481 = vunpack.c.h.s8.bf16 %v944
    %v1482 = vunpack.c.l.s8.bf16 %v945
    %v1483 = vunpack.c.h.s8.bf16 %v945
    %v1484 = vunpack.c.l.s8.bf16 %v946
    %v1485 = vunpack.c.h.s8.bf16 %v946
    %v1486 = vunpack.c.l.s8.bf16 %v947
    %v1487 = vunpack.c.h.s8.bf16 %v947
    %v1488 = vunpack.c.l.s8.bf16 %v948
    %v1489 = vunpack.c.h.s8.bf16 %v948
    %v1490 = vunpack.c.l.s8.bf16 %v949
    %v1491 = vunpack.c.h.s8.bf16 %v949
    %v1492 = vunpack.c.l.s8.bf16 %v950
    %v1493 = vunpack.c.h.s8.bf16 %v950
    %v1494 = vunpack.c.l.s8.bf16 %v951
    %v1495 = vunpack.c.h.s8.bf16 %v951
    %v1496 = vunpack.c.l.s8.bf16 %v952
    %v1497 = vunpack.c.h.s8.bf16 %v952
    %v1498 = vunpack.c.l.s8.bf16 %v953
    %v1499 = vunpack.c.h.s8.bf16 %v953
    %v1500 = vunpack.c.l.s8.bf16 %v954
    %v1501 = vunpack.c.h.s8.bf16 %v954
    %v1502 = vunpack.c.l.s8.bf16 %v955
    %v1503 = vunpack.c.h.s8.bf16 %v955
    %v1504 = vunpack.c.l.s8.bf16 %v956
    %v1505 = vunpack.c.h.s8.bf16 %v956
    %v1506 = vunpack.c.l.s8.bf16 %v957
    %v1507 = vunpack.c.h.s8.bf16 %v957
    %v1508 = vunpack.c.l.s8.bf16 %v958
    %v1509 = vunpack.c.h.s8.bf16 %v958
    %v1510 = vunpack.c.l.s8.bf16 %v959
    %v1511 = vunpack.c.h.s8.bf16 %v959
    %v1512 = vunpack.c.l.s8.bf16 %v960
    %v1513 = vunpack.c.h.s8.bf16 %v960
    %v1514 = vunpack.c.l.s8.bf16 %v961
    %v1515 = vunpack.c.h.s8.bf16 %v961
    %v1516 = vunpack.c.l.s8.bf16 %v962
    %v1517 = vunpack.c.h.s8.bf16 %v962
    %v1518 = vunpack.c.l.s8.bf16 %v963
    %v1519 = vunpack.c.h.s8.bf16 %v963
    %v1520 = vunpack.c.l.s8.bf16 %v964
    %v1521 = vunpack.c.h.s8.bf16 %v964
    %v1522 = vunpack.c.l.s8.bf16 %v965
    %v1523 = vunpack.c.h.s8.bf16 %v965
    %v1524 = vunpack.c.l.s8.bf16 %v966
    %v1525 = vunpack.c.h.s8.bf16 %v966
    %v1526 = vunpack.c.l.s8.bf16 %v967
    %v1527 = vunpack.c.h.s8.bf16 %v967
    %v1528 = vunpack.c.l.s8.bf16 %v968
    %v1529 = vunpack.c.h.s8.bf16 %v968
    %v1530 = vunpack.c.l.s8.bf16 %v969
    %v1531 = vunpack.c.h.s8.bf16 %v969
    %v1532 = vunpack.c.l.s8.bf16 %v970
    %v1533 = vunpack.c.h.s8.bf16 %v970
    %v1534 = vunpack.c.l.s8.bf16 %v971
    %v1535 = vunpack.c.h.s8.bf16 %v971
    %v1536 = vunpack.c.l.s8.bf16 %v972
    %v1537 = vunpack.c.h.s8.bf16 %v972
    %v1538 = vunpack.c.l.s8.bf16 %v973
    %v1539 = vunpack.c.h.s8.bf16 %v973
    %v1540 = vunpack.c.l.s8.bf16 %v974
    %v1541 = vunpack.c.h.s8.bf16 %v974
    %v1542 = vunpack.c.l.s8.bf16 %v975
    %v1543 = vunpack.c.h.s8.bf16 %v975
    %v1544 = vunpack.c.l.s8.bf16 %v976
    %v1545 = vunpack.c.h.s8.bf16 %v976
    %v1546 = vunpack.c.l.s8.bf16 %v977
    %v1547 = vunpack.c.h.s8.bf16 %v977
    %v1548 = vunpack.c.l.s8.bf16 %v978
    %v1549 = vunpack.c.h.s8.bf16 %v978
    %v1550 = vunpack.c.l.s8.bf16 %v979
    %v1551 = vunpack.c.h.s8.bf16 %v979
    %v1552 = vunpack.c.l.s8.bf16 %v980
    %v1553 = vunpack.c.h.s8.bf16 %v980
    %v1554 = vunpack.c.l.s8.bf16 %v981
    %v1555 = vunpack.c.h.s8.bf16 %v981
    %v1556 = vunpack.c.l.s8.bf16 %v982
    %v1557 = vunpack.c.h.s8.bf16 %v982
    %v1558 = vunpack.c.l.s8.bf16 %v983
    %v1559 = vunpack.c.h.s8.bf16 %v983
    %v1560 = vunpack.c.l.s8.bf16 %v984
    %v1561 = vunpack.c.h.s8.bf16 %v984
    %v1562 = vunpack.c.l.s8.bf16 %v985
    %v1563 = vunpack.c.h.s8.bf16 %v985
    %v1564 = vunpack.c.l.s8.bf16 %v986
    %v1565 = vunpack.c.h.s8.bf16 %v986
    %v1566 = vunpack.c.l.s8.bf16 %v987
    %v1567 = vunpack.c.h.s8.bf16 %v987
    %v1568 = vunpack.c.l.s8.bf16 %v988
    %v1569 = vunpack.c.h.s8.bf16 %v988
    %v1570 = vunpack.c.l.s8.bf16 %v989
    %v1571 = vunpack.c.h.s8.bf16 %v989
    %v1572 = vunpack.c.l.s8.bf16 %v990
    %v1573 = vunpack.c.h.s8.bf16 %v990
    %v1574 = vunpack.c.l.s8.bf16 %v991
    %v1575 = vunpack.c.h.s8.bf16 %v991
    %v1576 = vunpack.c.l.s8.bf16 %v992
    %v1577 = vunpack.c.h.s8.bf16 %v992
    %v1578 = vunpack.c.l.s8.bf16 %v993
    %v1579 = vunpack.c.h.s8.bf16 %v993
    %v1580 = vunpack.c.l.s8.bf16 %v994
    %v1581 = vunpack.c.h.s8.bf16 %v994
    %v1582 = vunpack.c.l.s8.bf16 %v995
    %v1583 = vunpack.c.h.s8.bf16 %v995
    %v1584 = vunpack.c.l.s8.bf16 %v996
    %v1585 = vunpack.c.h.s8.bf16 %v996
    %v1586 = vunpack.c.l.s8.bf16 %v997
    %v1587 = vunpack.c.h.s8.bf16 %v997
    %v1588 = vunpack.c.l.s8.bf16 %v998
    %v1589 = vunpack.c.h.s8.bf16 %v998
    %v1590 = vunpack.c.l.s8.bf16 %v999
    %v1591 = vunpack.c.h.s8.bf16 %v999
    %v1592 = vunpack.c.l.s8.bf16 %v1000
    %v1593 = vunpack.c.h.s8.bf16 %v1000
    %v1594 = vunpack.c.l.s8.bf16 %v1001
    %v1595 = vunpack.c.h.s8.bf16 %v1001
    %v1596 = vunpack.c.l.s8.bf16 %v1002
    %v1597 = vunpack.c.h.s8.bf16 %v1002
    %v1598 = vunpack.c.l.s8.bf16 %v1003
    %v1599 = vunpack.c.h.s8.bf16 %v1003
    %v1600 = vunpack.c.l.s8.bf16 %v1004
    %v1601 = vunpack.c.h.s8.bf16 %v1004
    %v1602 = vunpack.c.l.s8.bf16 %v1005
    %v1603 = vunpack.c.h.s8.bf16 %v1005
    %v1604 = vunpack.c.l.s8.bf16 %v1006
    %v1605 = vunpack.c.h.s8.bf16 %v1006
    %v1606 = vunpack.c.l.s8.bf16 %v1007
    %v1607 = vunpack.c.h.s8.bf16 %v1007
    %v1608 = vunpack.c.l.s8.bf16 %v1008
    %v1609 = vunpack.c.h.s8.bf16 %v1008
    %v1610 = vunpack.c.l.s8.bf16 %v1009
    %v1611 = vunpack.c.h.s8.bf16 %v1009
    %v1612 = vunpack.c.l.s8.bf16 %v1010
    %v1613 = vunpack.c.h.s8.bf16 %v1010
    %v1614 = vunpack.c.l.s8.bf16 %v1011
    %v1615 = vunpack.c.h.s8.bf16 %v1011
    %v1616 = vunpack.c.l.s8.bf16 %v1012
    %v1617 = vunpack.c.h.s8.bf16 %v1012
    %v1618 = vunpack.c.l.s8.bf16 %v1013
    %v1619 = vunpack.c.h.s8.bf16 %v1013
    %v1620 = vunpack.c.l.s8.bf16 %v1014
    %v1621 = vunpack.c.h.s8.bf16 %v1014
    %v1622 = vunpack.c.l.s8.bf16 %v1015
    %v1623 = vunpack.c.h.s8.bf16 %v1015
    %v1624 = vunpack.c.l.s8.bf16 %v1016
    %v1625 = vunpack.c.h.s8.bf16 %v1016
    %v1626 = vunpack.c.l.s8.bf16 %v1017
    %v1627 = vunpack.c.h.s8.bf16 %v1017
    %v1628 = vunpack.c.l.s8.bf16 %v1018
    %v1629 = vunpack.c.h.s8.bf16 %v1018
    %v1630 = vunpack.c.l.s8.bf16 %v1019
    %v1631 = vunpack.c.h.s8.bf16 %v1019
    %v1632 = vunpack.c.l.s8.bf16 %v1020
    %v1633 = vunpack.c.h.s8.bf16 %v1020
    %v1634 = vunpack.c.l.s8.bf16 %v1021
    %v1635 = vunpack.c.h.s8.bf16 %v1021
    %v1636 = vunpack.c.l.s8.bf16 %v1022
    %v1637 = vunpack.c.h.s8.bf16 %v1022
    %v1638 = vunpack.c.l.s8.bf16 %v1023
    %v1639 = vunpack.c.h.s8.bf16 %v1023
    %v1640 = vunpack.c.l.s8.bf16 %v1024
    %v1641 = vunpack.c.h.s8.bf16 %v1024
    %v1642 = vunpack.c.l.s8.bf16 %v1025
    %v1643 = vunpack.c.h.s8.bf16 %v1025
    %v1644 = vunpack.c.l.s8.bf16 %v1026
    %v1645 = vunpack.c.h.s8.bf16 %v1026
    %v1646 = vunpack.c.l.s8.bf16 %v1027
    %v1647 = vunpack.c.h.s8.bf16 %v1027
    %v1648 = vunpack.c.l.s8.bf16 %v1028
    %v1649 = vunpack.c.h.s8.bf16 %v1028
    %v1650 = vunpack.c.l.s8.bf16 %v1029
    %v1651 = vunpack.c.h.s8.bf16 %v1029
    %v1652 = vunpack.c.l.s8.bf16 %v1030
    %v1653 = vunpack.c.h.s8.bf16 %v1030
    %v1654 = vunpack.c.l.s8.bf16 %v1031
    %v1655 = vunpack.c.h.s8.bf16 %v1031
    %v1656 = vunpack.c.l.s8.bf16 %v1032
    %v1657 = vunpack.c.h.s8.bf16 %v1032
    %v1658 = vunpack.c.l.s8.bf16 %v1033
    %v1659 = vunpack.c.h.s8.bf16 %v1033
    %v1660 = vunpack.c.l.s8.bf16 %v1034
    %v1661 = vunpack.c.h.s8.bf16 %v1034
    %v1662 = vunpack.c.l.s8.bf16 %v1035
    %v1663 = vunpack.c.h.s8.bf16 %v1035
    %v1664 = vunpack.c.l.s8.bf16 %v1036
    %v1665 = vunpack.c.h.s8.bf16 %v1036
    %v1666 = vunpack.c.l.s8.bf16 %v1037
    %v1667 = vunpack.c.h.s8.bf16 %v1037
    %v1668 = vunpack.c.l.s8.bf16 %v1038
    %v1669 = vunpack.c.h.s8.bf16 %v1038
    %v1670 = vunpack.c.l.s8.bf16 %v1039
    %v1671 = vunpack.c.h.s8.bf16 %v1039
    %v1672 = vunpack.c.l.s8.bf16 %v1040
    %v1673 = vunpack.c.h.s8.bf16 %v1040
    %v1674 = vunpack.c.l.s8.bf16 %v1041
    %v1675 = vunpack.c.h.s8.bf16 %v1041
    %v1676 = vunpack.c.l.s8.bf16 %v1042
    %v1677 = vunpack.c.h.s8.bf16 %v1042
    %v1678 = vunpack.c.l.s8.bf16 %v1043
    %v1679 = vunpack.c.h.s8.bf16 %v1043
    %v1680 = vunpack.c.l.s8.bf16 %v1044
    %v1681 = vunpack.c.h.s8.bf16 %v1044
    %v1682 = vunpack.c.l.s8.bf16 %v1045
    %v1683 = vunpack.c.h.s8.bf16 %v1045
    %v1684 = vunpack.c.l.s8.bf16 %v1046
    %v1685 = vunpack.c.h.s8.bf16 %v1046
    %v1686 = vunpack.c.l.s8.bf16 %v1047
    %v1687 = vunpack.c.h.s8.bf16 %v1047
    %v1688 = vunpack.c.l.s8.bf16 %v1048
    %v1689 = vunpack.c.h.s8.bf16 %v1048
    %v1690 = vunpack.c.l.s8.bf16 %v1049
    %v1691 = vunpack.c.h.s8.bf16 %v1049
    %v1692 = vunpack.c.l.s8.bf16 %v1050
    %v1693 = vunpack.c.h.s8.bf16 %v1050
    %v1694 = vunpack.c.l.s8.bf16 %v1051
    %v1695 = vunpack.c.h.s8.bf16 %v1051
    %v1696 = vunpack.c.l.s8.bf16 %v1052
    %v1697 = vunpack.c.h.s8.bf16 %v1052
    %v1698 = vunpack.c.l.s8.bf16 %v1053
    %v1699 = vunpack.c.h.s8.bf16 %v1053
    %v1700 = vunpack.c.l.s8.bf16 %v1054
    %v1701 = vunpack.c.h.s8.bf16 %v1054
    %v1702 = vunpack.c.l.s8.bf16 %v1055
    %v1703 = vunpack.c.h.s8.bf16 %v1055
    %v1704 = vunpack.c.l.s8.bf16 %v1056
    %v1705 = vunpack.c.h.s8.bf16 %v1056
    %v1706 = vunpack.c.l.s8.bf16 %v1057
    %v1707 = vunpack.c.h.s8.bf16 %v1057
    %v1708 = vunpack.c.l.s8.bf16 %v1058
    %v1709 = vunpack.c.h.s8.bf16 %v1058
    %v1710 = vunpack.c.l.s8.bf16 %v1059
    %v1711 = vunpack.c.h.s8.bf16 %v1059
    %v1712 = vunpack.c.l.s8.bf16 %v1060
    %v1713 = vunpack.c.h.s8.bf16 %v1060
    %v1714 = vunpack.c.l.s8.bf16 %v1061
    %v1715 = vunpack.c.h.s8.bf16 %v1061
    %v1716 = vunpack.c.l.s8.bf16 %v1062
    %v1717 = vunpack.c.h.s8.bf16 %v1062
    %v1718 = vunpack.c.l.s8.bf16 %v1063
    %v1719 = vunpack.c.h.s8.bf16 %v1063
    %v1720 = vunpack.c.l.s8.bf16 %v1064
    %v1721 = vunpack.c.h.s8.bf16 %v1064
    %v1722 = vunpack.c.l.s8.bf16 %v1065
    %v1723 = vunpack.c.h.s8.bf16 %v1065
    %v1724 = vunpack.c.l.s8.bf16 %v1066
    %v1725 = vunpack.c.h.s8.bf16 %v1066
    %v1726 = vunpack.c.l.s8.bf16 %v1067
    %v1727 = vunpack.c.h.s8.bf16 %v1067
    %v1728 = vunpack.c.l.s8.bf16 %v1068
    %v1729 = vunpack.c.h.s8.bf16 %v1068
    %v1730 = vunpack.c.l.s8.bf16 %v1069
    %v1731 = vunpack.c.h.s8.bf16 %v1069
    %v1732 = vunpack.c.l.s8.bf16 %v1070
    %v1733 = vunpack.c.h.s8.bf16 %v1070
    %v1734 = vunpack.c.l.s8.bf16 %v1071
    %v1735 = vunpack.c.h.s8.bf16 %v1071
    %v1736 = vunpack.c.l.s8.bf16 %v1072
    %v1737 = vunpack.c.h.s8.bf16 %v1072
    %v1738 = vunpack.c.l.s8.bf16 %v1073
    %v1739 = vunpack.c.h.s8.bf16 %v1073
    %v1740 = vunpack.c.l.s8.bf16 %v1074
    %v1741 = vunpack.c.h.s8.bf16 %v1074
    %v1742 = vunpack.c.l.s8.bf16 %v1075
    %v1743 = vunpack.c.h.s8.bf16 %v1075
    %v1744 = vunpack.c.l.s8.bf16 %v1076
    %v1745 = vunpack.c.h.s8.bf16 %v1076
    %v1746 = vunpack.c.l.s8.bf16 %v1077
    %v1747 = vunpack.c.h.s8.bf16 %v1077
    %v1748 = vunpack.c.l.s8.bf16 %v1078
    %v1749 = vunpack.c.h.s8.bf16 %v1078
    %v1750 = vunpack.c.l.s8.bf16 %v1079
    %v1751 = vunpack.c.h.s8.bf16 %v1079
    %v1752 = vunpack.c.l.s8.bf16 %v1080
    %v1753 = vunpack.c.h.s8.bf16 %v1080
    %v1754 = vunpack.c.l.s8.bf16 %v1081
    %v1755 = vunpack.c.h.s8.bf16 %v1081
    %v1756 = vunpack.c.l.s8.bf16 %v1082
    %v1757 = vunpack.c.h.s8.bf16 %v1082
    %v1758 = vunpack.c.l.s8.bf16 %v1083
    %v1759 = vunpack.c.h.s8.bf16 %v1083
    %v1760 = vunpack.c.l.s8.bf16 %v1084
    %v1761 = vunpack.c.h.s8.bf16 %v1084
    %v1762 = vunpack.c.l.s8.bf16 %v1085
    %v1763 = vunpack.c.h.s8.bf16 %v1085
    %v1764 = vunpack.c.l.s8.bf16 %v1086
    %v1765 = vunpack.c.h.s8.bf16 %v1086
    %v1766 = vunpack.c.l.s8.bf16 %v1087
    %v1767 = vunpack.c.h.s8.bf16 %v1087
    %v1768 = vunpack.c.l.s8.bf16 %v1088
    %v1769 = vunpack.c.h.s8.bf16 %v1088
    %v1770 = vunpack.c.l.s8.bf16 %v1089
    %v1771 = vunpack.c.h.s8.bf16 %v1089
    %v1772 = vunpack.c.l.s8.bf16 %v1090
    %v1773 = vunpack.c.h.s8.bf16 %v1090
    %v1774 = vunpack.c.l.s8.bf16 %v1091
    %v1775 = vunpack.c.h.s8.bf16 %v1091
    %v1776 = vunpack.c.l.s8.bf16 %v1092
    %v1777 = vunpack.c.h.s8.bf16 %v1092
    %v1778 = vunpack.c.l.s8.bf16 %v1093
    %v1779 = vunpack.c.h.s8.bf16 %v1093
    %v1780 = vunpack.c.l.s8.bf16 %v1094
    %v1781 = vunpack.c.h.s8.bf16 %v1094
    %v1782 = vunpack.c.l.s8.bf16 %v1095
    %v1783 = vunpack.c.h.s8.bf16 %v1095
    %v1784 = vunpack.c.l.s8.bf16 %v1096
    %v1785 = vunpack.c.h.s8.bf16 %v1096
    %v1786 = vunpack.c.l.s8.bf16 %v1097
    %v1787 = vunpack.c.h.s8.bf16 %v1097
    %v1788 = vunpack.c.l.s8.bf16 %v1098
    %v1789 = vunpack.c.h.s8.bf16 %v1098
    %v1790 = vunpack.c.l.s8.bf16 %v1099
    %v1791 = vunpack.c.h.s8.bf16 %v1099
    %v1792 = vunpack.c.l.s8.bf16 %v1100
    %v1793 = vunpack.c.h.s8.bf16 %v1100
    %v1794 = vunpack.c.l.s8.bf16 %v1101
    %v1795 = vunpack.c.h.s8.bf16 %v1101
    %v1796 = vunpack.c.l.s8.bf16 %v1102
    %v1797 = vunpack.c.h.s8.bf16 %v1102
    %v1798 = vunpack.c.l.s8.bf16 %v1103
    %v1799 = vunpack.c.h.s8.bf16 %v1103
    %v1800 = vunpack.c.l.s8.bf16 %v1104
    %v1801 = vunpack.c.h.s8.bf16 %v1104
    %v1802 = vunpack.c.l.s8.bf16 %v1105
    %v1803 = vunpack.c.h.s8.bf16 %v1105
    %v1804 = vunpack.c.l.s8.bf16 %v1106
    %v1805 = vunpack.c.h.s8.bf16 %v1106
    %v1806 = vunpack.c.l.s8.bf16 %v1107
    %v1807 = vunpack.c.h.s8.bf16 %v1107
    %v1808 = vunpack.c.l.s8.bf16 %v1108
    %v1809 = vunpack.c.h.s8.bf16 %v1108
    %v1810 = vunpack.c.l.s8.bf16 %v1109
    %v1811 = vunpack.c.h.s8.bf16 %v1109
    %v1812 = vunpack.c.l.s8.bf16 %v1110
    %v1813 = vunpack.c.h.s8.bf16 %v1110
    %v1814 = vunpack.c.l.s8.bf16 %v1111
    %v1815 = vunpack.c.h.s8.bf16 %v1111
    %v1816 = vunpack.c.l.s8.bf16 %v1112
    %v1817 = vunpack.c.h.s8.bf16 %v1112
    %v1818 = vunpack.c.l.s8.bf16 %v1113
    %v1819 = vunpack.c.h.s8.bf16 %v1113
    %v1820 = vunpack.c.l.s8.bf16 %v1114
    %v1821 = vunpack.c.h.s8.bf16 %v1114
    %v1822 = vunpack.c.l.s8.bf16 %v1115
    %v1823 = vunpack.c.h.s8.bf16 %v1115
    %v1824 = vunpack.c.l.s8.bf16 %v1116
    %v1825 = vunpack.c.h.s8.bf16 %v1116
    %v1826 = vunpack.c.l.s8.bf16 %v1117
    %v1827 = vunpack.c.h.s8.bf16 %v1117
    %v1828 = vunpack.c.l.s8.bf16 %v1118
    %v1829 = vunpack.c.h.s8.bf16 %v1118
    %v1830 = vunpack.c.l.s8.bf16 %v1119
    %v1831 = vunpack.c.h.s8.bf16 %v1119
    %v1832 = vunpack.c.l.s8.bf16 %v1120
    %v1833 = vunpack.c.h.s8.bf16 %v1120
    %v1834 = vunpack.c.l.s8.bf16 %v1121
    %v1835 = vunpack.c.h.s8.bf16 %v1121
    %v1836 = vunpack.c.l.s8.bf16 %v1122
    %v1837 = vunpack.c.h.s8.bf16 %v1122
    %v1838 = vunpack.c.l.s8.bf16 %v1123
    %v1839 = vunpack.c.h.s8.bf16 %v1123
    %v1840 = vunpack.c.l.s8.bf16 %v1124
    %v1841 = vunpack.c.h.s8.bf16 %v1124
    %v1842 = vunpack.c.l.s8.bf16 %v1125
    %v1843 = vunpack.c.h.s8.bf16 %v1125
    %v1844 = vunpack.c.l.s8.bf16 %v1126
    %v1845 = vunpack.c.h.s8.bf16 %v1126
    %v1846 = vunpack.c.l.s8.bf16 %v1127
    %v1847 = vunpack.c.h.s8.bf16 %v1127
    %v1848 = vunpack.c.l.s8.bf16 %v1128
    %v1849 = vunpack.c.h.s8.bf16 %v1128
    %v1850 = vunpack.c.l.s8.bf16 %v1129
    %v1851 = vunpack.c.h.s8.bf16 %v1129
    %v1852 = vunpack.c.l.s8.bf16 %v1130
    %v1853 = vunpack.c.h.s8.bf16 %v1130
    %v1854 = vunpack.c.l.s8.bf16 %v1131
    %v1855 = vunpack.c.h.s8.bf16 %v1131
    %v1856 = vunpack.c.l.s8.bf16 %v1132
    %v1857 = vunpack.c.h.s8.bf16 %v1132
    %v1858 = vunpack.c.l.s8.bf16 %v1133
    %v1859 = vunpack.c.h.s8.bf16 %v1133
    %v1860 = vunpack.c.l.s8.bf16 %v1134
    %v1861 = vunpack.c.h.s8.bf16 %v1134
    %v1862 = vunpack.c.l.s8.bf16 %v1135
    %v1863 = vunpack.c.h.s8.bf16 %v1135
    %v1864 = vunpack.c.l.s8.bf16 %v1136
    %v1865 = vunpack.c.h.s8.bf16 %v1136
    %v1866 = vunpack.c.l.s8.bf16 %v1137
    %v1867 = vunpack.c.h.s8.bf16 %v1137
    %v1868 = vunpack.c.l.s8.bf16 %v1138
    %v1869 = vunpack.c.h.s8.bf16 %v1138
    %v1870 = vunpack.c.l.s8.bf16 %v1139
    %v1871 = vunpack.c.h.s8.bf16 %v1139
    %v1872 = vunpack.c.l.s8.bf16 %v1140
    %v1873 = vunpack.c.h.s8.bf16 %v1140
    %v1874 = vunpack.c.l.s8.bf16 %v1141
    %v1875 = vunpack.c.h.s8.bf16 %v1141
    %v1876 = vunpack.c.l.s8.bf16 %v1142
    %v1877 = vunpack.c.h.s8.bf16 %v1142
    %v1878 = vunpack.c.l.s8.bf16 %v1143
    %v1879 = vunpack.c.h.s8.bf16 %v1143
    %v1880 = vunpack.c.l.s8.bf16 %v1144
    %v1881 = vunpack.c.h.s8.bf16 %v1144
    %v1882 = vunpack.c.l.s8.bf16 %v1145
    %v1883 = vunpack.c.h.s8.bf16 %v1145
    %v1884 = vunpack.c.l.s8.bf16 %v1146
    %v1885 = vunpack.c.h.s8.bf16 %v1146
    %v1886 = vunpack.c.l.s8.bf16 %v1147
    %v1887 = vunpack.c.h.s8.bf16 %v1147
    %v1888 = vunpack.c.l.s8.bf16 %v1148
    %v1889 = vunpack.c.h.s8.bf16 %v1148
    %v1890 = vunpack.c.l.s8.bf16 %v1149
    %v1891 = vunpack.c.h.s8.bf16 %v1149
    %v1892 = vunpack.c.l.s8.bf16 %v1150
    %v1893 = vunpack.c.h.s8.bf16 %v1150
    %v1894 = vunpack.c.l.s8.bf16 %v1151
    %v1895 = vunpack.c.h.s8.bf16 %v1151
    %v1896 = vunpack.c.l.s8.bf16 %v1152
    %v1897 = vunpack.c.h.s8.bf16 %v1152
    %v1898 = vunpack.c.l.s8.bf16 %v1153
    %v1899 = vunpack.c.h.s8.bf16 %v1153
    %v1900 = vunpack.c.l.s8.bf16 %v1154
    %v1901 = vunpack.c.h.s8.bf16 %v1154
    %v1902 = vunpack.c.l.s8.bf16 %v1155
    %v1903 = vunpack.c.h.s8.bf16 %v1155
    %v1904 = vunpack.c.l.s8.bf16 %v1156
    %v1905 = vunpack.c.h.s8.bf16 %v1156
    %v1906 = vunpack.c.l.s8.bf16 %v1157
    %v1907 = vunpack.c.h.s8.bf16 %v1157
    %v1908 = vunpack.c.l.s8.bf16 %v1158
    %v1909 = vunpack.c.h.s8.bf16 %v1158
    %v1910 = vunpack.c.l.s8.bf16 %v1159
    %v1911 = vunpack.c.h.s8.bf16 %v1159
    %v1912 = vunpack.c.l.s8.bf16 %v1160
    %v1913 = vunpack.c.h.s8.bf16 %v1160
    %v1914 = vunpack.c.l.s8.bf16 %v1161
    %v1915 = vunpack.c.h.s8.bf16 %v1161
    %v1916 = vunpack.c.l.s8.bf16 %v1162
    %v1917 = vunpack.c.h.s8.bf16 %v1162
    %v1918 = vunpack.c.l.s8.bf16 %v1163
    %v1919 = vunpack.c.h.s8.bf16 %v1163
    %v1920 = vunpack.c.l.s8.bf16 %v1164
    %v1921 = vunpack.c.h.s8.bf16 %v1164
    %v1922 = vunpack.c.l.s8.bf16 %v1165
    %v1923 = vunpack.c.h.s8.bf16 %v1165
    %v1924 = vunpack.c.l.s8.bf16 %v1166
    %v1925 = vunpack.c.h.s8.bf16 %v1166
    %v1926 = vunpack.c.l.s8.bf16 %v1167
    %v1927 = vunpack.c.h.s8.bf16 %v1167
    %v1928 = vunpack.c.l.s8.bf16 %v1168
    %v1929 = vunpack.c.h.s8.bf16 %v1168
    %v1930 = vunpack.c.l.s8.bf16 %v1169
    %v1931 = vunpack.c.h.s8.bf16 %v1169
    %v1932 = vunpack.c.l.s8.bf16 %v1170
    %v1933 = vunpack.c.h.s8.bf16 %v1170
    %v1934 = vunpack.c.l.s8.bf16 %v1171
    %v1935 = vunpack.c.h.s8.bf16 %v1171
    %v1936 = vunpack.c.l.s8.bf16 %v1172
    %v1937 = vunpack.c.h.s8.bf16 %v1172
    %v1938 = vunpack.c.l.s8.bf16 %v1173
    %v1939 = vunpack.c.h.s8.bf16 %v1173
    %v1940 = vunpack.c.l.s8.bf16 %v1174
    %v1941 = vunpack.c.h.s8.bf16 %v1174
    %v1942 = vunpack.c.l.s8.bf16 %v1175
    %v1943 = vunpack.c.h.s8.bf16 %v1175
    %1944 = vmatprep.subr.bf16.mxu0 0
    %1945 = vmatpush1.bf16.msra.mxu0 %v1176
    %1946 = vmatprep.subr.bf16.mxu0 0
    %1947 = vmatpush1.bf16.msra.mxu0 %v1177
    %1948 = vmatprep.subr.bf16.mxu0 0
    %1949 = vmatpush1.bf16.msra.mxu0 %v1178
    %1950 = vmatprep.subr.bf16.mxu0 0
    %1951 = vmatpush1.bf16.msra.mxu0 %v1179
    %1952 = vmatprep.subr.bf16.mxu0 0
    %1953 = vmatpush1.bf16.msra.mxu0 %v1180
    %1954 = vmatprep.subr.bf16.mxu0 0
    %1955 = vmatpush1.bf16.msra.mxu0 %v1181
    %1956 = vmatprep.subr.bf16.mxu0 0
    %1957 = vmatpush1.bf16.msra.mxu0 %v1182
    %1958 = vmatprep.subr.bf16.mxu0 0
    %1959 = vmatpush1.bf16.msra.mxu0 %v1183
    %1960 = vmatprep.subr.bf16.mxu0 0
    %1961 = vmatpush1.bf16.msra.mxu0 %v1184
    %1962 = vmatprep.subr.bf16.mxu0 0
    %1963 = vmatpush1.bf16.msra.mxu0 %v1185
    %1964 = vmatprep.subr.bf16.mxu0 0
    %1965 = vmatpush1.bf16.msra.mxu0 %v1186
    %1966 = vmatprep.subr.bf16.mxu0 0
    %1967 = vmatpush1.bf16.msra.mxu0 %v1187
    %1968 = vmatprep.subr.bf16.mxu0 0
    %1969 = vmatpush1.bf16.msra.mxu0 %v1188
    %1970 = vmatprep.subr.bf16.mxu0 0
    %1971 = vmatpush1.bf16.msra.mxu0 %v1189
    %1972 = vmatprep.subr.bf16.mxu0 0
    %1973 = vmatpush1.bf16.msra.mxu0 %v1190
    %1974 = vmatprep.subr.bf16.mxu0 0
    %1975 = vmatpush1.bf16.msra.mxu0 %v1191
    %1976 = vmatprep.mubr.bf16.mxu0 %v697
    %1977 = vmatmul.mubr.bf16.gmra.mrb[0].mxu0 %v696
    %v1978 = vpop.f32.mrb[0].mxu0
    %v1979 = vadd.f32 0.0, %v1978
    %v1980 = vpop.f32.mrb[0].mxu0
    %v1981 = vpop.f32.mrb[0].mxu0
    %v1982 = vpop.f32.mrb[0].mxu0
    %1983 = vdwg.mxu0
    %1984 = vmatprep.subr.bf16.mxu0 0
    %1985 = vmatpush1.bf16.msra.mxu0 %v1192
    %1986 = vmatprep.subr.bf16.mxu0 0
    %1987 = vmatpush1.bf16.msra.mxu0 %v1193
    %1988 = vmatprep.subr.bf16.mxu0 0
    %1989 = vmatpush1.bf16.msra.mxu0 %v1194
    %1990 = vmatprep.subr.bf16.mxu0 0
    %1991 = vmatpush1.bf16.msra.mxu0 %v1195
    %1992 = vmatprep.subr.bf16.mxu0 0
    %1993 = vmatpush1.bf16.msra.mxu0 %v1196
    %1994 = vmatprep.subr.bf16.mxu0 0
    %1995 = vmatpush1.bf16.msra.mxu0 %v1197
    %1996 = vmatprep.subr.bf16.mxu0 0
    %1997 = vmatpush1.bf16.msra.mxu0 %v1198
    %1998 = vmatprep.subr.bf16.mxu0 0
    %1999 = vmatpush1.bf16.msra.mxu0 %v1199
    %2000 = vmatprep.subr.bf16.mxu0 0
    %2001 = vmatpush1.bf16.msra.mxu0 %v1200
    %2002 = vmatprep.subr.bf16.mxu0 0
    %2003 = vmatpush1.bf16.msra.mxu0 %v1201
    %2004 = vmatprep.subr.bf16.mxu0 0
    %2005 = vmatpush1.bf16.msra.mxu0 %v1202
    %2006 = vmatprep.subr.bf16.mxu0 0
    %2007 = vmatpush1.bf16.msra.mxu0 %v1203
    %2008 = vmatprep.subr.bf16.mxu0 0
    %2009 = vmatpush1.bf16.msra.mxu0 %v1204
    %2010 = vmatprep.subr.bf16.mxu0 0
    %2011 = vmatpush1.bf16.msra.mxu0 %v1205
    %2012 = vmatprep.subr.bf16.mxu0 0
    %2013 = vmatpush1.bf16.msra.mxu0 %v1206
    %2014 = vmatprep.subr.bf16.mxu0 0
    %2015 = vmatpush1.bf16.msra.mxu0 %v1207
    %2016 = vmatprep.mubr.bf16.mxu0 %v699
    %2017 = vmatmul.mubr.bf16.gmra.mrb[0].mxu0 %v698
    %v2018 = vpop.f32.mrb[0].mxu0
    %v2019 = vadd.f32 %v1979, %v2018
    %v2020 = vpop.f32.mrb[0].mxu0
    %v2021 = vpop.f32.mrb[0].mxu0
    %v2022 = vpop.f32.mrb[0].mxu0
    %2023 = vdwg.mxu0
    %2024 = vmatprep.subr.bf16.mxu0 0
    %2025 = vmatpush1.bf16.msra.mxu0 %v1208
    %2026 = vmatprep.subr.bf16.mxu0 0
    %2027 = vmatpush1.bf16.msra.mxu0 %v1209
    %2028 = vmatprep.subr.bf16.mxu0 0
    %2029 = vmatpush1.bf16.msra.mxu0 %v1210
    %2030 = vmatprep.subr.bf16.mxu0 0
    %2031 = vmatpush1.bf16.msra.mxu0 %v1211
    %2032 = vmatprep.subr.bf16.mxu0 0
    %2033 = vmatpush1.bf16.msra.mxu0 %v1212
    %2034 = vmatprep.subr.bf16.mxu0 0
    %2035 = vmatpush1.bf16.msra.mxu0 %v1213
    %2036 = vmatprep.subr.bf16.mxu0 0
    %2037 = vmatpush1.bf16.msra.mxu0 %v1214
    %2038 = vmatprep.subr.bf16.mxu0 0
    %2039 = vmatpush1.bf16.msra.mxu0 %v1215
    %2040 = vmatprep.subr.bf16.mxu0 0
    %2041 = vmatpush1.bf16.msra.mxu0 %v1216
    %2042 = vmatprep.subr.bf16.mxu0 0
    %2043 = vmatpush1.bf16.msra.mxu0 %v1217
    %2044 = vmatprep.subr.bf16.mxu0 0
    %2045 = vmatpush1.bf16.msra.mxu0 %v1218
    %2046 = vmatprep.subr.bf16.mxu0 0
    %2047 = vmatpush1.bf16.msra.mxu0 %v1219
    %2048 = vmatprep.subr.bf16.mxu0 0
    %2049 = vmatpush1.bf16.msra.mxu0 %v1220
    %2050 = vmatprep.subr.bf16.mxu0 0
    %2051 = vmatpush1.bf16.msra.mxu0 %v1221
    %2052 = vmatprep.subr.bf16.mxu0 0
    %2053 = vmatpush1.bf16.msra.mxu0 %v1222
    %2054 = vmatprep.subr.bf16.mxu0 0
    %2055 = vmatpush1.bf16.msra.mxu0 %v1223
    %2056 = vmatprep.mubr.bf16.mxu0 %v701
    %2057 = vmatmul.mubr.bf16.gmra.mrb[0].mxu0 %v700
    %v2058 = vpop.f32.mrb[0].mxu0
    %v2059 = vadd.f32 %v2019, %v2058
    %v2060 = vpop.f32.mrb[0].mxu0
    %v2061 = vpop.f32.mrb[0].mxu0
    %v2062 = vpop.f32.mrb[0].mxu0
    %2063 = vdwg.mxu0
    %2064 = vmatprep.subr.bf16.mxu0 0
    %2065 = vmatpush1.bf16.msra.mxu0 %v1224
    %2066 = vmatprep.subr.bf16.mxu0 0
    %2067 = vmatpush1.bf16.msra.mxu0 %v1225
    %2068 = vmatprep.subr.bf16.mxu0 0
    %2069 = vmatpush1.bf16.msra.mxu0 %v1226
    %2070 = vmatprep.subr.bf16.mxu0 0
    %2071 = vmatpush1.bf16.msra.mxu0 %v1227
    %2072 = vmatprep.subr.bf16.mxu0 0
    %2073 = vmatpush1.bf16.msra.mxu0 %v1228
    %2074 = vmatprep.subr.bf16.mxu0 0
    %2075 = vmatpush1.bf16.msra.mxu0 %v1229
    %2076 = vmatprep.subr.bf16.mxu0 0
    %2077 = vmatpush1.bf16.msra.mxu0 %v1230
    %2078 = vmatprep.subr.bf16.mxu0 0
    %2079 = vmatpush1.bf16.msra.mxu0 %v1231
    %2080 = vmatprep.subr.bf16.mxu0 0
    %2081 = vmatpush1.bf16.msra.mxu0 %v1232
    %2082 = vmatprep.subr.bf16.mxu0 0
    %2083 = vmatpush1.bf16.msra.mxu0 %v1233
    %2084 = vmatprep.subr.bf16.mxu0 0
    %2085 = vmatpush1.bf16.msra.mxu0 %v1234
    %2086 = vmatprep.subr.bf16.mxu0 0
    %2087 = vmatpush1.bf16.msra.mxu0 %v1235
    %2088 = vmatprep.subr.bf16.mxu0 0
    %2089 = vmatpush1.bf16.msra.mxu0 %v1236
    %2090 = vmatprep.subr.bf16.mxu0 0
    %2091 = vmatpush1.bf16.msra.mxu0 %v1237
    %2092 = vmatprep.subr.bf16.mxu0 0
    %2093 = vmatpush1.bf16.msra.mxu0 %v1238
    %2094 = vmatprep.subr.bf16.mxu0 0
    %2095 = vmatpush1.bf16.msra.mxu0 %v1239
    %2096 = vmatprep.mubr.bf16.mxu0 %v703
    %2097 = vmatmul.mubr.bf16.gmra.mrb[0].mxu0 %v702
    %v2098 = vpop.f32.mrb[0].mxu0
    %v2099 = vadd.f32 %v2059, %v2098
    %v2100 = vpop.f32.mrb[0].mxu0
    %v2101 = vpop.f32.mrb[0].mxu0
    %v2102 = vpop.f32.mrb[0].mxu0
    %2103 = vdwg.mxu0
    %2104 = vmatprep.subr.bf16.mxu0 0
    %2105 = vmatpush1.bf16.msra.mxu0 %v1240
    %2106 = vmatprep.subr.bf16.mxu0 0
    %2107 = vmatpush1.bf16.msra.mxu0 %v1241
    %2108 = vmatprep.subr.bf16.mxu0 0
    %2109 = vmatpush1.bf16.msra.mxu0 %v1242
    %2110 = vmatprep.subr.bf16.mxu0 0
    %2111 = vmatpush1.bf16.msra.mxu0 %v1243
    %2112 = vmatprep.subr.bf16.mxu0 0
    %2113 = vmatpush1.bf16.msra.mxu0 %v1244
    %2114 = vmatprep.subr.bf16.mxu0 0
    %2115 = vmatpush1.bf16.msra.mxu0 %v1245
    %2116 = vmatprep.subr.bf16.mxu0 0
    %2117 = vmatpush1.bf16.msra.mxu0 %v1246
    %2118 = vmatprep.subr.bf16.mxu0 0
    %2119 = vmatpush1.bf16.msra.mxu0 %v1247
    %2120 = vmatprep.subr.bf16.mxu0 0
    %2121 = vmatpush1.bf16.msra.mxu0 %v1248
    %2122 = vmatprep.subr.bf16.mxu0 0
    %2123 = vmatpush1.bf16.msra.mxu0 %v1249
    %2124 = vmatprep.subr.bf16.mxu0 0
    %2125 = vmatpush1.bf16.msra.mxu0 %v1250
    %2126 = vmatprep.subr.bf16.mxu0 0
    %2127 = vmatpush1.bf16.msra.mxu0 %v1251
    %2128 = vmatprep.subr.bf16.mxu0 0
    %2129 = vmatpush1.bf16.msra.mxu0 %v1252
    %2130 = vmatprep.subr.bf16.mxu0 0
    %2131 = vmatpush1.bf16.msra.mxu0 %v1253
    %2132 = vmatprep.subr.bf16.mxu0 0
    %2133 = vmatpush1.bf16.msra.mxu0 %v1254
    %2134 = vmatprep.subr.bf16.mxu0 0
    %2135 = vmatpush1.bf16.msra.mxu0 %v1255
    %2136 = vmatprep.mubr.bf16.mxu0 %v705
    %2137 = vmatmul.mubr.bf16.gmra.mrb[0].mxu0 %v704
    %v2138 = vpop.f32.mrb[0].mxu0
    %v2139 = vadd.f32 %v2099, %v2138
    %v2140 = vpop.f32.mrb[0].mxu0
    %v2141 = vpop.f32.mrb[0].mxu0
    %v2142 = vpop.f32.mrb[0].mxu0
    %2143 = vdwg.mxu0
    %2144 = vmatprep.subr.bf16.mxu0 0
    %2145 = vmatpush1.bf16.msra.mxu0 %v1256
    %2146 = vmatprep.subr.bf16.mxu0 0
    %2147 = vmatpush1.bf16.msra.mxu0 %v1257
    %2148 = vmatprep.subr.bf16.mxu0 0
    %2149 = vmatpush1.bf16.msra.mxu0 %v1258
    %2150 = vmatprep.subr.bf16.mxu0 0
    %2151 = vmatpush1.bf16.msra.mxu0 %v1259
    %2152 = vmatprep.subr.bf16.mxu0 0
    %2153 = vmatpush1.bf16.msra.mxu0 %v1260
    %2154 = vmatprep.subr.bf16.mxu0 0
    %2155 = vmatpush1.bf16.msra.mxu0 %v1261
    %2156 = vmatprep.subr.bf16.mxu0 0
    %2157 = vmatpush1.bf16.msra.mxu0 %v1262
    %2158 = vmatprep.subr.bf16.mxu0 0
    %2159 = vmatpush1.bf16.msra.mxu0 %v1263
    %2160 = vmatprep.subr.bf16.mxu0 0
    %2161 = vmatpush1.bf16.msra.mxu0 %v1264
    %2162 = vmatprep.subr.bf16.mxu0 0
    %2163 = vmatpush1.bf16.msra.mxu0 %v1265
    %2164 = vmatprep.subr.bf16.mxu0 0
    %2165 = vmatpush1.bf16.msra.mxu0 %v1266
    %2166 = vmatprep.subr.bf16.mxu0 0
    %2167 = vmatpush1.bf16.msra.mxu0 %v1267
    %2168 = vmatprep.subr.bf16.mxu0 0
    %2169 = vmatpush1.bf16.msra.mxu0 %v1268
    %2170 = vmatprep.subr.bf16.mxu0 0
    %2171 = vmatpush1.bf16.msra.mxu0 %v1269
    %2172 = vmatprep.subr.bf16.mxu0 0
    %2173 = vmatpush1.bf16.msra.mxu0 %v1270
    %2174 = vmatprep.subr.bf16.mxu0 0
    %2175 = vmatpush1.bf16.msra.mxu0 %v1271
    %2176 = vmatprep.mubr.bf16.mxu0 %v707
    %2177 = vmatmul.mubr.bf16.gmra.mrb[0].mxu0 %v706
    %v2178 = vpop.f32.mrb[0].mxu0
    %v2179 = vadd.f32 %v2139, %v2178
    %v2180 = vpop.f32.mrb[0].mxu0
    %v2181 = vpop.f32.mrb[0].mxu0
    %v2182 = vpop.f32.mrb[0].mxu0
    %2183 = vdwg.mxu0
    %2184 = vmatprep.subr.bf16.mxu0 0
    %2185 = vmatpush1.bf16.msra.mxu0 %v1272
    %2186 = vmatprep.subr.bf16.mxu0 0
    %2187 = vmatpush1.bf16.msra.mxu0 %v1273
    %2188 = vmatprep.subr.bf16.mxu0 0
    %2189 = vmatpush1.bf16.msra.mxu0 %v1274
    %2190 = vmatprep.subr.bf16.mxu0 0
    %2191 = vmatpush1.bf16.msra.mxu0 %v1275
    %2192 = vmatprep.subr.bf16.mxu0 0
    %2193 = vmatpush1.bf16.msra.mxu0 %v1276
    %2194 = vmatprep.subr.bf16.mxu0 0
    %2195 = vmatpush1.bf16.msra.mxu0 %v1277
    %2196 = vmatprep.subr.bf16.mxu0 0
    %2197 = vmatpush1.bf16.msra.mxu0 %v1278
    %2198 = vmatprep.subr.bf16.mxu0 0
    %2199 = vmatpush1.bf16.msra.mxu0 %v1279
    %2200 = vmatprep.subr.bf16.mxu0 0
    %2201 = vmatpush1.bf16.msra.mxu0 %v1280
    %2202 = vmatprep.subr.bf16.mxu0 0
    %2203 = vmatpush1.bf16.msra.mxu0 %v1281
    %2204 = vmatprep.subr.bf16.mxu0 0
    %2205 = vmatpush1.bf16.msra.mxu0 %v1282
    %2206 = vmatprep.subr.bf16.mxu0 0
    %2207 = vmatpush1.bf16.msra.mxu0 %v1283
    %2208 = vmatprep.subr.bf16.mxu0 0
    %2209 = vmatpush1.bf16.msra.mxu0 %v1284
    %2210 = vmatprep.subr.bf16.mxu0 0
    %2211 = vmatpush1.bf16.msra.mxu0 %v1285
    %2212 = vmatprep.subr.bf16.mxu0 0
    %2213 = vmatpush1.bf16.msra.mxu0 %v1286
    %2214 = vmatprep.subr.bf16.mxu0 0
    %2215 = vmatpush1.bf16.msra.mxu0 %v1287
    %2216 = vmatprep.mubr.bf16.mxu0 %v709
    %2217 = vmatmul.mubr.bf16.gmra.mrb[0].mxu0 %v708
    %v2218 = vpop.f32.mrb[0].mxu0
    %v2219 = vadd.f32 %v2179, %v2218
    %v2220 = vpop.f32.mrb[0].mxu0
    %v2221 = vpop.f32.mrb[0].mxu0
    %v2222 = vpop.f32.mrb[0].mxu0
    %2223 = vdwg.mxu0
    %2224 = vmatprep.subr.bf16.mxu0 0
    %2225 = vmatpush1.bf16.msra.mxu0 %v1288
    %2226 = vmatprep.subr.bf16.mxu0 0
    %2227 = vmatpush1.bf16.msra.mxu0 %v1289
    %2228 = vmatprep.subr.bf16.mxu0 0
    %2229 = vmatpush1.bf16.msra.mxu0 %v1290
    %2230 = vmatprep.subr.bf16.mxu0 0
    %2231 = vmatpush1.bf16.msra.mxu0 %v1291
    %2232 = vmatprep.subr.bf16.mxu0 0
    %2233 = vmatpush1.bf16.msra.mxu0 %v1292
    %2234 = vmatprep.subr.bf16.mxu0 0
    %2235 = vmatpush1.bf16.msra.mxu0 %v1293
    %2236 = vmatprep.subr.bf16.mxu0 0
    %2237 = vmatpush1.bf16.msra.mxu0 %v1294
    %2238 = vmatprep.subr.bf16.mxu0 0
    %2239 = vmatpush1.bf16.msra.mxu0 %v1295
    %2240 = vmatprep.subr.bf16.mxu0 0
    %2241 = vmatpush1.bf16.msra.mxu0 %v1296
    %2242 = vmatprep.subr.bf16.mxu0 0
    %2243 = vmatpush1.bf16.msra.mxu0 %v1297
    %2244 = vmatprep.subr.bf16.mxu0 0
    %2245 = vmatpush1.bf16.msra.mxu0 %v1298
    %2246 = vmatprep.subr.bf16.mxu0 0
    %2247 = vmatpush1.bf16.msra.mxu0 %v1299
    %2248 = vmatprep.subr.bf16.mxu0 0
    %2249 = vmatpush1.bf16.msra.mxu0 %v1300
    %2250 = vmatprep.subr.bf16.mxu0 0
    %2251 = vmatpush1.bf16.msra.mxu0 %v1301
    %2252 = vmatprep.subr.bf16.mxu0 0
    %2253 = vmatpush1.bf16.msra.mxu0 %v1302
    %2254 = vmatprep.subr.bf16.mxu0 0
    %2255 = vmatpush1.bf16.msra.mxu0 %v1303
    %2256 = vmatprep.mubr.bf16.mxu0 %v711
    %2257 = vmatmul.mubr.bf16.gmra.mrb[0].mxu0 %v710
    %v2258 = vpop.f32.mrb[0].mxu0
    %v2259 = vadd.f32 %v2219, %v2258
    %v2260 = vpop.f32.mrb[0].mxu0
    %v2261 = vpop.f32.mrb[0].mxu0
    %v2262 = vpop.f32.mrb[0].mxu0
    %2263 = vdwg.mxu0
    %2264 = vmatprep.subr.bf16.mxu0 0
    %2265 = vmatpush1.bf16.msra.mxu0 %v1304
    %2266 = vmatprep.subr.bf16.mxu0 0
    %2267 = vmatpush1.bf16.msra.mxu0 %v1305
    %2268 = vmatprep.subr.bf16.mxu0 0
    %2269 = vmatpush1.bf16.msra.mxu0 %v1306
    %2270 = vmatprep.subr.bf16.mxu0 0
    %2271 = vmatpush1.bf16.msra.mxu0 %v1307
    %2272 = vmatprep.subr.bf16.mxu0 0
    %2273 = vmatpush1.bf16.msra.mxu0 %v1308
    %2274 = vmatprep.subr.bf16.mxu0 0
    %2275 = vmatpush1.bf16.msra.mxu0 %v1309
    %2276 = vmatprep.subr.bf16.mxu0 0
    %2277 = vmatpush1.bf16.msra.mxu0 %v1310
    %2278 = vmatprep.subr.bf16.mxu0 0
    %2279 = vmatpush1.bf16.msra.mxu0 %v1311
    %2280 = vmatprep.subr.bf16.mxu0 0
    %2281 = vmatpush1.bf16.msra.mxu0 %v1312
    %2282 = vmatprep.subr.bf16.mxu0 0
    %2283 = vmatpush1.bf16.msra.mxu0 %v1313
    %2284 = vmatprep.subr.bf16.mxu0 0
    %2285 = vmatpush1.bf16.msra.mxu0 %v1314
    %2286 = vmatprep.subr.bf16.mxu0 0
    %2287 = vmatpush1.bf16.msra.mxu0 %v1315
    %2288 = vmatprep.subr.bf16.mxu0 0
    %2289 = vmatpush1.bf16.msra.mxu0 %v1316
    %2290 = vmatprep.subr.bf16.mxu0 0
    %2291 = vmatpush1.bf16.msra.mxu0 %v1317
    %2292 = vmatprep.subr.bf16.mxu0 0
    %2293 = vmatpush1.bf16.msra.mxu0 %v1318
    %2294 = vmatprep.subr.bf16.mxu0 0
    %2295 = vmatpush1.bf16.msra.mxu0 %v1319
    %2296 = vmatprep.mubr.bf16.mxu0 %v713
    %2297 = vmatmul.mubr.bf16.gmra.mrb[0].mxu0 %v712
    %v2298 = vpop.f32.mrb[0].mxu0
    %v2299 = vadd.f32 %v2259, %v2298
    %v2300 = vpop.f32.mrb[0].mxu0
    %v2301 = vpop.f32.mrb[0].mxu0
    %v2302 = vpop.f32.mrb[0].mxu0
    %2303 = vdwg.mxu0
    %2304 = vmatprep.subr.bf16.mxu0 0
    %2305 = vmatpush1.bf16.msra.mxu0 %v1320
    %2306 = vmatprep.subr.bf16.mxu0 0
    %2307 = vmatpush1.bf16.msra.mxu0 %v1321
    %2308 = vmatprep.subr.bf16.mxu0 0
    %2309 = vmatpush1.bf16.msra.mxu0 %v1322
    %2310 = vmatprep.subr.bf16.mxu0 0
    %2311 = vmatpush1.bf16.msra.mxu0 %v1323
    %2312 = vmatprep.subr.bf16.mxu0 0
    %2313 = vmatpush1.bf16.msra.mxu0 %v1324
    %2314 = vmatprep.subr.bf16.mxu0 0
    %2315 = vmatpush1.bf16.msra.mxu0 %v1325
    %2316 = vmatprep.subr.bf16.mxu0 0
    %2317 = vmatpush1.bf16.msra.mxu0 %v1326
    %2318 = vmatprep.subr.bf16.mxu0 0
    %2319 = vmatpush1.bf16.msra.mxu0 %v1327
    %2320 = vmatprep.subr.bf16.mxu0 0
    %2321 = vmatpush1.bf16.msra.mxu0 %v1328
    %2322 = vmatprep.subr.bf16.mxu0 0
    %2323 = vmatpush1.bf16.msra.mxu0 %v1329
    %2324 = vmatprep.subr.bf16.mxu0 0
    %2325 = vmatpush1.bf16.msra.mxu0 %v1330
    %2326 = vmatprep.subr.bf16.mxu0 0
    %2327 = vmatpush1.bf16.msra.mxu0 %v1331
    %2328 = vmatprep.subr.bf16.mxu0 0
    %2329 = vmatpush1.bf16.msra.mxu0 %v1332
    %2330 = vmatprep.subr.bf16.mxu0 0
    %2331 = vmatpush1.bf16.msra.mxu0 %v1333
    %2332 = vmatprep.subr.bf16.mxu0 0
    %2333 = vmatpush1.bf16.msra.mxu0 %v1334
    %2334 = vmatprep.subr.bf16.mxu0 0
    %2335 = vmatpush1.bf16.msra.mxu0 %v1335
    %2336 = vmatprep.mubr.bf16.mxu0 %v715
    %2337 = vmatmul.mubr.bf16.gmra.mrb[0].mxu0 %v714
    %v2338 = vpop.f32.mrb[0].mxu0
    %v2339 = vadd.f32 %v2299, %v2338
    %v2340 = vpop.f32.mrb[0].mxu0
    %v2341 = vpop.f32.mrb[0].mxu0
    %v2342 = vpop.f32.mrb[0].mxu0
    %2343 = vdwg.mxu0
    %2344 = vmatprep.subr.bf16.mxu0 0
    %2345 = vmatpush1.bf16.msra.mxu0 %v1336
    %2346 = vmatprep.subr.bf16.mxu0 0
    %2347 = vmatpush1.bf16.msra.mxu0 %v1337
    %2348 = vmatprep.subr.bf16.mxu0 0
    %2349 = vmatpush1.bf16.msra.mxu0 %v1338
    %2350 = vmatprep.subr.bf16.mxu0 0
    %2351 = vmatpush1.bf16.msra.mxu0 %v1339
    %2352 = vmatprep.subr.bf16.mxu0 0
    %2353 = vmatpush1.bf16.msra.mxu0 %v1340
    %2354 = vmatprep.subr.bf16.mxu0 0
    %2355 = vmatpush1.bf16.msra.mxu0 %v1341
    %2356 = vmatprep.subr.bf16.mxu0 0
    %2357 = vmatpush1.bf16.msra.mxu0 %v1342
    %2358 = vmatprep.subr.bf16.mxu0 0
    %2359 = vmatpush1.bf16.msra.mxu0 %v1343
    %2360 = vmatprep.subr.bf16.mxu0 0
    %2361 = vmatpush1.bf16.msra.mxu0 %v1344
    %2362 = vmatprep.subr.bf16.mxu0 0
    %2363 = vmatpush1.bf16.msra.mxu0 %v1345
    %2364 = vmatprep.subr.bf16.mxu0 0
    %2365 = vmatpush1.bf16.msra.mxu0 %v1346
    %2366 = vmatprep.subr.bf16.mxu0 0
    %2367 = vmatpush1.bf16.msra.mxu0 %v1347
    %2368 = vmatprep.subr.bf16.mxu0 0
    %2369 = vmatpush1.bf16.msra.mxu0 %v1348
    %2370 = vmatprep.subr.bf16.mxu0 0
    %2371 = vmatpush1.bf16.msra.mxu0 %v1349
    %2372 = vmatprep.subr.bf16.mxu0 0
    %2373 = vmatpush1.bf16.msra.mxu0 %v1350
    %2374 = vmatprep.subr.bf16.mxu0 0
    %2375 = vmatpush1.bf16.msra.mxu0 %v1351
    %2376 = vmatprep.mubr.bf16.mxu0 %v717
    %2377 = vmatmul.mubr.bf16.gmra.mrb[0].mxu0 %v716
    %v2378 = vpop.f32.mrb[0].mxu0
    %v2379 = vadd.f32 %v2339, %v2378
    %v2380 = vpop.f32.mrb[0].mxu0
    %v2381 = vpop.f32.mrb[0].mxu0
    %v2382 = vpop.f32.mrb[0].mxu0
    %2383 = vdwg.mxu0
    %2384 = vmatprep.subr.bf16.mxu0 0
    %2385 = vmatpush1.bf16.msra.mxu0 %v1352
    %2386 = vmatprep.subr.bf16.mxu0 0
    %2387 = vmatpush1.bf16.msra.mxu0 %v1353
    %2388 = vmatprep.subr.bf16.mxu0 0
    %2389 = vmatpush1.bf16.msra.mxu0 %v1354
    %2390 = vmatprep.subr.bf16.mxu0 0
    %2391 = vmatpush1.bf16.msra.mxu0 %v1355
    %2392 = vmatprep.subr.bf16.mxu0 0
    %2393 = vmatpush1.bf16.msra.mxu0 %v1356
    %2394 = vmatprep.subr.bf16.mxu0 0
    %2395 = vmatpush1.bf16.msra.mxu0 %v1357
    %2396 = vmatprep.subr.bf16.mxu0 0
    %2397 = vmatpush1.bf16.msra.mxu0 %v1358
    %2398 = vmatprep.subr.bf16.mxu0 0
    %2399 = vmatpush1.bf16.msra.mxu0 %v1359
    %2400 = vmatprep.subr.bf16.mxu0 0
    %2401 = vmatpush1.bf16.msra.mxu0 %v1360
    %2402 = vmatprep.subr.bf16.mxu0 0
    %2403 = vmatpush1.bf16.msra.mxu0 %v1361
    %2404 = vmatprep.subr.bf16.mxu0 0
    %2405 = vmatpush1.bf16.msra.mxu0 %v1362
    %2406 = vmatprep.subr.bf16.mxu0 0
    %2407 = vmatpush1.bf16.msra.mxu0 %v1363
    %2408 = vmatprep.subr.bf16.mxu0 0
    %2409 = vmatpush1.bf16.msra.mxu0 %v1364
    %2410 = vmatprep.subr.bf16.mxu0 0
    %2411 = vmatpush1.bf16.msra.mxu0 %v1365
    %2412 = vmatprep.subr.bf16.mxu0 0
    %2413 = vmatpush1.bf16.msra.mxu0 %v1366
    %2414 = vmatprep.subr.bf16.mxu0 0
    %2415 = vmatpush1.bf16.msra.mxu0 %v1367
    %2416 = vmatprep.mubr.bf16.mxu0 %v719
    %2417 = vmatmul.mubr.bf16.gmra.mrb[0].mxu0 %v718
    %v2418 = vpop.f32.mrb[0].mxu0
    %v2419 = vadd.f32 %v2379, %v2418
    %v2420 = vpop.f32.mrb[0].mxu0
    %v2421 = vpop.f32.mrb[0].mxu0
    %v2422 = vpop.f32.mrb[0].mxu0
    %2423 = vdwg.mxu0
    %2424 = vmatprep.subr.bf16.mxu0 0
    %2425 = vmatpush1.bf16.msra.mxu0 %v1368
    %2426 = vmatprep.subr.bf16.mxu0 0
    %2427 = vmatpush1.bf16.msra.mxu0 %v1369
    %2428 = vmatprep.subr.bf16.mxu0 0
    %2429 = vmatpush1.bf16.msra.mxu0 %v1370
    %2430 = vmatprep.subr.bf16.mxu0 0
    %2431 = vmatpush1.bf16.msra.mxu0 %v1371
    %2432 = vmatprep.subr.bf16.mxu0 0
    %2433 = vmatpush1.bf16.msra.mxu0 %v1372
    %2434 = vmatprep.subr.bf16.mxu0 0
    %2435 = vmatpush1.bf16.msra.mxu0 %v1373
    %2436 = vmatprep.subr.bf16.mxu0 0
    %2437 = vmatpush1.bf16.msra.mxu0 %v1374
    %2438 = vmatprep.subr.bf16.mxu0 0
    %2439 = vmatpush1.bf16.msra.mxu0 %v1375
    %2440 = vmatprep.subr.bf16.mxu0 0
    %2441 = vmatpush1.bf16.msra.mxu0 %v1376
    %2442 = vmatprep.subr.bf16.mxu0 0
    %2443 = vmatpush1.bf16.msra.mxu0 %v1377
    %2444 = vmatprep.subr.bf16.mxu0 0
    %2445 = vmatpush1.bf16.msra.mxu0 %v1378
    %2446 = vmatprep.subr.bf16.mxu0 0
    %2447 = vmatpush1.bf16.msra.mxu0 %v1379
    %2448 = vmatprep.subr.bf16.mxu0 0
    %2449 = vmatpush1.bf16.msra.mxu0 %v1380
    %2450 = vmatprep.subr.bf16.mxu0 0
    %2451 = vmatpush1.bf16.msra.mxu0 %v1381
    %2452 = vmatprep.subr.bf16.mxu0 0
    %2453 = vmatpush1.bf16.msra.mxu0 %v1382
    %2454 = vmatprep.subr.bf16.mxu0 0
    %2455 = vmatpush1.bf16.msra.mxu0 %v1383
    %2456 = vmatprep.mubr.bf16.mxu0 %v721
    %2457 = vmatmul.mubr.bf16.gmra.mrb[0].mxu0 %v720
    %v2458 = vpop.f32.mrb[0].mxu0
    %v2459 = vadd.f32 %v2419, %v2458
    %v2460 = vpop.f32.mrb[0].mxu0
    %v2461 = vpop.f32.mrb[0].mxu0
    %v2462 = vpop.f32.mrb[0].mxu0
    %2463 = vdwg.mxu0
    %2464 = vmatprep.subr.bf16.mxu0 0
    %2465 = vmatpush1.bf16.msra.mxu0 %v1384
    %2466 = vmatprep.subr.bf16.mxu0 0
    %2467 = vmatpush1.bf16.msra.mxu0 %v1385
    %2468 = vmatprep.subr.bf16.mxu0 0
    %2469 = vmatpush1.bf16.msra.mxu0 %v1386
    %2470 = vmatprep.subr.bf16.mxu0 0
    %2471 = vmatpush1.bf16.msra.mxu0 %v1387
    %2472 = vmatprep.subr.bf16.mxu0 0
    %2473 = vmatpush1.bf16.msra.mxu0 %v1388
    %2474 = vmatprep.subr.bf16.mxu0 0
    %2475 = vmatpush1.bf16.msra.mxu0 %v1389
    %2476 = vmatprep.subr.bf16.mxu0 0
    %2477 = vmatpush1.bf16.msra.mxu0 %v1390
    %2478 = vmatprep.subr.bf16.mxu0 0
    %2479 = vmatpush1.bf16.msra.mxu0 %v1391
    %2480 = vmatprep.subr.bf16.mxu0 0
    %2481 = vmatpush1.bf16.msra.mxu0 %v1392
    %2482 = vmatprep.subr.bf16.mxu0 0
    %2483 = vmatpush1.bf16.msra.mxu0 %v1393
    %2484 = vmatprep.subr.bf16.mxu0 0
    %2485 = vmatpush1.bf16.msra.mxu0 %v1394
    %2486 = vmatprep.subr.bf16.mxu0 0
    %2487 = vmatpush1.bf16.msra.mxu0 %v1395
    %2488 = vmatprep.subr.bf16.mxu0 0
    %2489 = vmatpush1.bf16.msra.mxu0 %v1396
    %2490 = vmatprep.subr.bf16.mxu0 0
    %2491 = vmatpush1.bf16.msra.mxu0 %v1397
    %2492 = vmatprep.subr.bf16.mxu0 0
    %2493 = vmatpush1.bf16.msra.mxu0 %v1398
    %2494 = vmatprep.subr.bf16.mxu0 0
    %2495 = vmatpush1.bf16.msra.mxu0 %v1399
    %2496 = vmatprep.mubr.bf16.mxu0 %v723
    %2497 = vmatmul.mubr.bf16.gmra.mrb[0].mxu0 %v722
    %v2498 = vpop.f32.mrb[0].mxu0
    %v2499 = vadd.f32 %v2459, %v2498
    %v2500 = vpop.f32.mrb[0].mxu0
    %v2501 = vpop.f32.mrb[0].mxu0
    %v2502 = vpop.f32.mrb[0].mxu0
    %2503 = vdwg.mxu0
    %2504 = vmatprep.subr.bf16.mxu0 0
    %2505 = vmatpush1.bf16.msra.mxu0 %v1400
    %2506 = vmatprep.subr.bf16.mxu0 0
    %2507 = vmatpush1.bf16.msra.mxu0 %v1401
    %2508 = vmatprep.subr.bf16.mxu0 0
    %2509 = vmatpush1.bf16.msra.mxu0 %v1402
    %2510 = vmatprep.subr.bf16.mxu0 0
    %2511 = vmatpush1.bf16.msra.mxu0 %v1403
    %2512 = vmatprep.subr.bf16.mxu0 0
    %2513 = vmatpush1.bf16.msra.mxu0 %v1404
    %2514 = vmatprep.subr.bf16.mxu0 0
    %2515 = vmatpush1.bf16.msra.mxu0 %v1405
    %2516 = vmatprep.subr.bf16.mxu0 0
    %2517 = vmatpush1.bf16.msra.mxu0 %v1406
    %2518 = vmatprep.subr.bf16.mxu0 0
    %2519 = vmatpush1.bf16.msra.mxu0 %v1407
    %2520 = vmatprep.subr.bf16.mxu0 0
    %2521 = vmatpush1.bf16.msra.mxu0 %v1408
    %2522 = vmatprep.subr.bf16.mxu0 0
    %2523 = vmatpush1.bf16.msra.mxu0 %v1409
    %2524 = vmatprep.subr.bf16.mxu0 0
    %2525 = vmatpush1.bf16.msra.mxu0 %v1410
    %2526 = vmatprep.subr.bf16.mxu0 0
    %2527 = vmatpush1.bf16.msra.mxu0 %v1411
    %2528 = vmatprep.subr.bf16.mxu0 0
    %2529 = vmatpush1.bf16.msra.mxu0 %v1412
    %2530 = vmatprep.subr.bf16.mxu0 0
    %2531 = vmatpush1.bf16.msra.mxu0 %v1413
    %2532 = vmatprep.subr.bf16.mxu0 0
    %2533 = vmatpush1.bf16.msra.mxu0 %v1414
    %2534 = vmatprep.subr.bf16.mxu0 0
    %2535 = vmatpush1.bf16.msra.mxu0 %v1415
    %2536 = vmatprep.mubr.bf16.mxu0 %v725
    %2537 = vmatmul.mubr.bf16.gmra.mrb[0].mxu0 %v724
    %v2538 = vpop.f32.mrb[0].mxu0
    %v2539 = vadd.f32 %v2499, %v2538
    %v2540 = vpop.f32.mrb[0].mxu0
    %v2541 = vpop.f32.mrb[0].mxu0
    %v2542 = vpop.f32.mrb[0].mxu0
    %2543 = vdwg.mxu0
    %2544 = vmatprep.subr.bf16.mxu0 0
    %2545 = vmatpush1.bf16.msra.mxu0 %v1416
    %2546 = vmatprep.subr.bf16.mxu0 0
    %2547 = vmatpush1.bf16.msra.mxu0 %v1417
    %2548 = vmatprep.subr.bf16.mxu0 0
    %2549 = vmatpush1.bf16.msra.mxu0 %v1418
    %2550 = vmatprep.subr.bf16.mxu0 0
    %2551 = vmatpush1.bf16.msra.mxu0 %v1419
    %2552 = vmatprep.subr.bf16.mxu0 0
    %2553 = vmatpush1.bf16.msra.mxu0 %v1420
    %2554 = vmatprep.subr.bf16.mxu0 0
    %2555 = vmatpush1.bf16.msra.mxu0 %v1421
    %2556 = vmatprep.subr.bf16.mxu0 0
    %2557 = vmatpush1.bf16.msra.mxu0 %v1422
    %2558 = vmatprep.subr.bf16.mxu0 0
    %2559 = vmatpush1.bf16.msra.mxu0 %v1423
    %2560 = vmatprep.subr.bf16.mxu0 0
    %2561 = vmatpush1.bf16.msra.mxu0 %v1424
    %2562 = vmatprep.subr.bf16.mxu0 0
    %2563 = vmatpush1.bf16.msra.mxu0 %v1425
    %2564 = vmatprep.subr.bf16.mxu0 0
    %2565 = vmatpush1.bf16.msra.mxu0 %v1426
    %2566 = vmatprep.subr.bf16.mxu0 0
    %2567 = vmatpush1.bf16.msra.mxu0 %v1427
    %2568 = vmatprep.subr.bf16.mxu0 0
    %2569 = vmatpush1.bf16.msra.mxu0 %v1428
    %2570 = vmatprep.subr.bf16.mxu0 0
    %2571 = vmatpush1.bf16.msra.mxu0 %v1429
    %2572 = vmatprep.subr.bf16.mxu0 0
    %2573 = vmatpush1.bf16.msra.mxu0 %v1430
    %2574 = vmatprep.subr.bf16.mxu0 0
    %2575 = vmatpush1.bf16.msra.mxu0 %v1431
    %2576 = vmatprep.mubr.bf16.mxu0 %v727
    %2577 = vmatmul.mubr.bf16.gmra.mrb[0].mxu0 %v726
    %v2578 = vpop.f32.mrb[0].mxu0
    %v2579 = vadd.f32 %v2539, %v2578
    %v2580 = vpop.f32.mrb[0].mxu0
    %v2581 = vpop.f32.mrb[0].mxu0
    %v2582 = vpop.f32.mrb[0].mxu0
    %2583 = vdwg.mxu0
    %2584 = vmatprep.subr.bf16.mxu0 0
    %2585 = vmatpush1.bf16.msra.mxu0 %v1432
    %2586 = vmatprep.subr.bf16.mxu0 0
    %2587 = vmatpush1.bf16.msra.mxu0 %v1433
    %2588 = vmatprep.subr.bf16.mxu0 0
    %2589 = vmatpush1.bf16.msra.mxu0 %v1434
    %2590 = vmatprep.subr.bf16.mxu0 0
    %2591 = vmatpush1.bf16.msra.mxu0 %v1435
    %2592 = vmatprep.subr.bf16.mxu0 0
    %2593 = vmatpush1.bf16.msra.mxu0 %v1436
    %2594 = vmatprep.subr.bf16.mxu0 0
    %2595 = vmatpush1.bf16.msra.mxu0 %v1437
    %2596 = vmatprep.subr.bf16.mxu0 0
    %2597 = vmatpush1.bf16.msra.mxu0 %v1438
    %2598 = vmatprep.subr.bf16.mxu0 0
    %2599 = vmatpush1.bf16.msra.mxu0 %v1439
    %2600 = vmatprep.subr.bf16.mxu0 0
    %2601 = vmatpush1.bf16.msra.mxu0 %v1440
    %2602 = vmatprep.subr.bf16.mxu0 0
    %2603 = vmatpush1.bf16.msra.mxu0 %v1441
    %2604 = vmatprep.subr.bf16.mxu0 0
    %2605 = vmatpush1.bf16.msra.mxu0 %v1442
    %2606 = vmatprep.subr.bf16.mxu0 0
    %2607 = vmatpush1.bf16.msra.mxu0 %v1443
    %2608 = vmatprep.subr.bf16.mxu0 0
    %2609 = vmatpush1.bf16.msra.mxu0 %v1444
    %2610 = vmatprep.subr.bf16.mxu0 0
    %2611 = vmatpush1.bf16.msra.mxu0 %v1445
    %2612 = vmatprep.subr.bf16.mxu0 0
    %2613 = vmatpush1.bf16.msra.mxu0 %v1446
    %2614 = vmatprep.subr.bf16.mxu0 0
    %2615 = vmatpush1.bf16.msra.mxu0 %v1447
    %2616 = vmatprep.mubr.bf16.mxu0 %v729
    %2617 = vmatmul.mubr.bf16.gmra.mrb[0].mxu0 %v728
    %v2618 = vpop.f32.mrb[0].mxu0
    %v2619 = vadd.f32 %v2579, %v2618
    %v2620 = vpop.f32.mrb[0].mxu0
    %v2621 = vpop.f32.mrb[0].mxu0
    %v2622 = vpop.f32.mrb[0].mxu0
    %2623 = vdwg.mxu0
    %2624 = vmatprep.subr.bf16.mxu0 0
    %2625 = vmatpush1.bf16.msra.mxu0 %v1448
    %2626 = vmatprep.subr.bf16.mxu0 0
    %2627 = vmatpush1.bf16.msra.mxu0 %v1449
    %2628 = vmatprep.subr.bf16.mxu0 0
    %2629 = vmatpush1.bf16.msra.mxu0 %v1450
    %2630 = vmatprep.subr.bf16.mxu0 0
    %2631 = vmatpush1.bf16.msra.mxu0 %v1451
    %2632 = vmatprep.subr.bf16.mxu0 0
    %2633 = vmatpush1.bf16.msra.mxu0 %v1452
    %2634 = vmatprep.subr.bf16.mxu0 0
    %2635 = vmatpush1.bf16.msra.mxu0 %v1453
    %2636 = vmatprep.subr.bf16.mxu0 0
    %2637 = vmatpush1.bf16.msra.mxu0 %v1454
    %2638 = vmatprep.subr.bf16.mxu0 0
    %2639 = vmatpush1.bf16.msra.mxu0 %v1455
    %2640 = vmatprep.subr.bf16.mxu0 0
    %2641 = vmatpush1.bf16.msra.mxu0 %v1456
    %2642 = vmatprep.subr.bf16.mxu0 0
    %2643 = vmatpush1.bf16.msra.mxu0 %v1457
    %2644 = vmatprep.subr.bf16.mxu0 0
    %2645 = vmatpush1.bf16.msra.mxu0 %v1458
    %2646 = vmatprep.subr.bf16.mxu0 0
    %2647 = vmatpush1.bf16.msra.mxu0 %v1459
    %2648 = vmatprep.subr.bf16.mxu0 0
    %2649 = vmatpush1.bf16.msra.mxu0 %v1460
    %2650 = vmatprep.subr.bf16.mxu0 0
    %2651 = vmatpush1.bf16.msra.mxu0 %v1461
    %2652 = vmatprep.subr.bf16.mxu0 0
    %2653 = vmatpush1.bf16.msra.mxu0 %v1462
    %2654 = vmatprep.subr.bf16.mxu0 0
    %2655 = vmatpush1.bf16.msra.mxu0 %v1463
    %2656 = vmatprep.mubr.bf16.mxu0 %v731
    %2657 = vmatmul.mubr.bf16.gmra.mrb[0].mxu0 %v730
    %v2658 = vpop.f32.mrb[0].mxu0
    %v2659 = vadd.f32 %v2619, %v2658
    %v2660 = vpop.f32.mrb[0].mxu0
    %v2661 = vpop.f32.mrb[0].mxu0
    %v2662 = vpop.f32.mrb[0].mxu0
    %2663 = vdwg.mxu0
    %2664 = vmatprep.subr.bf16.mxu0 0
    %2665 = vmatpush1.bf16.msra.mxu0 %v1464
    %2666 = vmatprep.subr.bf16.mxu0 0
    %2667 = vmatpush1.bf16.msra.mxu0 %v1465
    %2668 = vmatprep.subr.bf16.mxu0 0
    %2669 = vmatpush1.bf16.msra.mxu0 %v1466
    %2670 = vmatprep.subr.bf16.mxu0 0
    %2671 = vmatpush1.bf16.msra.mxu0 %v1467
    %2672 = vmatprep.subr.bf16.mxu0 0
    %2673 = vmatpush1.bf16.msra.mxu0 %v1468
    %2674 = vmatprep.subr.bf16.mxu0 0
    %2675 = vmatpush1.bf16.msra.mxu0 %v1469
    %2676 = vmatprep.subr.bf16.mxu0 0
    %2677 = vmatpush1.bf16.msra.mxu0 %v1470
    %2678 = vmatprep.subr.bf16.mxu0 0
    %2679 = vmatpush1.bf16.msra.mxu0 %v1471
    %2680 = vmatprep.subr.bf16.mxu0 0
    %2681 = vmatpush1.bf16.msra.mxu0 %v1472
    %2682 = vmatprep.subr.bf16.mxu0 0
    %2683 = vmatpush1.bf16.msra.mxu0 %v1473
    %2684 = vmatprep.subr.bf16.mxu0 0
    %2685 = vmatpush1.bf16.msra.mxu0 %v1474
    %2686 = vmatprep.subr.bf16.mxu0 0
    %2687 = vmatpush1.bf16.msra.mxu0 %v1475
    %2688 = vmatprep.subr.bf16.mxu0 0
    %2689 = vmatpush1.bf16.msra.mxu0 %v1476
    %2690 = vmatprep.subr.bf16.mxu0 0
    %2691 = vmatpush1.bf16.msra.mxu0 %v1477
    %2692 = vmatprep.subr.bf16.mxu0 0
    %2693 = vmatpush1.bf16.msra.mxu0 %v1478
    %2694 = vmatprep.subr.bf16.mxu0 0
    %2695 = vmatpush1.bf16.msra.mxu0 %v1479
    %2696 = vmatprep.mubr.bf16.mxu0 %v733
    %2697 = vmatmul.mubr.bf16.gmra.mrb[0].mxu0 %v732
    %v2698 = vpop.f32.mrb[0].mxu0
    %v2699 = vadd.f32 %v2659, %v2698
    %v2700 = vpop.f32.mrb[0].mxu0
    %v2701 = vpop.f32.mrb[0].mxu0
    %v2702 = vpop.f32.mrb[0].mxu0
    %2703 = vdwg.mxu0
    %2704 = vmatprep.subr.bf16.mxu0 0
    %2705 = vmatpush1.bf16.msra.mxu0 %v1480
    %2706 = vmatprep.subr.bf16.mxu0 0
    %2707 = vmatpush1.bf16.msra.mxu0 %v1481
    %2708 = vmatprep.subr.bf16.mxu0 0
    %2709 = vmatpush1.bf16.msra.mxu0 %v1482
    %2710 = vmatprep.subr.bf16.mxu0 0
    %2711 = vmatpush1.bf16.msra.mxu0 %v1483
    %2712 = vmatprep.subr.bf16.mxu0 0
    %2713 = vmatpush1.bf16.msra.mxu0 %v1484
    %2714 = vmatprep.subr.bf16.mxu0 0
    %2715 = vmatpush1.bf16.msra.mxu0 %v1485
    %2716 = vmatprep.subr.bf16.mxu0 0
    %2717 = vmatpush1.bf16.msra.mxu0 %v1486
    %2718 = vmatprep.subr.bf16.mxu0 0
    %2719 = vmatpush1.bf16.msra.mxu0 %v1487
    %2720 = vmatprep.subr.bf16.mxu0 0
    %2721 = vmatpush1.bf16.msra.mxu0 %v1488
    %2722 = vmatprep.subr.bf16.mxu0 0
    %2723 = vmatpush1.bf16.msra.mxu0 %v1489
    %2724 = vmatprep.subr.bf16.mxu0 0
    %2725 = vmatpush1.bf16.msra.mxu0 %v1490
    %2726 = vmatprep.subr.bf16.mxu0 0
    %2727 = vmatpush1.bf16.msra.mxu0 %v1491
    %2728 = vmatprep.subr.bf16.mxu0 0
    %2729 = vmatpush1.bf16.msra.mxu0 %v1492
    %2730 = vmatprep.subr.bf16.mxu0 0
    %2731 = vmatpush1.bf16.msra.mxu0 %v1493
    %2732 = vmatprep.subr.bf16.mxu0 0
    %2733 = vmatpush1.bf16.msra.mxu0 %v1494
    %2734 = vmatprep.subr.bf16.mxu0 0
    %2735 = vmatpush1.bf16.msra.mxu0 %v1495
    %2736 = vmatprep.mubr.bf16.mxu0 %v735
    %2737 = vmatmul.mubr.bf16.gmra.mrb[0].mxu0 %v734
    %v2738 = vpop.f32.mrb[0].mxu0
    %v2739 = vadd.f32 %v2699, %v2738
    %v2740 = vpop.f32.mrb[0].mxu0
    %v2741 = vpop.f32.mrb[0].mxu0
    %v2742 = vpop.f32.mrb[0].mxu0
    %2743 = vdwg.mxu0
    %2744 = vmatprep.subr.bf16.mxu0 0
    %2745 = vmatpush1.bf16.msra.mxu0 %v1496
    %2746 = vmatprep.subr.bf16.mxu0 0
    %2747 = vmatpush1.bf16.msra.mxu0 %v1497
    %2748 = vmatprep.subr.bf16.mxu0 0
    %2749 = vmatpush1.bf16.msra.mxu0 %v1498
    %2750 = vmatprep.subr.bf16.mxu0 0
    %2751 = vmatpush1.bf16.msra.mxu0 %v1499
    %2752 = vmatprep.subr.bf16.mxu0 0
    %2753 = vmatpush1.bf16.msra.mxu0 %v1500
    %2754 = vmatprep.subr.bf16.mxu0 0
    %2755 = vmatpush1.bf16.msra.mxu0 %v1501
    %2756 = vmatprep.subr.bf16.mxu0 0
    %2757 = vmatpush1.bf16.msra.mxu0 %v1502
    %2758 = vmatprep.subr.bf16.mxu0 0
    %2759 = vmatpush1.bf16.msra.mxu0 %v1503
    %2760 = vmatprep.subr.bf16.mxu0 0
    %2761 = vmatpush1.bf16.msra.mxu0 %v1504
    %2762 = vmatprep.subr.bf16.mxu0 0
    %2763 = vmatpush1.bf16.msra.mxu0 %v1505
    %2764 = vmatprep.subr.bf16.mxu0 0
    %2765 = vmatpush1.bf16.msra.mxu0 %v1506
    %2766 = vmatprep.subr.bf16.mxu0 0
    %2767 = vmatpush1.bf16.msra.mxu0 %v1507
    %2768 = vmatprep.subr.bf16.mxu0 0
    %2769 = vmatpush1.bf16.msra.mxu0 %v1508
    %2770 = vmatprep.subr.bf16.mxu0 0
    %2771 = vmatpush1.bf16.msra.mxu0 %v1509
    %2772 = vmatprep.subr.bf16.mxu0 0
    %2773 = vmatpush1.bf16.msra.mxu0 %v1510
    %2774 = vmatprep.subr.bf16.mxu0 0
    %2775 = vmatpush1.bf16.msra.mxu0 %v1511
    %2776 = vmatprep.mubr.bf16.mxu0 %v737
    %2777 = vmatmul.mubr.bf16.gmra.mrb[0].mxu0 %v736
    %v2778 = vpop.f32.mrb[0].mxu0
    %v2779 = vadd.f32 %v2739, %v2778
    %v2780 = vpop.f32.mrb[0].mxu0
    %v2781 = vpop.f32.mrb[0].mxu0
    %v2782 = vpop.f32.mrb[0].mxu0
    %2783 = vdwg.mxu0
    %2784 = vmatprep.subr.bf16.mxu0 0
    %2785 = vmatpush1.bf16.msra.mxu0 %v1512
    %2786 = vmatprep.subr.bf16.mxu0 0
    %2787 = vmatpush1.bf16.msra.mxu0 %v1513
    %2788 = vmatprep.subr.bf16.mxu0 0
    %2789 = vmatpush1.bf16.msra.mxu0 %v1514
    %2790 = vmatprep.subr.bf16.mxu0 0
    %2791 = vmatpush1.bf16.msra.mxu0 %v1515
    %2792 = vmatprep.subr.bf16.mxu0 0
    %2793 = vmatpush1.bf16.msra.mxu0 %v1516
    %2794 = vmatprep.subr.bf16.mxu0 0
    %2795 = vmatpush1.bf16.msra.mxu0 %v1517
    %2796 = vmatprep.subr.bf16.mxu0 0
    %2797 = vmatpush1.bf16.msra.mxu0 %v1518
    %2798 = vmatprep.subr.bf16.mxu0 0
    %2799 = vmatpush1.bf16.msra.mxu0 %v1519
    %2800 = vmatprep.subr.bf16.mxu0 0
    %2801 = vmatpush1.bf16.msra.mxu0 %v1520
    %2802 = vmatprep.subr.bf16.mxu0 0
    %2803 = vmatpush1.bf16.msra.mxu0 %v1521
    %2804 = vmatprep.subr.bf16.mxu0 0
    %2805 = vmatpush1.bf16.msra.mxu0 %v1522
    %2806 = vmatprep.subr.bf16.mxu0 0
    %2807 = vmatpush1.bf16.msra.mxu0 %v1523
    %2808 = vmatprep.subr.bf16.mxu0 0
    %2809 = vmatpush1.bf16.msra.mxu0 %v1524
    %2810 = vmatprep.subr.bf16.mxu0 0
    %2811 = vmatpush1.bf16.msra.mxu0 %v1525
    %2812 = vmatprep.subr.bf16.mxu0 0
    %2813 = vmatpush1.bf16.msra.mxu0 %v1526
    %2814 = vmatprep.subr.bf16.mxu0 0
    %2815 = vmatpush1.bf16.msra.mxu0 %v1527
    %2816 = vmatprep.mubr.bf16.mxu0 %v739
    %2817 = vmatmul.mubr.bf16.gmra.mrb[0].mxu0 %v738
    %v2818 = vpop.f32.mrb[0].mxu0
    %v2819 = vadd.f32 %v2779, %v2818
    %v2820 = vpop.f32.mrb[0].mxu0
    %v2821 = vpop.f32.mrb[0].mxu0
    %v2822 = vpop.f32.mrb[0].mxu0
    %2823 = vdwg.mxu0
    %2824 = vmatprep.subr.bf16.mxu0 0
    %2825 = vmatpush1.bf16.msra.mxu0 %v1528
    %2826 = vmatprep.subr.bf16.mxu0 0
    %2827 = vmatpush1.bf16.msra.mxu0 %v1529
    %2828 = vmatprep.subr.bf16.mxu0 0
    %2829 = vmatpush1.bf16.msra.mxu0 %v1530
    %2830 = vmatprep.subr.bf16.mxu0 0
    %2831 = vmatpush1.bf16.msra.mxu0 %v1531
    %2832 = vmatprep.subr.bf16.mxu0 0
    %2833 = vmatpush1.bf16.msra.mxu0 %v1532
    %2834 = vmatprep.subr.bf16.mxu0 0
    %2835 = vmatpush1.bf16.msra.mxu0 %v1533
    %2836 = vmatprep.subr.bf16.mxu0 0
    %2837 = vmatpush1.bf16.msra.mxu0 %v1534
    %2838 = vmatprep.subr.bf16.mxu0 0
    %2839 = vmatpush1.bf16.msra.mxu0 %v1535
    %2840 = vmatprep.subr.bf16.mxu0 0
    %2841 = vmatpush1.bf16.msra.mxu0 %v1536
    %2842 = vmatprep.subr.bf16.mxu0 0
    %2843 = vmatpush1.bf16.msra.mxu0 %v1537
    %2844 = vmatprep.subr.bf16.mxu0 0
    %2845 = vmatpush1.bf16.msra.mxu0 %v1538
    %2846 = vmatprep.subr.bf16.mxu0 0
    %2847 = vmatpush1.bf16.msra.mxu0 %v1539
    %2848 = vmatprep.subr.bf16.mxu0 0
    %2849 = vmatpush1.bf16.msra.mxu0 %v1540
    %2850 = vmatprep.subr.bf16.mxu0 0
    %2851 = vmatpush1.bf16.msra.mxu0 %v1541
    %2852 = vmatprep.subr.bf16.mxu0 0
    %2853 = vmatpush1.bf16.msra.mxu0 %v1542
    %2854 = vmatprep.subr.bf16.mxu0 0
    %2855 = vmatpush1.bf16.msra.mxu0 %v1543
    %2856 = vmatprep.mubr.bf16.mxu0 %v741
    %2857 = vmatmul.mubr.bf16.gmra.mrb[0].mxu0 %v740
    %v2858 = vpop.f32.mrb[0].mxu0
    %v2859 = vadd.f32 %v2819, %v2858
    %v2860 = vpop.f32.mrb[0].mxu0
    %v2861 = vpop.f32.mrb[0].mxu0
    %v2862 = vpop.f32.mrb[0].mxu0
    %2863 = vdwg.mxu0
    %2864 = vmatprep.subr.bf16.mxu0 0
    %2865 = vmatpush1.bf16.msra.mxu0 %v1544
    %2866 = vmatprep.subr.bf16.mxu0 0
    %2867 = vmatpush1.bf16.msra.mxu0 %v1545
    %2868 = vmatprep.subr.bf16.mxu0 0
    %2869 = vmatpush1.bf16.msra.mxu0 %v1546
    %2870 = vmatprep.subr.bf16.mxu0 0
    %2871 = vmatpush1.bf16.msra.mxu0 %v1547
    %2872 = vmatprep.subr.bf16.mxu0 0
    %2873 = vmatpush1.bf16.msra.mxu0 %v1548
    %2874 = vmatprep.subr.bf16.mxu0 0
    %2875 = vmatpush1.bf16.msra.mxu0 %v1549
    %2876 = vmatprep.subr.bf16.mxu0 0
    %2877 = vmatpush1.bf16.msra.mxu0 %v1550
    %2878 = vmatprep.subr.bf16.mxu0 0
    %2879 = vmatpush1.bf16.msra.mxu0 %v1551
    %2880 = vmatprep.subr.bf16.mxu0 0
    %2881 = vmatpush1.bf16.msra.mxu0 %v1552
    %2882 = vmatprep.subr.bf16.mxu0 0
    %2883 = vmatpush1.bf16.msra.mxu0 %v1553
    %2884 = vmatprep.subr.bf16.mxu0 0
    %2885 = vmatpush1.bf16.msra.mxu0 %v1554
    %2886 = vmatprep.subr.bf16.mxu0 0
    %2887 = vmatpush1.bf16.msra.mxu0 %v1555
    %2888 = vmatprep.subr.bf16.mxu0 0
    %2889 = vmatpush1.bf16.msra.mxu0 %v1556
    %2890 = vmatprep.subr.bf16.mxu0 0
    %2891 = vmatpush1.bf16.msra.mxu0 %v1557
    %2892 = vmatprep.subr.bf16.mxu0 0
    %2893 = vmatpush1.bf16.msra.mxu0 %v1558
    %2894 = vmatprep.subr.bf16.mxu0 0
    %2895 = vmatpush1.bf16.msra.mxu0 %v1559
    %2896 = vmatprep.mubr.bf16.mxu0 %v743
    %2897 = vmatmul.mubr.bf16.gmra.mrb[0].mxu0 %v742
    %v2898 = vpop.f32.mrb[0].mxu0
    %v2899 = vadd.f32 %v2859, %v2898
    %v2900 = vpop.f32.mrb[0].mxu0
    %v2901 = vpop.f32.mrb[0].mxu0
    %v2902 = vpop.f32.mrb[0].mxu0
    %2903 = vdwg.mxu0
    %2904 = vmatprep.subr.bf16.mxu0 0
    %2905 = vmatpush1.bf16.msra.mxu0 %v1560
    %2906 = vmatprep.subr.bf16.mxu0 0
    %2907 = vmatpush1.bf16.msra.mxu0 %v1561
    %2908 = vmatprep.subr.bf16.mxu0 0
    %2909 = vmatpush1.bf16.msra.mxu0 %v1562
    %2910 = vmatprep.subr.bf16.mxu0 0
    %2911 = vmatpush1.bf16.msra.mxu0 %v1563
    %2912 = vmatprep.subr.bf16.mxu0 0
    %2913 = vmatpush1.bf16.msra.mxu0 %v1564
    %2914 = vmatprep.subr.bf16.mxu0 0
    %2915 = vmatpush1.bf16.msra.mxu0 %v1565
    %2916 = vmatprep.subr.bf16.mxu0 0
    %2917 = vmatpush1.bf16.msra.mxu0 %v1566
    %2918 = vmatprep.subr.bf16.mxu0 0
    %2919 = vmatpush1.bf16.msra.mxu0 %v1567
    %2920 = vmatprep.subr.bf16.mxu0 0
    %2921 = vmatpush1.bf16.msra.mxu0 %v1568
    %2922 = vmatprep.subr.bf16.mxu0 0
    %2923 = vmatpush1.bf16.msra.mxu0 %v1569
    %2924 = vmatprep.subr.bf16.mxu0 0
    %2925 = vmatpush1.bf16.msra.mxu0 %v1570
    %2926 = vmatprep.subr.bf16.mxu0 0
    %2927 = vmatpush1.bf16.msra.mxu0 %v1571
    %2928 = vmatprep.subr.bf16.mxu0 0
    %2929 = vmatpush1.bf16.msra.mxu0 %v1572
    %2930 = vmatprep.subr.bf16.mxu0 0
    %2931 = vmatpush1.bf16.msra.mxu0 %v1573
    %2932 = vmatprep.subr.bf16.mxu0 0
    %2933 = vmatpush1.bf16.msra.mxu0 %v1574
    %2934 = vmatprep.subr.bf16.mxu0 0
    %2935 = vmatpush1.bf16.msra.mxu0 %v1575
    %2936 = vmatprep.mubr.bf16.mxu0 %v745
    %2937 = vmatmul.mubr.bf16.gmra.mrb[0].mxu0 %v744
    %v2938 = vpop.f32.mrb[0].mxu0
    %v2939 = vadd.f32 %v2899, %v2938
    %v2940 = vpop.f32.mrb[0].mxu0
    %v2941 = vpop.f32.mrb[0].mxu0
    %v2942 = vpop.f32.mrb[0].mxu0
    %2943 = vdwg.mxu0
    %2944 = vmatprep.subr.bf16.mxu0 0
    %2945 = vmatpush1.bf16.msra.mxu0 %v1576
    %2946 = vmatprep.subr.bf16.mxu0 0
    %2947 = vmatpush1.bf16.msra.mxu0 %v1577
    %2948 = vmatprep.subr.bf16.mxu0 0
    %2949 = vmatpush1.bf16.msra.mxu0 %v1578
    %2950 = vmatprep.subr.bf16.mxu0 0
    %2951 = vmatpush1.bf16.msra.mxu0 %v1579
    %2952 = vmatprep.subr.bf16.mxu0 0
    %2953 = vmatpush1.bf16.msra.mxu0 %v1580
    %2954 = vmatprep.subr.bf16.mxu0 0
    %2955 = vmatpush1.bf16.msra.mxu0 %v1581
    %2956 = vmatprep.subr.bf16.mxu0 0
    %2957 = vmatpush1.bf16.msra.mxu0 %v1582
    %2958 = vmatprep.subr.bf16.mxu0 0
    %2959 = vmatpush1.bf16.msra.mxu0 %v1583
    %2960 = vmatprep.subr.bf16.mxu0 0
    %2961 = vmatpush1.bf16.msra.mxu0 %v1584
    %2962 = vmatprep.subr.bf16.mxu0 0
    %2963 = vmatpush1.bf16.msra.mxu0 %v1585
    %2964 = vmatprep.subr.bf16.mxu0 0
    %2965 = vmatpush1.bf16.msra.mxu0 %v1586
    %2966 = vmatprep.subr.bf16.mxu0 0
    %2967 = vmatpush1.bf16.msra.mxu0 %v1587
    %2968 = vmatprep.subr.bf16.mxu0 0
    %2969 = vmatpush1.bf16.msra.mxu0 %v1588
    %2970 = vmatprep.subr.bf16.mxu0 0
    %2971 = vmatpush1.bf16.msra.mxu0 %v1589
    %2972 = vmatprep.subr.bf16.mxu0 0
    %2973 = vmatpush1.bf16.msra.mxu0 %v1590
    %2974 = vmatprep.subr.bf16.mxu0 0
    %2975 = vmatpush1.bf16.msra.mxu0 %v1591
    %2976 = vmatprep.mubr.bf16.mxu0 %v747
    %2977 = vmatmul.mubr.bf16.gmra.mrb[0].mxu0 %v746
    %v2978 = vpop.f32.mrb[0].mxu0
    %v2979 = vadd.f32 %v2939, %v2978
    %v2980 = vpop.f32.mrb[0].mxu0
    %v2981 = vpop.f32.mrb[0].mxu0
    %v2982 = vpop.f32.mrb[0].mxu0
    %2983 = vdwg.mxu0
    %2984 = vmatprep.subr.bf16.mxu0 0
    %2985 = vmatpush1.bf16.msra.mxu0 %v1592
    %2986 = vmatprep.subr.bf16.mxu0 0
    %2987 = vmatpush1.bf16.msra.mxu0 %v1593
    %2988 = vmatprep.subr.bf16.mxu0 0
    %2989 = vmatpush1.bf16.msra.mxu0 %v1594
    %2990 = vmatprep.subr.bf16.mxu0 0
    %2991 = vmatpush1.bf16.msra.mxu0 %v1595
    %2992 = vmatprep.subr.bf16.mxu0 0
    %2993 = vmatpush1.bf16.msra.mxu0 %v1596
    %2994 = vmatprep.subr.bf16.mxu0 0
    %2995 = vmatpush1.bf16.msra.mxu0 %v1597
    %2996 = vmatprep.subr.bf16.mxu0 0
    %2997 = vmatpush1.bf16.msra.mxu0 %v1598
    %2998 = vmatprep.subr.bf16.mxu0 0
    %2999 = vmatpush1.bf16.msra.mxu0 %v1599
    %3000 = vmatprep.subr.bf16.mxu0 0
    %3001 = vmatpush1.bf16.msra.mxu0 %v1600
    %3002 = vmatprep.subr.bf16.mxu0 0
    %3003 = vmatpush1.bf16.msra.mxu0 %v1601
    %3004 = vmatprep.subr.bf16.mxu0 0
    %3005 = vmatpush1.bf16.msra.mxu0 %v1602
    %3006 = vmatprep.subr.bf16.mxu0 0
    %3007 = vmatpush1.bf16.msra.mxu0 %v1603
    %3008 = vmatprep.subr.bf16.mxu0 0
    %3009 = vmatpush1.bf16.msra.mxu0 %v1604
    %3010 = vmatprep.subr.bf16.mxu0 0
    %3011 = vmatpush1.bf16.msra.mxu0 %v1605
    %3012 = vmatprep.subr.bf16.mxu0 0
    %3013 = vmatpush1.bf16.msra.mxu0 %v1606
    %3014 = vmatprep.subr.bf16.mxu0 0
    %3015 = vmatpush1.bf16.msra.mxu0 %v1607
    %3016 = vmatprep.mubr.bf16.mxu0 %v749
    %3017 = vmatmul.mubr.bf16.gmra.mrb[0].mxu0 %v748
    %v3018 = vpop.f32.mrb[0].mxu0
    %v3019 = vadd.f32 %v2979, %v3018
    %v3020 = vpop.f32.mrb[0].mxu0
    %v3021 = vpop.f32.mrb[0].mxu0
    %v3022 = vpop.f32.mrb[0].mxu0
    %3023 = vdwg.mxu0
    %3024 = vmatprep.subr.bf16.mxu0 0
    %3025 = vmatpush1.bf16.msra.mxu0 %v1608
    %3026 = vmatprep.subr.bf16.mxu0 0
    %3027 = vmatpush1.bf16.msra.mxu0 %v1609
    %3028 = vmatprep.subr.bf16.mxu0 0
    %3029 = vmatpush1.bf16.msra.mxu0 %v1610
    %3030 = vmatprep.subr.bf16.mxu0 0
    %3031 = vmatpush1.bf16.msra.mxu0 %v1611
    %3032 = vmatprep.subr.bf16.mxu0 0
    %3033 = vmatpush1.bf16.msra.mxu0 %v1612
    %3034 = vmatprep.subr.bf16.mxu0 0
    %3035 = vmatpush1.bf16.msra.mxu0 %v1613
    %3036 = vmatprep.subr.bf16.mxu0 0
    %3037 = vmatpush1.bf16.msra.mxu0 %v1614
    %3038 = vmatprep.subr.bf16.mxu0 0
    %3039 = vmatpush1.bf16.msra.mxu0 %v1615
    %3040 = vmatprep.subr.bf16.mxu0 0
    %3041 = vmatpush1.bf16.msra.mxu0 %v1616
    %3042 = vmatprep.subr.bf16.mxu0 0
    %3043 = vmatpush1.bf16.msra.mxu0 %v1617
    %3044 = vmatprep.subr.bf16.mxu0 0
    %3045 = vmatpush1.bf16.msra.mxu0 %v1618
    %3046 = vmatprep.subr.bf16.mxu0 0
    %3047 = vmatpush1.bf16.msra.mxu0 %v1619
    %3048 = vmatprep.subr.bf16.mxu0 0
    %3049 = vmatpush1.bf16.msra.mxu0 %v1620
    %3050 = vmatprep.subr.bf16.mxu0 0
    %3051 = vmatpush1.bf16.msra.mxu0 %v1621
    %3052 = vmatprep.subr.bf16.mxu0 0
    %3053 = vmatpush1.bf16.msra.mxu0 %v1622
    %3054 = vmatprep.subr.bf16.mxu0 0
    %3055 = vmatpush1.bf16.msra.mxu0 %v1623
    %3056 = vmatprep.mubr.bf16.mxu0 %v751
    %3057 = vmatmul.mubr.bf16.gmra.mrb[0].mxu0 %v750
    %v3058 = vpop.f32.mrb[0].mxu0
    %v3059 = vadd.f32 %v3019, %v3058
    %v3060 = vpop.f32.mrb[0].mxu0
    %v3061 = vpop.f32.mrb[0].mxu0
    %v3062 = vpop.f32.mrb[0].mxu0
    %3063 = vdwg.mxu0
    %3064 = vmatprep.subr.bf16.mxu0 0
    %3065 = vmatpush1.bf16.msra.mxu0 %v1624
    %3066 = vmatprep.subr.bf16.mxu0 0
    %3067 = vmatpush1.bf16.msra.mxu0 %v1625
    %3068 = vmatprep.subr.bf16.mxu0 0
    %3069 = vmatpush1.bf16.msra.mxu0 %v1626
    %3070 = vmatprep.subr.bf16.mxu0 0
    %3071 = vmatpush1.bf16.msra.mxu0 %v1627
    %3072 = vmatprep.subr.bf16.mxu0 0
    %3073 = vmatpush1.bf16.msra.mxu0 %v1628
    %3074 = vmatprep.subr.bf16.mxu0 0
    %3075 = vmatpush1.bf16.msra.mxu0 %v1629
    %3076 = vmatprep.subr.bf16.mxu0 0
    %3077 = vmatpush1.bf16.msra.mxu0 %v1630
    %3078 = vmatprep.subr.bf16.mxu0 0
    %3079 = vmatpush1.bf16.msra.mxu0 %v1631
    %3080 = vmatprep.subr.bf16.mxu0 0
    %3081 = vmatpush1.bf16.msra.mxu0 %v1632
    %3082 = vmatprep.subr.bf16.mxu0 0
    %3083 = vmatpush1.bf16.msra.mxu0 %v1633
    %3084 = vmatprep.subr.bf16.mxu0 0
    %3085 = vmatpush1.bf16.msra.mxu0 %v1634
    %3086 = vmatprep.subr.bf16.mxu0 0
    %3087 = vmatpush1.bf16.msra.mxu0 %v1635
    %3088 = vmatprep.subr.bf16.mxu0 0
    %3089 = vmatpush1.bf16.msra.mxu0 %v1636
    %3090 = vmatprep.subr.bf16.mxu0 0
    %3091 = vmatpush1.bf16.msra.mxu0 %v1637
    %3092 = vmatprep.subr.bf16.mxu0 0
    %3093 = vmatpush1.bf16.msra.mxu0 %v1638
    %3094 = vmatprep.subr.bf16.mxu0 0
    %3095 = vmatpush1.bf16.msra.mxu0 %v1639
    %3096 = vmatprep.mubr.bf16.mxu0 %v753
    %3097 = vmatmul.mubr.bf16.gmra.mrb[0].mxu0 %v752
    %v3098 = vpop.f32.mrb[0].mxu0
    %v3099 = vadd.f32 %v3059, %v3098
    %v3100 = vpop.f32.mrb[0].mxu0
    %v3101 = vpop.f32.mrb[0].mxu0
    %v3102 = vpop.f32.mrb[0].mxu0
    %3103 = vdwg.mxu0
    %3104 = vmatprep.subr.bf16.mxu0 0
    %3105 = vmatpush1.bf16.msra.mxu0 %v1640
    %3106 = vmatprep.subr.bf16.mxu0 0
    %3107 = vmatpush1.bf16.msra.mxu0 %v1641
    %3108 = vmatprep.subr.bf16.mxu0 0
    %3109 = vmatpush1.bf16.msra.mxu0 %v1642
    %3110 = vmatprep.subr.bf16.mxu0 0
    %3111 = vmatpush1.bf16.msra.mxu0 %v1643
    %3112 = vmatprep.subr.bf16.mxu0 0
    %3113 = vmatpush1.bf16.msra.mxu0 %v1644
    %3114 = vmatprep.subr.bf16.mxu0 0
    %3115 = vmatpush1.bf16.msra.mxu0 %v1645
    %3116 = vmatprep.subr.bf16.mxu0 0
    %3117 = vmatpush1.bf16.msra.mxu0 %v1646
    %3118 = vmatprep.subr.bf16.mxu0 0
    %3119 = vmatpush1.bf16.msra.mxu0 %v1647
    %3120 = vmatprep.subr.bf16.mxu0 0
    %3121 = vmatpush1.bf16.msra.mxu0 %v1648
    %3122 = vmatprep.subr.bf16.mxu0 0
    %3123 = vmatpush1.bf16.msra.mxu0 %v1649
    %3124 = vmatprep.subr.bf16.mxu0 0
    %3125 = vmatpush1.bf16.msra.mxu0 %v1650
    %3126 = vmatprep.subr.bf16.mxu0 0
    %3127 = vmatpush1.bf16.msra.mxu0 %v1651
    %3128 = vmatprep.subr.bf16.mxu0 0
    %3129 = vmatpush1.bf16.msra.mxu0 %v1652
    %3130 = vmatprep.subr.bf16.mxu0 0
    %3131 = vmatpush1.bf16.msra.mxu0 %v1653
    %3132 = vmatprep.subr.bf16.mxu0 0
    %3133 = vmatpush1.bf16.msra.mxu0 %v1654
    %3134 = vmatprep.subr.bf16.mxu0 0
    %3135 = vmatpush1.bf16.msra.mxu0 %v1655
    %3136 = vmatprep.mubr.bf16.mxu0 %v755
    %3137 = vmatmul.mubr.bf16.gmra.mrb[0].mxu0 %v754
    %v3138 = vpop.f32.mrb[0].mxu0
    %v3139 = vadd.f32 %v3099, %v3138
    %v3140 = vpop.f32.mrb[0].mxu0
    %v3141 = vpop.f32.mrb[0].mxu0
    %v3142 = vpop.f32.mrb[0].mxu0
    %3143 = vdwg.mxu0
    %3144 = vmatprep.subr.bf16.mxu0 0
    %3145 = vmatpush1.bf16.msra.mxu0 %v1656
    %3146 = vmatprep.subr.bf16.mxu0 0
    %3147 = vmatpush1.bf16.msra.mxu0 %v1657
    %3148 = vmatprep.subr.bf16.mxu0 0
    %3149 = vmatpush1.bf16.msra.mxu0 %v1658
    %3150 = vmatprep.subr.bf16.mxu0 0
    %3151 = vmatpush1.bf16.msra.mxu0 %v1659
    %3152 = vmatprep.subr.bf16.mxu0 0
    %3153 = vmatpush1.bf16.msra.mxu0 %v1660
    %3154 = vmatprep.subr.bf16.mxu0 0
    %3155 = vmatpush1.bf16.msra.mxu0 %v1661
    %3156 = vmatprep.subr.bf16.mxu0 0
    %3157 = vmatpush1.bf16.msra.mxu0 %v1662
    %3158 = vmatprep.subr.bf16.mxu0 0
    %3159 = vmatpush1.bf16.msra.mxu0 %v1663
    %3160 = vmatprep.subr.bf16.mxu0 0
    %3161 = vmatpush1.bf16.msra.mxu0 %v1664
    %3162 = vmatprep.subr.bf16.mxu0 0
    %3163 = vmatpush1.bf16.msra.mxu0 %v1665
    %3164 = vmatprep.subr.bf16.mxu0 0
    %3165 = vmatpush1.bf16.msra.mxu0 %v1666
    %3166 = vmatprep.subr.bf16.mxu0 0
    %3167 = vmatpush1.bf16.msra.mxu0 %v1667
    %3168 = vmatprep.subr.bf16.mxu0 0
    %3169 = vmatpush1.bf16.msra.mxu0 %v1668
    %3170 = vmatprep.subr.bf16.mxu0 0
    %3171 = vmatpush1.bf16.msra.mxu0 %v1669
    %3172 = vmatprep.subr.bf16.mxu0 0
    %3173 = vmatpush1.bf16.msra.mxu0 %v1670
    %3174 = vmatprep.subr.bf16.mxu0 0
    %3175 = vmatpush1.bf16.msra.mxu0 %v1671
    %3176 = vmatprep.mubr.bf16.mxu0 %v757
    %3177 = vmatmul.mubr.bf16.gmra.mrb[0].mxu0 %v756
    %v3178 = vpop.f32.mrb[0].mxu0
    %v3179 = vadd.f32 %v3139, %v3178
    %v3180 = vpop.f32.mrb[0].mxu0
    %v3181 = vpop.f32.mrb[0].mxu0
    %v3182 = vpop.f32.mrb[0].mxu0
    %3183 = vdwg.mxu0
    %3184 = vmatprep.subr.bf16.mxu0 0
    %3185 = vmatpush1.bf16.msra.mxu0 %v1672
    %3186 = vmatprep.subr.bf16.mxu0 0
    %3187 = vmatpush1.bf16.msra.mxu0 %v1673
    %3188 = vmatprep.subr.bf16.mxu0 0
    %3189 = vmatpush1.bf16.msra.mxu0 %v1674
    %3190 = vmatprep.subr.bf16.mxu0 0
    %3191 = vmatpush1.bf16.msra.mxu0 %v1675
    %3192 = vmatprep.subr.bf16.mxu0 0
    %3193 = vmatpush1.bf16.msra.mxu0 %v1676
    %3194 = vmatprep.subr.bf16.mxu0 0
    %3195 = vmatpush1.bf16.msra.mxu0 %v1677
    %3196 = vmatprep.subr.bf16.mxu0 0
    %3197 = vmatpush1.bf16.msra.mxu0 %v1678
    %3198 = vmatprep.subr.bf16.mxu0 0
    %3199 = vmatpush1.bf16.msra.mxu0 %v1679
    %3200 = vmatprep.subr.bf16.mxu0 0
    %3201 = vmatpush1.bf16.msra.mxu0 %v1680
    %3202 = vmatprep.subr.bf16.mxu0 0
    %3203 = vmatpush1.bf16.msra.mxu0 %v1681
    %3204 = vmatprep.subr.bf16.mxu0 0
    %3205 = vmatpush1.bf16.msra.mxu0 %v1682
    %3206 = vmatprep.subr.bf16.mxu0 0
    %3207 = vmatpush1.bf16.msra.mxu0 %v1683
    %3208 = vmatprep.subr.bf16.mxu0 0
    %3209 = vmatpush1.bf16.msra.mxu0 %v1684
    %3210 = vmatprep.subr.bf16.mxu0 0
    %3211 = vmatpush1.bf16.msra.mxu0 %v1685
    %3212 = vmatprep.subr.bf16.mxu0 0
    %3213 = vmatpush1.bf16.msra.mxu0 %v1686
    %3214 = vmatprep.subr.bf16.mxu0 0
    %3215 = vmatpush1.bf16.msra.mxu0 %v1687
    %3216 = vmatprep.mubr.bf16.mxu0 %v759
    %3217 = vmatmul.mubr.bf16.gmra.mrb[0].mxu0 %v758
    %v3218 = vpop.f32.mrb[0].mxu0
    %v3219 = vadd.f32 %v3179, %v3218
    %v3220 = vpop.f32.mrb[0].mxu0
    %v3221 = vpop.f32.mrb[0].mxu0
    %v3222 = vpop.f32.mrb[0].mxu0
    %3223 = vdwg.mxu0
    %3224 = vmatprep.subr.bf16.mxu0 0
    %3225 = vmatpush1.bf16.msra.mxu0 %v1688
    %3226 = vmatprep.subr.bf16.mxu0 0
    %3227 = vmatpush1.bf16.msra.mxu0 %v1689
    %3228 = vmatprep.subr.bf16.mxu0 0
    %3229 = vmatpush1.bf16.msra.mxu0 %v1690
    %3230 = vmatprep.subr.bf16.mxu0 0
    %3231 = vmatpush1.bf16.msra.mxu0 %v1691
    %3232 = vmatprep.subr.bf16.mxu0 0
    %3233 = vmatpush1.bf16.msra.mxu0 %v1692
    %3234 = vmatprep.subr.bf16.mxu0 0
    %3235 = vmatpush1.bf16.msra.mxu0 %v1693
    %3236 = vmatprep.subr.bf16.mxu0 0
    %3237 = vmatpush1.bf16.msra.mxu0 %v1694
    %3238 = vmatprep.subr.bf16.mxu0 0
    %3239 = vmatpush1.bf16.msra.mxu0 %v1695
    %3240 = vmatprep.subr.bf16.mxu0 0
    %3241 = vmatpush1.bf16.msra.mxu0 %v1696
    %3242 = vmatprep.subr.bf16.mxu0 0
    %3243 = vmatpush1.bf16.msra.mxu0 %v1697
    %3244 = vmatprep.subr.bf16.mxu0 0
    %3245 = vmatpush1.bf16.msra.mxu0 %v1698
    %3246 = vmatprep.subr.bf16.mxu0 0
    %3247 = vmatpush1.bf16.msra.mxu0 %v1699
    %3248 = vmatprep.subr.bf16.mxu0 0
    %3249 = vmatpush1.bf16.msra.mxu0 %v1700
    %3250 = vmatprep.subr.bf16.mxu0 0
    %3251 = vmatpush1.bf16.msra.mxu0 %v1701
    %3252 = vmatprep.subr.bf16.mxu0 0
    %3253 = vmatpush1.bf16.msra.mxu0 %v1702
    %3254 = vmatprep.subr.bf16.mxu0 0
    %3255 = vmatpush1.bf16.msra.mxu0 %v1703
    %3256 = vmatprep.mubr.bf16.mxu0 %v761
    %3257 = vmatmul.mubr.bf16.gmra.mrb[0].mxu0 %v760
    %v3258 = vpop.f32.mrb[0].mxu0
    %v3259 = vadd.f32 %v3219, %v3258
    %v3260 = vpop.f32.mrb[0].mxu0
    %v3261 = vpop.f32.mrb[0].mxu0
    %v3262 = vpop.f32.mrb[0].mxu0
    %3263 = vdwg.mxu0
    %3264 = vmatprep.subr.bf16.mxu0 0
    %3265 = vmatpush1.bf16.msra.mxu0 %v1704
    %3266 = vmatprep.subr.bf16.mxu0 0
    %3267 = vmatpush1.bf16.msra.mxu0 %v1705
    %3268 = vmatprep.subr.bf16.mxu0 0
    %3269 = vmatpush1.bf16.msra.mxu0 %v1706
    %3270 = vmatprep.subr.bf16.mxu0 0
    %3271 = vmatpush1.bf16.msra.mxu0 %v1707
    %3272 = vmatprep.subr.bf16.mxu0 0
    %3273 = vmatpush1.bf16.msra.mxu0 %v1708
    %3274 = vmatprep.subr.bf16.mxu0 0
    %3275 = vmatpush1.bf16.msra.mxu0 %v1709
    %3276 = vmatprep.subr.bf16.mxu0 0
    %3277 = vmatpush1.bf16.msra.mxu0 %v1710
    %3278 = vmatprep.subr.bf16.mxu0 0
    %3279 = vmatpush1.bf16.msra.mxu0 %v1711
    %3280 = vmatprep.subr.bf16.mxu0 0
    %3281 = vmatpush1.bf16.msra.mxu0 %v1712
    %3282 = vmatprep.subr.bf16.mxu0 0
    %3283 = vmatpush1.bf16.msra.mxu0 %v1713
    %3284 = vmatprep.subr.bf16.mxu0 0
    %3285 = vmatpush1.bf16.msra.mxu0 %v1714
    %3286 = vmatprep.subr.bf16.mxu0 0
    %3287 = vmatpush1.bf16.msra.mxu0 %v1715
    %3288 = vmatprep.subr.bf16.mxu0 0
    %3289 = vmatpush1.bf16.msra.mxu0 %v1716
    %3290 = vmatprep.subr.bf16.mxu0 0
    %3291 = vmatpush1.bf16.msra.mxu0 %v1717
    %3292 = vmatprep.subr.bf16.mxu0 0
    %3293 = vmatpush1.bf16.msra.mxu0 %v1718
    %3294 = vmatprep.subr.bf16.mxu0 0
    %3295 = vmatpush1.bf16.msra.mxu0 %v1719
    %3296 = vmatprep.mubr.bf16.mxu0 %v763
    %3297 = vmatmul.mubr.bf16.gmra.mrb[0].mxu0 %v762
    %v3298 = vpop.f32.mrb[0].mxu0
    %v3299 = vadd.f32 %v3259, %v3298
    %v3300 = vpop.f32.mrb[0].mxu0
    %v3301 = vpop.f32.mrb[0].mxu0
    %v3302 = vpop.f32.mrb[0].mxu0
    %3303 = vdwg.mxu0
    %3304 = vmatprep.subr.bf16.mxu0 0
    %3305 = vmatpush1.bf16.msra.mxu0 %v1720
    %3306 = vmatprep.subr.bf16.mxu0 0
    %3307 = vmatpush1.bf16.msra.mxu0 %v1721
    %3308 = vmatprep.subr.bf16.mxu0 0
    %3309 = vmatpush1.bf16.msra.mxu0 %v1722
    %3310 = vmatprep.subr.bf16.mxu0 0
    %3311 = vmatpush1.bf16.msra.mxu0 %v1723
    %3312 = vmatprep.subr.bf16.mxu0 0
    %3313 = vmatpush1.bf16.msra.mxu0 %v1724
    %3314 = vmatprep.subr.bf16.mxu0 0
    %3315 = vmatpush1.bf16.msra.mxu0 %v1725
    %3316 = vmatprep.subr.bf16.mxu0 0
    %3317 = vmatpush1.bf16.msra.mxu0 %v1726
    %3318 = vmatprep.subr.bf16.mxu0 0
    %3319 = vmatpush1.bf16.msra.mxu0 %v1727
    %3320 = vmatprep.subr.bf16.mxu0 0
    %3321 = vmatpush1.bf16.msra.mxu0 %v1728
    %3322 = vmatprep.subr.bf16.mxu0 0
    %3323 = vmatpush1.bf16.msra.mxu0 %v1729
    %3324 = vmatprep.subr.bf16.mxu0 0
    %3325 = vmatpush1.bf16.msra.mxu0 %v1730
    %3326 = vmatprep.subr.bf16.mxu0 0
    %3327 = vmatpush1.bf16.msra.mxu0 %v1731
    %3328 = vmatprep.subr.bf16.mxu0 0
    %3329 = vmatpush1.bf16.msra.mxu0 %v1732
    %3330 = vmatprep.subr.bf16.mxu0 0
    %3331 = vmatpush1.bf16.msra.mxu0 %v1733
    %3332 = vmatprep.subr.bf16.mxu0 0
    %3333 = vmatpush1.bf16.msra.mxu0 %v1734
    %3334 = vmatprep.subr.bf16.mxu0 0
    %3335 = vmatpush1.bf16.msra.mxu0 %v1735
    %3336 = vmatprep.mubr.bf16.mxu0 %v765
    %3337 = vmatmul.mubr.bf16.gmra.mrb[0].mxu0 %v764
    %v3338 = vpop.f32.mrb[0].mxu0
    %v3339 = vadd.f32 %v3299, %v3338
    %v3340 = vpop.f32.mrb[0].mxu0
    %v3341 = vpop.f32.mrb[0].mxu0
    %v3342 = vpop.f32.mrb[0].mxu0
    %3343 = vdwg.mxu0
    %3344 = vmatprep.subr.bf16.mxu0 0
    %3345 = vmatpush1.bf16.msra.mxu0 %v1736
    %3346 = vmatprep.subr.bf16.mxu0 0
    %3347 = vmatpush1.bf16.msra.mxu0 %v1737
    %3348 = vmatprep.subr.bf16.mxu0 0
    %3349 = vmatpush1.bf16.msra.mxu0 %v1738
    %3350 = vmatprep.subr.bf16.mxu0 0
    %3351 = vmatpush1.bf16.msra.mxu0 %v1739
    %3352 = vmatprep.subr.bf16.mxu0 0
    %3353 = vmatpush1.bf16.msra.mxu0 %v1740
    %3354 = vmatprep.subr.bf16.mxu0 0
    %3355 = vmatpush1.bf16.msra.mxu0 %v1741
    %3356 = vmatprep.subr.bf16.mxu0 0
    %3357 = vmatpush1.bf16.msra.mxu0 %v1742
    %3358 = vmatprep.subr.bf16.mxu0 0
    %3359 = vmatpush1.bf16.msra.mxu0 %v1743
    %3360 = vmatprep.subr.bf16.mxu0 0
    %3361 = vmatpush1.bf16.msra.mxu0 %v1744
    %3362 = vmatprep.subr.bf16.mxu0 0
    %3363 = vmatpush1.bf16.msra.mxu0 %v1745
    %3364 = vmatprep.subr.bf16.mxu0 0
    %3365 = vmatpush1.bf16.msra.mxu0 %v1746
    %3366 = vmatprep.subr.bf16.mxu0 0
    %3367 = vmatpush1.bf16.msra.mxu0 %v1747
    %3368 = vmatprep.subr.bf16.mxu0 0
    %3369 = vmatpush1.bf16.msra.mxu0 %v1748
    %3370 = vmatprep.subr.bf16.mxu0 0
    %3371 = vmatpush1.bf16.msra.mxu0 %v1749
    %3372 = vmatprep.subr.bf16.mxu0 0
    %3373 = vmatpush1.bf16.msra.mxu0 %v1750
    %3374 = vmatprep.subr.bf16.mxu0 0
    %3375 = vmatpush1.bf16.msra.mxu0 %v1751
    %3376 = vmatprep.mubr.bf16.mxu0 %v767
    %3377 = vmatmul.mubr.bf16.gmra.mrb[0].mxu0 %v766
    %v3378 = vpop.f32.mrb[0].mxu0
    %v3379 = vadd.f32 %v3339, %v3378
    %v3380 = vpop.f32.mrb[0].mxu0
    %v3381 = vpop.f32.mrb[0].mxu0
    %v3382 = vpop.f32.mrb[0].mxu0
    %3383 = vdwg.mxu0
    %3384 = vmatprep.subr.bf16.mxu0 0
    %3385 = vmatpush1.bf16.msra.mxu0 %v1752
    %3386 = vmatprep.subr.bf16.mxu0 0
    %3387 = vmatpush1.bf16.msra.mxu0 %v1753
    %3388 = vmatprep.subr.bf16.mxu0 0
    %3389 = vmatpush1.bf16.msra.mxu0 %v1754
    %3390 = vmatprep.subr.bf16.mxu0 0
    %3391 = vmatpush1.bf16.msra.mxu0 %v1755
    %3392 = vmatprep.subr.bf16.mxu0 0
    %3393 = vmatpush1.bf16.msra.mxu0 %v1756
    %3394 = vmatprep.subr.bf16.mxu0 0
    %3395 = vmatpush1.bf16.msra.mxu0 %v1757
    %3396 = vmatprep.subr.bf16.mxu0 0
    %3397 = vmatpush1.bf16.msra.mxu0 %v1758
    %3398 = vmatprep.subr.bf16.mxu0 0
    %3399 = vmatpush1.bf16.msra.mxu0 %v1759
    %3400 = vmatprep.subr.bf16.mxu0 0
    %3401 = vmatpush1.bf16.msra.mxu0 %v1760
    %3402 = vmatprep.subr.bf16.mxu0 0
    %3403 = vmatpush1.bf16.msra.mxu0 %v1761
    %3404 = vmatprep.subr.bf16.mxu0 0
    %3405 = vmatpush1.bf16.msra.mxu0 %v1762
    %3406 = vmatprep.subr.bf16.mxu0 0
    %3407 = vmatpush1.bf16.msra.mxu0 %v1763
    %3408 = vmatprep.subr.bf16.mxu0 0
    %3409 = vmatpush1.bf16.msra.mxu0 %v1764
    %3410 = vmatprep.subr.bf16.mxu0 0
    %3411 = vmatpush1.bf16.msra.mxu0 %v1765
    %3412 = vmatprep.subr.bf16.mxu0 0
    %3413 = vmatpush1.bf16.msra.mxu0 %v1766
    %3414 = vmatprep.subr.bf16.mxu0 0
    %3415 = vmatpush1.bf16.msra.mxu0 %v1767
    %3416 = vmatprep.mubr.bf16.mxu0 %v769
    %3417 = vmatmul.mubr.bf16.gmra.mrb[0].mxu0 %v768
    %v3418 = vpop.f32.mrb[0].mxu0
    %v3419 = vadd.f32 %v3379, %v3418
    %v3420 = vpop.f32.mrb[0].mxu0
    %v3421 = vpop.f32.mrb[0].mxu0
    %v3422 = vpop.f32.mrb[0].mxu0
    %3423 = vdwg.mxu0
    %3424 = vmatprep.subr.bf16.mxu0 0
    %3425 = vmatpush1.bf16.msra.mxu0 %v1768
    %3426 = vmatprep.subr.bf16.mxu0 0
    %3427 = vmatpush1.bf16.msra.mxu0 %v1769
    %3428 = vmatprep.subr.bf16.mxu0 0
    %3429 = vmatpush1.bf16.msra.mxu0 %v1770
    %3430 = vmatprep.subr.bf16.mxu0 0
    %3431 = vmatpush1.bf16.msra.mxu0 %v1771
    %3432 = vmatprep.subr.bf16.mxu0 0
    %3433 = vmatpush1.bf16.msra.mxu0 %v1772
    %3434 = vmatprep.subr.bf16.mxu0 0
    %3435 = vmatpush1.bf16.msra.mxu0 %v1773
    %3436 = vmatprep.subr.bf16.mxu0 0
    %3437 = vmatpush1.bf16.msra.mxu0 %v1774
    %3438 = vmatprep.subr.bf16.mxu0 0
    %3439 = vmatpush1.bf16.msra.mxu0 %v1775
    %3440 = vmatprep.subr.bf16.mxu0 0
    %3441 = vmatpush1.bf16.msra.mxu0 %v1776
    %3442 = vmatprep.subr.bf16.mxu0 0
    %3443 = vmatpush1.bf16.msra.mxu0 %v1777
    %3444 = vmatprep.subr.bf16.mxu0 0
    %3445 = vmatpush1.bf16.msra.mxu0 %v1778
    %3446 = vmatprep.subr.bf16.mxu0 0
    %3447 = vmatpush1.bf16.msra.mxu0 %v1779
    %3448 = vmatprep.subr.bf16.mxu0 0
    %3449 = vmatpush1.bf16.msra.mxu0 %v1780
    %3450 = vmatprep.subr.bf16.mxu0 0
    %3451 = vmatpush1.bf16.msra.mxu0 %v1781
    %3452 = vmatprep.subr.bf16.mxu0 0
    %3453 = vmatpush1.bf16.msra.mxu0 %v1782
    %3454 = vmatprep.subr.bf16.mxu0 0
    %3455 = vmatpush1.bf16.msra.mxu0 %v1783
    %3456 = vmatprep.mubr.bf16.mxu0 %v771
    %3457 = vmatmul.mubr.bf16.gmra.mrb[0].mxu0 %v770
    %v3458 = vpop.f32.mrb[0].mxu0
    %v3459 = vadd.f32 %v3419, %v3458
    %v3460 = vpop.f32.mrb[0].mxu0
    %v3461 = vpop.f32.mrb[0].mxu0
    %v3462 = vpop.f32.mrb[0].mxu0
    %3463 = vdwg.mxu0
    %3464 = vmatprep.subr.bf16.mxu0 0
    %3465 = vmatpush1.bf16.msra.mxu0 %v1784
    %3466 = vmatprep.subr.bf16.mxu0 0
    %3467 = vmatpush1.bf16.msra.mxu0 %v1785
    %3468 = vmatprep.subr.bf16.mxu0 0
    %3469 = vmatpush1.bf16.msra.mxu0 %v1786
    %3470 = vmatprep.subr.bf16.mxu0 0
    %3471 = vmatpush1.bf16.msra.mxu0 %v1787
    %3472 = vmatprep.subr.bf16.mxu0 0
    %3473 = vmatpush1.bf16.msra.mxu0 %v1788
    %3474 = vmatprep.subr.bf16.mxu0 0
    %3475 = vmatpush1.bf16.msra.mxu0 %v1789
    %3476 = vmatprep.subr.bf16.mxu0 0
    %3477 = vmatpush1.bf16.msra.mxu0 %v1790
    %3478 = vmatprep.subr.bf16.mxu0 0
    %3479 = vmatpush1.bf16.msra.mxu0 %v1791
    %3480 = vmatprep.subr.bf16.mxu0 0
    %3481 = vmatpush1.bf16.msra.mxu0 %v1792
    %3482 = vmatprep.subr.bf16.mxu0 0
    %3483 = vmatpush1.bf16.msra.mxu0 %v1793
    %3484 = vmatprep.subr.bf16.mxu0 0
    %3485 = vmatpush1.bf16.msra.mxu0 %v1794
    %3486 = vmatprep.subr.bf16.mxu0 0
    %3487 = vmatpush1.bf16.msra.mxu0 %v1795
    %3488 = vmatprep.subr.bf16.mxu0 0
    %3489 = vmatpush1.bf16.msra.mxu0 %v1796
    %3490 = vmatprep.subr.bf16.mxu0 0
    %3491 = vmatpush1.bf16.msra.mxu0 %v1797
    %3492 = vmatprep.subr.bf16.mxu0 0
    %3493 = vmatpush1.bf16.msra.mxu0 %v1798
    %3494 = vmatprep.subr.bf16.mxu0 0
    %3495 = vmatpush1.bf16.msra.mxu0 %v1799
    %3496 = vmatprep.mubr.bf16.mxu0 %v773
    %3497 = vmatmul.mubr.bf16.gmra.mrb[0].mxu0 %v772
    %v3498 = vpop.f32.mrb[0].mxu0
    %v3499 = vadd.f32 %v3459, %v3498
    %v3500 = vpop.f32.mrb[0].mxu0
    %v3501 = vpop.f32.mrb[0].mxu0
    %v3502 = vpop.f32.mrb[0].mxu0
    %3503 = vdwg.mxu0
    %3504 = vmatprep.subr.bf16.mxu0 0
    %3505 = vmatpush1.bf16.msra.mxu0 %v1800
    %3506 = vmatprep.subr.bf16.mxu0 0
    %3507 = vmatpush1.bf16.msra.mxu0 %v1801
    %3508 = vmatprep.subr.bf16.mxu0 0
    %3509 = vmatpush1.bf16.msra.mxu0 %v1802
    %3510 = vmatprep.subr.bf16.mxu0 0
    %3511 = vmatpush1.bf16.msra.mxu0 %v1803
    %3512 = vmatprep.subr.bf16.mxu0 0
    %3513 = vmatpush1.bf16.msra.mxu0 %v1804
    %3514 = vmatprep.subr.bf16.mxu0 0
    %3515 = vmatpush1.bf16.msra.mxu0 %v1805
    %3516 = vmatprep.subr.bf16.mxu0 0
    %3517 = vmatpush1.bf16.msra.mxu0 %v1806
    %3518 = vmatprep.subr.bf16.mxu0 0
    %3519 = vmatpush1.bf16.msra.mxu0 %v1807
    %3520 = vmatprep.subr.bf16.mxu0 0
    %3521 = vmatpush1.bf16.msra.mxu0 %v1808
    %3522 = vmatprep.subr.bf16.mxu0 0
    %3523 = vmatpush1.bf16.msra.mxu0 %v1809
    %3524 = vmatprep.subr.bf16.mxu0 0
    %3525 = vmatpush1.bf16.msra.mxu0 %v1810
    %3526 = vmatprep.subr.bf16.mxu0 0
    %3527 = vmatpush1.bf16.msra.mxu0 %v1811
    %3528 = vmatprep.subr.bf16.mxu0 0
    %3529 = vmatpush1.bf16.msra.mxu0 %v1812
    %3530 = vmatprep.subr.bf16.mxu0 0
    %3531 = vmatpush1.bf16.msra.mxu0 %v1813
    %3532 = vmatprep.subr.bf16.mxu0 0
    %3533 = vmatpush1.bf16.msra.mxu0 %v1814
    %3534 = vmatprep.subr.bf16.mxu0 0
    %3535 = vmatpush1.bf16.msra.mxu0 %v1815
    %3536 = vmatprep.mubr.bf16.mxu0 %v775
    %3537 = vmatmul.mubr.bf16.gmra.mrb[0].mxu0 %v774
    %v3538 = vpop.f32.mrb[0].mxu0
    %v3539 = vadd.f32 %v3499, %v3538
    %v3540 = vpop.f32.mrb[0].mxu0
    %v3541 = vpop.f32.mrb[0].mxu0
    %v3542 = vpop.f32.mrb[0].mxu0
    %3543 = vdwg.mxu0
    %3544 = vmatprep.subr.bf16.mxu0 0
    %3545 = vmatpush1.bf16.msra.mxu0 %v1816
    %3546 = vmatprep.subr.bf16.mxu0 0
    %3547 = vmatpush1.bf16.msra.mxu0 %v1817
    %3548 = vmatprep.subr.bf16.mxu0 0
    %3549 = vmatpush1.bf16.msra.mxu0 %v1818
    %3550 = vmatprep.subr.bf16.mxu0 0
    %3551 = vmatpush1.bf16.msra.mxu0 %v1819
    %3552 = vmatprep.subr.bf16.mxu0 0
    %3553 = vmatpush1.bf16.msra.mxu0 %v1820
    %3554 = vmatprep.subr.bf16.mxu0 0
    %3555 = vmatpush1.bf16.msra.mxu0 %v1821
    %3556 = vmatprep.subr.bf16.mxu0 0
    %3557 = vmatpush1.bf16.msra.mxu0 %v1822
    %3558 = vmatprep.subr.bf16.mxu0 0
    %3559 = vmatpush1.bf16.msra.mxu0 %v1823
    %3560 = vmatprep.subr.bf16.mxu0 0
    %3561 = vmatpush1.bf16.msra.mxu0 %v1824
    %3562 = vmatprep.subr.bf16.mxu0 0
    %3563 = vmatpush1.bf16.msra.mxu0 %v1825
    %3564 = vmatprep.subr.bf16.mxu0 0
    %3565 = vmatpush1.bf16.msra.mxu0 %v1826
    %3566 = vmatprep.subr.bf16.mxu0 0
    %3567 = vmatpush1.bf16.msra.mxu0 %v1827
    %3568 = vmatprep.subr.bf16.mxu0 0
    %3569 = vmatpush1.bf16.msra.mxu0 %v1828
    %3570 = vmatprep.subr.bf16.mxu0 0
    %3571 = vmatpush1.bf16.msra.mxu0 %v1829
    %3572 = vmatprep.subr.bf16.mxu0 0
    %3573 = vmatpush1.bf16.msra.mxu0 %v1830
    %3574 = vmatprep.subr.bf16.mxu0 0
    %3575 = vmatpush1.bf16.msra.mxu0 %v1831
    %3576 = vmatprep.mubr.bf16.mxu0 %v777
    %3577 = vmatmul.mubr.bf16.gmra.mrb[0].mxu0 %v776
    %v3578 = vpop.f32.mrb[0].mxu0
    %v3579 = vadd.f32 %v3539, %v3578
    %v3580 = vpop.f32.mrb[0].mxu0
    %v3581 = vpop.f32.mrb[0].mxu0
    %v3582 = vpop.f32.mrb[0].mxu0
    %3583 = vdwg.mxu0
    %3584 = vmatprep.subr.bf16.mxu0 0
    %3585 = vmatpush1.bf16.msra.mxu0 %v1832
    %3586 = vmatprep.subr.bf16.mxu0 0
    %3587 = vmatpush1.bf16.msra.mxu0 %v1833
    %3588 = vmatprep.subr.bf16.mxu0 0
    %3589 = vmatpush1.bf16.msra.mxu0 %v1834
    %3590 = vmatprep.subr.bf16.mxu0 0
    %3591 = vmatpush1.bf16.msra.mxu0 %v1835
    %3592 = vmatprep.subr.bf16.mxu0 0
    %3593 = vmatpush1.bf16.msra.mxu0 %v1836
    %3594 = vmatprep.subr.bf16.mxu0 0
    %3595 = vmatpush1.bf16.msra.mxu0 %v1837
    %3596 = vmatprep.subr.bf16.mxu0 0
    %3597 = vmatpush1.bf16.msra.mxu0 %v1838
    %3598 = vmatprep.subr.bf16.mxu0 0
    %3599 = vmatpush1.bf16.msra.mxu0 %v1839
    %3600 = vmatprep.subr.bf16.mxu0 0
    %3601 = vmatpush1.bf16.msra.mxu0 %v1840
    %3602 = vmatprep.subr.bf16.mxu0 0
    %3603 = vmatpush1.bf16.msra.mxu0 %v1841
    %3604 = vmatprep.subr.bf16.mxu0 0
    %3605 = vmatpush1.bf16.msra.mxu0 %v1842
    %3606 = vmatprep.subr.bf16.mxu0 0
    %3607 = vmatpush1.bf16.msra.mxu0 %v1843
    %3608 = vmatprep.subr.bf16.mxu0 0
    %3609 = vmatpush1.bf16.msra.mxu0 %v1844
    %3610 = vmatprep.subr.bf16.mxu0 0
    %3611 = vmatpush1.bf16.msra.mxu0 %v1845
    %3612 = vmatprep.subr.bf16.mxu0 0
    %3613 = vmatpush1.bf16.msra.mxu0 %v1846
    %3614 = vmatprep.subr.bf16.mxu0 0
    %3615 = vmatpush1.bf16.msra.mxu0 %v1847
    %3616 = vmatprep.mubr.bf16.mxu0 %v779
    %3617 = vmatmul.mubr.bf16.gmra.mrb[0].mxu0 %v778
    %v3618 = vpop.f32.mrb[0].mxu0
    %v3619 = vadd.f32 %v3579, %v3618
    %v3620 = vpop.f32.mrb[0].mxu0
    %v3621 = vpop.f32.mrb[0].mxu0
    %v3622 = vpop.f32.mrb[0].mxu0
    %3623 = vdwg.mxu0
    %3624 = vmatprep.subr.bf16.mxu0 0
    %3625 = vmatpush1.bf16.msra.mxu0 %v1848
    %3626 = vmatprep.subr.bf16.mxu0 0
    %3627 = vmatpush1.bf16.msra.mxu0 %v1849
    %3628 = vmatprep.subr.bf16.mxu0 0
    %3629 = vmatpush1.bf16.msra.mxu0 %v1850
    %3630 = vmatprep.subr.bf16.mxu0 0
    %3631 = vmatpush1.bf16.msra.mxu0 %v1851
    %3632 = vmatprep.subr.bf16.mxu0 0
    %3633 = vmatpush1.bf16.msra.mxu0 %v1852
    %3634 = vmatprep.subr.bf16.mxu0 0
    %3635 = vmatpush1.bf16.msra.mxu0 %v1853
    %3636 = vmatprep.subr.bf16.mxu0 0
    %3637 = vmatpush1.bf16.msra.mxu0 %v1854
    %3638 = vmatprep.subr.bf16.mxu0 0
    %3639 = vmatpush1.bf16.msra.mxu0 %v1855
    %3640 = vmatprep.subr.bf16.mxu0 0
    %3641 = vmatpush1.bf16.msra.mxu0 %v1856
    %3642 = vmatprep.subr.bf16.mxu0 0
    %3643 = vmatpush1.bf16.msra.mxu0 %v1857
    %3644 = vmatprep.subr.bf16.mxu0 0
    %3645 = vmatpush1.bf16.msra.mxu0 %v1858
    %3646 = vmatprep.subr.bf16.mxu0 0
    %3647 = vmatpush1.bf16.msra.mxu0 %v1859
    %3648 = vmatprep.subr.bf16.mxu0 0
    %3649 = vmatpush1.bf16.msra.mxu0 %v1860
    %3650 = vmatprep.subr.bf16.mxu0 0
    %3651 = vmatpush1.bf16.msra.mxu0 %v1861
    %3652 = vmatprep.subr.bf16.mxu0 0
    %3653 = vmatpush1.bf16.msra.mxu0 %v1862
    %3654 = vmatprep.subr.bf16.mxu0 0
    %3655 = vmatpush1.bf16.msra.mxu0 %v1863
    %3656 = vmatprep.mubr.bf16.mxu0 %v781
    %3657 = vmatmul.mubr.bf16.gmra.mrb[0].mxu0 %v780
    %v3658 = vpop.f32.mrb[0].mxu0
    %v3659 = vadd.f32 %v3619, %v3658
    %v3660 = vpop.f32.mrb[0].mxu0
    %v3661 = vpop.f32.mrb[0].mxu0
    %v3662 = vpop.f32.mrb[0].mxu0
    %3663 = vdwg.mxu0
    %3664 = vmatprep.subr.bf16.mxu0 0
    %3665 = vmatpush1.bf16.msra.mxu0 %v1864
    %3666 = vmatprep.subr.bf16.mxu0 0
    %3667 = vmatpush1.bf16.msra.mxu0 %v1865
    %3668 = vmatprep.subr.bf16.mxu0 0
    %3669 = vmatpush1.bf16.msra.mxu0 %v1866
    %3670 = vmatprep.subr.bf16.mxu0 0
    %3671 = vmatpush1.bf16.msra.mxu0 %v1867
    %3672 = vmatprep.subr.bf16.mxu0 0
    %3673 = vmatpush1.bf16.msra.mxu0 %v1868
    %3674 = vmatprep.subr.bf16.mxu0 0
    %3675 = vmatpush1.bf16.msra.mxu0 %v1869
    %3676 = vmatprep.subr.bf16.mxu0 0
    %3677 = vmatpush1.bf16.msra.mxu0 %v1870
    %3678 = vmatprep.subr.bf16.mxu0 0
    %3679 = vmatpush1.bf16.msra.mxu0 %v1871
    %3680 = vmatprep.subr.bf16.mxu0 0
    %3681 = vmatpush1.bf16.msra.mxu0 %v1872
    %3682 = vmatprep.subr.bf16.mxu0 0
    %3683 = vmatpush1.bf16.msra.mxu0 %v1873
    %3684 = vmatprep.subr.bf16.mxu0 0
    %3685 = vmatpush1.bf16.msra.mxu0 %v1874
    %3686 = vmatprep.subr.bf16.mxu0 0
    %3687 = vmatpush1.bf16.msra.mxu0 %v1875
    %3688 = vmatprep.subr.bf16.mxu0 0
    %3689 = vmatpush1.bf16.msra.mxu0 %v1876
    %3690 = vmatprep.subr.bf16.mxu0 0
    %3691 = vmatpush1.bf16.msra.mxu0 %v1877
    %3692 = vmatprep.subr.bf16.mxu0 0
    %3693 = vmatpush1.bf16.msra.mxu0 %v1878
    %3694 = vmatprep.subr.bf16.mxu0 0
    %3695 = vmatpush1.bf16.msra.mxu0 %v1879
    %3696 = vmatprep.mubr.bf16.mxu0 %v783
    %3697 = vmatmul.mubr.bf16.gmra.mrb[0].mxu0 %v782
    %v3698 = vpop.f32.mrb[0].mxu0
    %v3699 = vadd.f32 %v3659, %v3698
    %v3700 = vpop.f32.mrb[0].mxu0
    %v3701 = vpop.f32.mrb[0].mxu0
    %v3702 = vpop.f32.mrb[0].mxu0
    %3703 = vdwg.mxu0
    %3704 = vmatprep.subr.bf16.mxu0 0
    %3705 = vmatpush1.bf16.msra.mxu0 %v1880
    %3706 = vmatprep.subr.bf16.mxu0 0
    %3707 = vmatpush1.bf16.msra.mxu0 %v1881
    %3708 = vmatprep.subr.bf16.mxu0 0
    %3709 = vmatpush1.bf16.msra.mxu0 %v1882
    %3710 = vmatprep.subr.bf16.mxu0 0
    %3711 = vmatpush1.bf16.msra.mxu0 %v1883
    %3712 = vmatprep.subr.bf16.mxu0 0
    %3713 = vmatpush1.bf16.msra.mxu0 %v1884
    %3714 = vmatprep.subr.bf16.mxu0 0
    %3715 = vmatpush1.bf16.msra.mxu0 %v1885
    %3716 = vmatprep.subr.bf16.mxu0 0
    %3717 = vmatpush1.bf16.msra.mxu0 %v1886
    %3718 = vmatprep.subr.bf16.mxu0 0
    %3719 = vmatpush1.bf16.msra.mxu0 %v1887
    %3720 = vmatprep.subr.bf16.mxu0 0
    %3721 = vmatpush1.bf16.msra.mxu0 %v1888
    %3722 = vmatprep.subr.bf16.mxu0 0
    %3723 = vmatpush1.bf16.msra.mxu0 %v1889
    %3724 = vmatprep.subr.bf16.mxu0 0
    %3725 = vmatpush1.bf16.msra.mxu0 %v1890
    %3726 = vmatprep.subr.bf16.mxu0 0
    %3727 = vmatpush1.bf16.msra.mxu0 %v1891
    %3728 = vmatprep.subr.bf16.mxu0 0
    %3729 = vmatpush1.bf16.msra.mxu0 %v1892
    %3730 = vmatprep.subr.bf16.mxu0 0
    %3731 = vmatpush1.bf16.msra.mxu0 %v1893
    %3732 = vmatprep.subr.bf16.mxu0 0
    %3733 = vmatpush1.bf16.msra.mxu0 %v1894
    %3734 = vmatprep.subr.bf16.mxu0 0
    %3735 = vmatpush1.bf16.msra.mxu0 %v1895
    %3736 = vmatprep.mubr.bf16.mxu0 %v785
    %3737 = vmatmul.mubr.bf16.gmra.mrb[0].mxu0 %v784
    %v3738 = vpop.f32.mrb[0].mxu0
    %v3739 = vadd.f32 %v3699, %v3738
    %v3740 = vpop.f32.mrb[0].mxu0
    %v3741 = vpop.f32.mrb[0].mxu0
    %v3742 = vpop.f32.mrb[0].mxu0
    %3743 = vdwg.mxu0
    %3744 = vmatprep.subr.bf16.mxu0 0
    %3745 = vmatpush1.bf16.msra.mxu0 %v1896
    %3746 = vmatprep.subr.bf16.mxu0 0
    %3747 = vmatpush1.bf16.msra.mxu0 %v1897
    %3748 = vmatprep.subr.bf16.mxu0 0
    %3749 = vmatpush1.bf16.msra.mxu0 %v1898
    %3750 = vmatprep.subr.bf16.mxu0 0
    %3751 = vmatpush1.bf16.msra.mxu0 %v1899
    %3752 = vmatprep.subr.bf16.mxu0 0
    %3753 = vmatpush1.bf16.msra.mxu0 %v1900
    %3754 = vmatprep.subr.bf16.mxu0 0
    %3755 = vmatpush1.bf16.msra.mxu0 %v1901
    %3756 = vmatprep.subr.bf16.mxu0 0
    %3757 = vmatpush1.bf16.msra.mxu0 %v1902
    %3758 = vmatprep.subr.bf16.mxu0 0
    %3759 = vmatpush1.bf16.msra.mxu0 %v1903
    %3760 = vmatprep.subr.bf16.mxu0 0
    %3761 = vmatpush1.bf16.msra.mxu0 %v1904
    %3762 = vmatprep.subr.bf16.mxu0 0
    %3763 = vmatpush1.bf16.msra.mxu0 %v1905
    %3764 = vmatprep.subr.bf16.mxu0 0
    %3765 = vmatpush1.bf16.msra.mxu0 %v1906
    %3766 = vmatprep.subr.bf16.mxu0 0
    %3767 = vmatpush1.bf16.msra.mxu0 %v1907
    %3768 = vmatprep.subr.bf16.mxu0 0
    %3769 = vmatpush1.bf16.msra.mxu0 %v1908
    %3770 = vmatprep.subr.bf16.mxu0 0
    %3771 = vmatpush1.bf16.msra.mxu0 %v1909
    %3772 = vmatprep.subr.bf16.mxu0 0
    %3773 = vmatpush1.bf16.msra.mxu0 %v1910
    %3774 = vmatprep.subr.bf16.mxu0 0
    %3775 = vmatpush1.bf16.msra.mxu0 %v1911
    %3776 = vmatprep.mubr.bf16.mxu0 %v787
    %3777 = vmatmul.mubr.bf16.gmra.mrb[0].mxu0 %v786
    %v3778 = vpop.f32.mrb[0].mxu0
    %v3779 = vadd.f32 %v3739, %v3778
    %v3780 = vpop.f32.mrb[0].mxu0
    %v3781 = vpop.f32.mrb[0].mxu0
    %v3782 = vpop.f32.mrb[0].mxu0
    %3783 = vdwg.mxu0
    %3784 = vmatprep.subr.bf16.mxu0 0
    %3785 = vmatpush1.bf16.msra.mxu0 %v1912
    %3786 = vmatprep.subr.bf16.mxu0 0
    %3787 = vmatpush1.bf16.msra.mxu0 %v1913
    %3788 = vmatprep.subr.bf16.mxu0 0
    %3789 = vmatpush1.bf16.msra.mxu0 %v1914
    %3790 = vmatprep.subr.bf16.mxu0 0
    %3791 = vmatpush1.bf16.msra.mxu0 %v1915
    %3792 = vmatprep.subr.bf16.mxu0 0
    %3793 = vmatpush1.bf16.msra.mxu0 %v1916
    %3794 = vmatprep.subr.bf16.mxu0 0
    %3795 = vmatpush1.bf16.msra.mxu0 %v1917
    %3796 = vmatprep.subr.bf16.mxu0 0
    %3797 = vmatpush1.bf16.msra.mxu0 %v1918
    %3798 = vmatprep.subr.bf16.mxu0 0
    %3799 = vmatpush1.bf16.msra.mxu0 %v1919
    %3800 = vmatprep.subr.bf16.mxu0 0
    %3801 = vmatpush1.bf16.msra.mxu0 %v1920
    %3802 = vmatprep.subr.bf16.mxu0 0
    %3803 = vmatpush1.bf16.msra.mxu0 %v1921
    %3804 = vmatprep.subr.bf16.mxu0 0
    %3805 = vmatpush1.bf16.msra.mxu0 %v1922
    %3806 = vmatprep.subr.bf16.mxu0 0
    %3807 = vmatpush1.bf16.msra.mxu0 %v1923
    %3808 = vmatprep.subr.bf16.mxu0 0
    %3809 = vmatpush1.bf16.msra.mxu0 %v1924
    %3810 = vmatprep.subr.bf16.mxu0 0
    %3811 = vmatpush1.bf16.msra.mxu0 %v1925
    %3812 = vmatprep.subr.bf16.mxu0 0
    %3813 = vmatpush1.bf16.msra.mxu0 %v1926
    %3814 = vmatprep.subr.bf16.mxu0 0
    %3815 = vmatpush1.bf16.msra.mxu0 %v1927
    %3816 = vmatprep.mubr.bf16.mxu0 %v789
    %3817 = vmatmul.mubr.bf16.gmra.mrb[0].mxu0 %v788
    %v3818 = vpop.f32.mrb[0].mxu0
    %v3819 = vadd.f32 %v3779, %v3818
    %v3820 = vpop.f32.mrb[0].mxu0
    %v3821 = vpop.f32.mrb[0].mxu0
    %v3822 = vpop.f32.mrb[0].mxu0
    %3823 = vdwg.mxu0
    %3824 = vmatprep.subr.bf16.mxu0 0
    %3825 = vmatpush1.bf16.msra.mxu0 %v1928
    %3826 = vmatprep.subr.bf16.mxu0 0
    %3827 = vmatpush1.bf16.msra.mxu0 %v1929
    %3828 = vmatprep.subr.bf16.mxu0 0
    %3829 = vmatpush1.bf16.msra.mxu0 %v1930
    %3830 = vmatprep.subr.bf16.mxu0 0
    %3831 = vmatpush1.bf16.msra.mxu0 %v1931
    %3832 = vmatprep.subr.bf16.mxu0 0
    %3833 = vmatpush1.bf16.msra.mxu0 %v1932
    %3834 = vmatprep.subr.bf16.mxu0 0
    %3835 = vmatpush1.bf16.msra.mxu0 %v1933
    %3836 = vmatprep.subr.bf16.mxu0 0
    %3837 = vmatpush1.bf16.msra.mxu0 %v1934
    %3838 = vmatprep.subr.bf16.mxu0 0
    %3839 = vmatpush1.bf16.msra.mxu0 %v1935
    %3840 = vmatprep.subr.bf16.mxu0 0
    %3841 = vmatpush1.bf16.msra.mxu0 %v1936
    %3842 = vmatprep.subr.bf16.mxu0 0
    %3843 = vmatpush1.bf16.msra.mxu0 %v1937
    %3844 = vmatprep.subr.bf16.mxu0 0
    %3845 = vmatpush1.bf16.msra.mxu0 %v1938
    %3846 = vmatprep.subr.bf16.mxu0 0
    %3847 = vmatpush1.bf16.msra.mxu0 %v1939
    %3848 = vmatprep.subr.bf16.mxu0 0
    %3849 = vmatpush1.bf16.msra.mxu0 %v1940
    %3850 = vmatprep.subr.bf16.mxu0 0
    %3851 = vmatpush1.bf16.msra.mxu0 %v1941
    %3852 = vmatprep.subr.bf16.mxu0 0
    %3853 = vmatpush1.bf16.msra.mxu0 %v1942
    %3854 = vmatprep.subr.bf16.mxu0 0
    %3855 = vmatpush1.bf16.msra.mxu0 %v1943
    %3856 = vmatprep.mubr.bf16.mxu0 %v791
    %3857 = vmatmul.mubr.bf16.gmra.mrb[0].mxu0 %v790
    %v3858 = vpop.f32.mrb[0].mxu0
    %v3859 = vadd.f32 %v3819, %v3858
    %v3860 = vpop.f32.mrb[0].mxu0
    %v3861 = vpop.f32.mrb[0].mxu0
    %v3862 = vpop.f32.mrb[0].mxu0
    %3863 = vdwg.mxu0
    %v3864 = vld [vmem:[#allocation8] sm:$0x1]
    %v3866 = vlaneseq
    %v3867 = vshrl.u32 %v3866, 7
    %v3868 = vsub.s32 0, %v3867
    %v3869 = vrot.slane %v3864, %v3868
    %v3871 = vmul.f32 %v3859, %v3869
    %v3872 = vld [vmem:[#allocation10] sm:$0x1]
    %v3874 = vlaneseq
    %v3875 = vshrl.u32 %v3874, 7
    %v3876 = vsub.s32 0, %v3875
    %v3877 = vrot.slane %v3872, %v3876
    %v3879 = vadd.f32 %v3871, %v3877
    %v3880 = vld [vmem:[#allocation2] sm:$0x3]
    %v3881 = vadd.f32 %v3879, %v3880
    %v3882 = vmax.f32 %v3881, 0.0
    %v3883 = vadd.f32 %v3882, %v3881
    %v3884 = vld [vmem:[#allocation11] sm:$0xff]
    %v3885 = vld [vmem:[#allocation11 + $0x8] sm:$0xff]
    %v3886 = vld [vmem:[#allocation11 + $0x10] sm:$0xff]
    %v3887 = vld [vmem:[#allocation11 + $0x18] sm:$0xff]
    %v3888 = vld [vmem:[#allocation11 + $0x20] sm:$0xff]
    %v3889 = vld [vmem:[#allocation11 + $0x28] sm:$0xff]
    %v3890 = vld [vmem:[#allocation11 + $0x30] sm:$0xff]
    %v3891 = vld [vmem:[#allocation11 + $0x38] sm:$0xff]
    %v3892 = vld [vmem:[#allocation11 + $0x40] sm:$0xff]
    %v3893 = vld [vmem:[#allocation11 + $0x48] sm:$0xff]
    %v3894 = vld [vmem:[#allocation11 + $0x50] sm:$0xff]
    %v3895 = vld [vmem:[#allocation11 + $0x58] sm:$0xff]
    %v3896 = vld [vmem:[#allocation11 + $0x60] sm:$0xff]
    %v3897 = vld [vmem:[#allocation11 + $0x68] sm:$0xff]
    %v3898 = vld [vmem:[#allocation11 + $0x70] sm:$0xff]
    %v3899 = vld [vmem:[#allocation11 + $0x78] sm:$0xff]
    %v3900 = vld [vmem:[#allocation13] sm:$0x1]
    %v3902 = vlaneseq
    %v3903 = vshrl.u32 %v3902, 7
    %v3904 = vsub.s32 0, %v3903
    %v3905 = vrot.slane %v3900, %v3904
    %3907 = vmatprep.subr.mxu0 0.0
    %3908 = vmatpush1.msra.mxu0 %v3884
    %3909 = vmatprep.subr.mxu0 0.0
    %3910 = vmatpush1.msra.mxu0 %v3885
    %3911 = vmatprep.subr.mxu0 0.0
    %3912 = vmatpush1.msra.mxu0 %v3886
    %3913 = vmatprep.subr.mxu0 0.0
    %3914 = vmatpush1.msra.mxu0 %v3887
    %3915 = vmatprep.subr.mxu0 0.0
    %3916 = vmatpush1.msra.mxu0 %v3888
    %3917 = vmatprep.subr.mxu0 0.0
    %3918 = vmatpush1.msra.mxu0 %v3889
    %3919 = vmatprep.subr.mxu0 0.0
    %3920 = vmatpush1.msra.mxu0 %v3890
    %3921 = vmatprep.subr.mxu0 0.0
    %3922 = vmatpush1.msra.mxu0 %v3891
    %3923 = vmatprep.subr.mxu0 0.0
    %3924 = vmatpush1.msra.mxu0 %v3892
    %3925 = vmatprep.subr.mxu0 0.0
    %3926 = vmatpush1.msra.mxu0 %v3893
    %3927 = vmatprep.subr.mxu0 0.0
    %3928 = vmatpush1.msra.mxu0 %v3894
    %3929 = vmatprep.subr.mxu0 0.0
    %3930 = vmatpush1.msra.mxu0 %v3895
    %3931 = vmatprep.subr.mxu0 0.0
    %3932 = vmatpush1.msra.mxu0 %v3896
    %3933 = vmatprep.subr.mxu0 0.0
    %3934 = vmatpush1.msra.mxu0 %v3897
    %3935 = vmatprep.subr.mxu0 0.0
    %3936 = vmatpush1.msra.mxu0 %v3898
    %3937 = vmatprep.subr.mxu0 0.0
    %3938 = vmatpush1.msra.mxu0 %v3899
    %3939 = vmatprep.subr.mxu0 0.0
    %3940 = vmatpush1.msra.mxu0 0.0
    %3941 = vmatprep.subr.mxu0 0.0
    %3942 = vmatpush1.msra.mxu0 0.0
    %3943 = vmatprep.subr.mxu0 0.0
    %3944 = vmatpush1.msra.mxu0 0.0
    %3945 = vmatprep.subr.mxu0 0.0
    %3946 = vmatpush1.msra.mxu0 0.0
    %3947 = vmatprep.subr.mxu0 0.0
    %3948 = vmatpush1.msra.mxu0 0.0
    %3949 = vmatprep.subr.mxu0 0.0
    %3950 = vmatpush1.msra.mxu0 0.0
    %3951 = vmatprep.subr.mxu0 0.0
    %3952 = vmatpush1.msra.mxu0 0.0
    %3953 = vmatprep.subr.mxu0 0.0
    %3954 = vmatpush1.msra.mxu0 0.0
    %3955 = vmatprep.subr.mxu0 0.0
    %3956 = vmatpush1.msra.mxu0 0.0
    %3957 = vmatprep.subr.mxu0 0.0
    %3958 = vmatpush1.msra.mxu0 0.0
    %3959 = vmatprep.subr.mxu0 0.0
    %3960 = vmatpush1.msra.mxu0 0.0
    %3961 = vmatprep.subr.mxu0 0.0
    %3962 = vmatpush1.msra.mxu0 0.0
    %3963 = vmatprep.subr.mxu0 0.0
    %3964 = vmatpush1.msra.mxu0 0.0
    %3965 = vmatprep.subr.mxu0 0.0
    %3966 = vmatpush1.msra.mxu0 0.0
    %3967 = vmatprep.subr.mxu0 0.0
    %3968 = vmatpush1.msra.mxu0 0.0
    %3969 = vmatprep.subr.mxu0 0.0
    %3970 = vmatpush1.msra.mxu0 0.0
    %3971 = vmatprep.mubr.f32.mxu0 0.0
    %3972 = vmatmul.mubr.f32.gmra.mrb[0].mxu0 %v3883
    %v3973 = vpop.f32.mrb[0].mxu0
    %v3974 = vadd.f32 %v3905, %v3973
    %v3975 = vpop.f32.mrb[0].mxu0
    %3976 = vdwg.mxu0
    %v3977 = vadd.f32 %v3974, %v3883
    %v3978 = vmax.f32 %v3977, 0.0
    %v3979 = vadd.f32 %v3978, %v3977
    %v3980 = vld [vmem:[#allocation14] sm:$0xff]
    %v3981 = vld [vmem:[#allocation14 + $0x8] sm:$0xff]
    %v3982 = vld [vmem:[#allocation14 + $0x10] sm:$0xff]
    %v3983 = vld [vmem:[#allocation14 + $0x18] sm:$0xff]
    %v3984 = vld [vmem:[#allocation14 + $0x20] sm:$0xff]
    %v3985 = vld [vmem:[#allocation14 + $0x28] sm:$0xff]
    %v3986 = vld [vmem:[#allocation14 + $0x30] sm:$0xff]
    %v3987 = vld [vmem:[#allocation14 + $0x38] sm:$0xff]
    %v3988 = vld [vmem:[#allocation14 + $0x40] sm:$0xff]
    %v3989 = vld [vmem:[#allocation14 + $0x48] sm:$0xff]
    %v3990 = vld [vmem:[#allocation14 + $0x50] sm:$0xff]
    %v3991 = vld [vmem:[#allocation14 + $0x58] sm:$0xff]
    %v3992 = vld [vmem:[#allocation14 + $0x60] sm:$0xff]
    %v3993 = vld [vmem:[#allocation14 + $0x68] sm:$0xff]
    %v3994 = vld [vmem:[#allocation14 + $0x70] sm:$0xff]
    %v3995 = vld [vmem:[#allocation14 + $0x78] sm:$0xff]
    %v3996 = vld [vmem:[#allocation16] sm:$0x1]
    %v3998 = vlaneseq
    %v3999 = vshrl.u32 %v3998, 7
    %v4000 = vsub.s32 0, %v3999
    %v4001 = vrot.slane %v3996, %v4000
    %4003 = vmatprep.subr.mxu0 0.0
    %4004 = vmatpush1.msra.mxu0 %v3980
    %4005 = vmatprep.subr.mxu0 0.0
    %4006 = vmatpush1.msra.mxu0 %v3981
    %4007 = vmatprep.subr.mxu0 0.0
    %4008 = vmatpush1.msra.mxu0 %v3982
    %4009 = vmatprep.subr.mxu0 0.0
    %4010 = vmatpush1.msra.mxu0 %v3983
    %4011 = vmatprep.subr.mxu0 0.0
    %4012 = vmatpush1.msra.mxu0 %v3984
    %4013 = vmatprep.subr.mxu0 0.0
    %4014 = vmatpush1.msra.mxu0 %v3985
    %4015 = vmatprep.subr.mxu0 0.0
    %4016 = vmatpush1.msra.mxu0 %v3986
    %4017 = vmatprep.subr.mxu0 0.0
    %4018 = vmatpush1.msra.mxu0 %v3987
    %4019 = vmatprep.subr.mxu0 0.0
    %4020 = vmatpush1.msra.mxu0 %v3988
    %4021 = vmatprep.subr.mxu0 0.0
    %4022 = vmatpush1.msra.mxu0 %v3989
    %4023 = vmatprep.subr.mxu0 0.0
    %4024 = vmatpush1.msra.mxu0 %v3990
    %4025 = vmatprep.subr.mxu0 0.0
    %4026 = vmatpush1.msra.mxu0 %v3991
    %4027 = vmatprep.subr.mxu0 0.0
    %4028 = vmatpush1.msra.mxu0 %v3992
    %4029 = vmatprep.subr.mxu0 0.0
    %4030 = vmatpush1.msra.mxu0 %v3993
    %4031 = vmatprep.subr.mxu0 0.0
    %4032 = vmatpush1.msra.mxu0 %v3994
    %4033 = vmatprep.subr.mxu0 0.0
    %4034 = vmatpush1.msra.mxu0 %v3995
    %4035 = vmatprep.subr.mxu0 0.0
    %4036 = vmatpush1.msra.mxu0 0.0
    %4037 = vmatprep.subr.mxu0 0.0
    %4038 = vmatpush1.msra.mxu0 0.0
    %4039 = vmatprep.subr.mxu0 0.0
    %4040 = vmatpush1.msra.mxu0 0.0
    %4041 = vmatprep.subr.mxu0 0.0
    %4042 = vmatpush1.msra.mxu0 0.0
    %4043 = vmatprep.subr.mxu0 0.0
    %4044 = vmatpush1.msra.mxu0 0.0
    %4045 = vmatprep.subr.mxu0 0.0
    %4046 = vmatpush1.msra.mxu0 0.0
    %4047 = vmatprep.subr.mxu0 0.0
    %4048 = vmatpush1.msra.mxu0 0.0
    %4049 = vmatprep.subr.mxu0 0.0
    %4050 = vmatpush1.msra.mxu0 0.0
    %4051 = vmatprep.subr.mxu0 0.0
    %4052 = vmatpush1.msra.mxu0 0.0
    %4053 = vmatprep.subr.mxu0 0.0
    %4054 = vmatpush1.msra.mxu0 0.0
    %4055 = vmatprep.subr.mxu0 0.0
    %4056 = vmatpush1.msra.mxu0 0.0
    %4057 = vmatprep.subr.mxu0 0.0
    %4058 = vmatpush1.msra.mxu0 0.0
    %4059 = vmatprep.subr.mxu0 0.0
    %4060 = vmatpush1.msra.mxu0 0.0
    %4061 = vmatprep.subr.mxu0 0.0
    %4062 = vmatpush1.msra.mxu0 0.0
    %4063 = vmatprep.subr.mxu0 0.0
    %4064 = vmatpush1.msra.mxu0 0.0
    %4065 = vmatprep.subr.mxu0 0.0
    %4066 = vmatpush1.msra.mxu0 0.0
    %4067 = vmatprep.mubr.f32.mxu0 0.0
    %4068 = vmatmul.mubr.f32.gmra.mrb[0].mxu0 %v3979
    %v4069 = vpop.f32.mrb[0].mxu0
    %v4070 = vadd.f32 %v4001, %v4069
    %v4071 = vpop.f32.mrb[0].mxu0
    %4072 = vdwg.mxu0
    %4073 = vst [vmem:[#allocation17] sm:$0x3] %v4070
    // Predicated region
    $region74: #{_model_forward.1} parent=1 // pred_check
      _
    $region75: #{_model_forward.1} parent=1 // pred_check_branch
      %4075 = sbr.rel (0) target = $region77
    $region76: #{_model_forward.1} parent=1 // pred_region
      %s4077 = ssub.s32 32, 32
      %4078 = vsyncadd [#allocation4], %s4077
      %s4080 = sshll.u32 [#allocation17], 4
      %s4081 = int_to_ptr.vmem [resolvable:$true] %s4080
      %4083 = dma.vmem_to_hbm [thread:$0]  %s4081, 32, %s9, [#allocation4]
    $region77: #{_model_forward.1} parent=1 // pred_fallthru
      _
    // Predicated region
    $region78: #{_model_forward.1} parent=1 // pred_check
      _
    $region79: #{_model_forward.1} parent=1 // pred_check_branch
      %4085 = sbr.rel (0) target = $region81
    $region80: #{_model_forward.1} parent=1 // pred_region
      %4086 = dma.done [#allocation4], 32
    $region81: #{_model_forward.1} parent=1 // pred_fallthru
      _
    %4087 = vsyncpa [#allocation3], 1
    %4088 = vsyncpa [#allocation6], 1
    %4089 = vsyncpa [#allocation9], 1
    %4090 = vsyncpa [#allocation12], 1
    %4091 = vsyncpa [#allocation15], 1
    %4092 = vsyncpa [#allocation4], 1

</llo_original>
